<compile_context>
chip_gen: v7x
topology: tpu7x:2x2x1
jax: 0.10.0
libtpu: 0.0.40
codegen_flags: <defaults>
</compile_context>

<pallas_src>
import jax
import jax.numpy as jnp
from jax import lax
from jax.experimental import pallas as pl
from jax.experimental.pallas import tpu as pltpu

EPS = 1e-5  # nn.InstanceNorm2d default eps (affine=False, biased variance)


def _conv3x3_acc(a, w_ref, compute_dtype):
    """3x3 'SAME' conv of one sample as 9 accumulating MXU matmuls.

    a:     (H2, W2, C) f32 activations, channels on the 128-lane axis.
    w_ref: (9, C, Cout) bf16 per-tap weights, tap index k = ky*3 + kx.
    Returns the un-normalized conv output (H2*W2, Cout) in f32.

    Padding/slicing stays in f32 (proven lowering path); only the matmul
    operands are cast to bf16, keeping f32 accumulation on the MXU.
    """
    H2, W2, C = a.shape
    Cout = w_ref.shape[-1]
    padded = jnp.pad(a, ((1, 1), (1, 1), (0, 0)))        # zero padding = 1
    # TODO(synk): replace jnp.pad with a persistent zeroed VMEM border scratch
    # to drop the per-conv zero-fill + copy (vst pressure on v5e).
    acc = jnp.zeros((H2 * W2, Cout), jnp.float32)
    for ky in range(3):
        for kx in range(3):
            win = padded[ky:ky + H2, kx:kx + W2, :].reshape(H2 * W2, C)
            acc = acc + jnp.dot(win.astype(compute_dtype),
                                w_ref[ky * 3 + kx],
                                preferred_element_type=jnp.float32)
    return acc


def _instnorm_relu(acc):
    """InstanceNorm2d (affine=False, biased var) + ReLU with one-pass stats.

    acc: (H2*W2, Cout) f32.  Statistics reduce over the spatial axis (axis 0).
    """
    inv_n = 1.0 / acc.shape[0]
    mean = jnp.sum(acc, axis=0, keepdims=True) * inv_n
    ex2 = jnp.sum(acc * acc, axis=0, keepdims=True) * inv_n
    var = jnp.maximum(ex2 - mean * mean, 0.0)             # guard tiny cancellation
    return jnp.maximum((acc - mean) * lax.rsqrt(var + EPS), 0.0)


def down_merge_kernel(xp_ref, y_ref, w1x_ref, w1y_ref, w2_ref, o_ref):
    # xp_ref: (1, H2, W2, Cx) bf16 -- x already 2x2-max-pooled by the wrapper.
    # y_ref : (1, H2, W2, Cy) bf16.
    # w*_ref: (9, C, Cout) bf16 per-tap conv weights (conv1 split into the
    #         pooled-x / y input-channel groups; no lane-axis concat needed).
    _, H2, W2, _ = xp_ref.shape
    Cout = w2_ref.shape[-1]
    cd = w2_ref.dtype

    xp = xp_ref[0].astype(jnp.float32)                    # (H2, W2, Cx)
    yv = y_ref[0].astype(jnp.float32)                     # (H2, W2, Cy)

    # conv1 = sum of the two input-channel-group contributions (18 matmuls).
    acc1 = _conv3x3_acc(xp, w1x_ref, cd)
    acc1 = acc1 + _conv3x3_acc(yv, w1y_ref, cd)
    h1 = _instnorm_relu(acc1)                             # (H2*W2, Cout) f32

    # conv2 over the f32 intermediate (windows cast to bf16 at the matmul).
    acc2 = _conv3x3_acc(h1.reshape(H2, W2, Cout), w2_ref, cd)
    h2 = _instnorm_relu(acc2)

    # TODO(synk): for Cout < 128 this store is lane-masked; a channels-on-
    # sublanes (Cout, H2*W2) output orientation (in-kernel transpose + flipped
    # InstanceNorm reduction axis) would make it lane-dense and also remove
    # the wrapper's NCHW output transpose.
    o_ref[...] = h2.reshape(1, H2, W2, Cout).astype(o_ref.dtype)


def _pick_vmem_limit():
    # Generation-aware scoped-VMEM limit: ~3/4 of physical VMEM
    # (v5e/v6e: 96 MiB of 128, v7x: 48 MiB of 64), 32 MiB conservative fallback.
    try:
        return min(int(pltpu.get_tpu_info().vmem_capacity_bytes) * 3 // 4,
                   100 * 1024 * 1024)
    except Exception:
        return 32 * 1024 * 1024


def down_merge_forward(x_nchw, y_nchw, w1, b1, w2, b2,
                       *, compute_dtype=jnp.bfloat16):
    """x: (N, Cx, H, W), y: (N, Cy, H//2, W//2) -> (N, Cout, H//2, W//2).

    Matches PyTorch Down_merge.forward(x, y).  b1/b2 are accepted for
    interface parity but are mathematically cancelled by InstanceNorm
    (affine=False) and never sent to the kernel.
    """
    N, Cx, H, W = x_nchw.shape
    assert H % 2 == 0 and W % 2 == 0, "MaxPool2d(2) path assumes even H, W"
    H2, W2 = H // 2, W // 2
    Ny, Cy, Hy, Wy = y_nchw.shape
    assert Ny == N and Hy == H2 and Wy == W2, "y must match pooled x spatially"
    Cin = Cx + Cy
    Cout = w1.shape[-1]
    assert w1.shape == (3, 3, Cin, Cout) and w2.shape == (3, 3, Cout, Cout)
    del b1, b2  # cancelled exactly by InstanceNorm(affine=False)

    # Fused in XLA: 2x2 max-pool + NCHW->NHWC + bf16 cast.  Pooling here (not
    # in the kernel) shrinks the kernel's x DMA + double-buffered VMEM 4x.
    xp = jnp.max(x_nchw.reshape(N, Cx, H2, 2, W2, 2), axis=(3, 5))
    xp = jnp.transpose(xp, (0, 2, 3, 1)).astype(compute_dtype)      # (N,H2,W2,Cx)
    yr = jnp.transpose(y_nchw, (0, 2, 3, 1)).astype(compute_dtype)  # (N,H2,W2,Cy)

    # Per-tap weights (tap index k = ky*3 + kx), conv1 split into the
    # pooled-x / y input-channel groups so the kernel never concatenates
    # along a non-128-aligned lane offset.
    w1x = w1[:, :, :Cx, :].reshape(9, Cx, Cout).astype(compute_dtype)
    w1y = w1[:, :, Cx:, :].reshape(9, Cy, Cout).astype(compute_dtype)
    w2r = w2.reshape(9, Cout, Cout).astype(compute_dtype)

    # TODO(synk): for v5e with tiny Cout/H2*W2, batch several samples per grid
    # step (stack along M) to fill the MXU and amortize per-step overhead; for
    # v7x with N < 2, add a second "parallel" grid axis (H2 row tiles with a
    # two-pass InstanceNorm) so both TensorCores stay busy.
    out = pl.pallas_call(
        down_merge_kernel,
        out_shape=jax.ShapeDtypeStruct((N, H2, W2, Cout), x_nchw.dtype),
        grid=(N,),  # one grid step per sample (InstanceNorm is per-sample)
        in_specs=[
            pl.BlockSpec((1, H2, W2, Cx), lambda b: (b, 0, 0, 0)),
            pl.BlockSpec((1, H2, W2, Cy), lambda b: (b, 0, 0, 0)),
            pl.BlockSpec((9, Cx, Cout), lambda b: (0, 0, 0)),
            pl.BlockSpec((9, Cy, Cout), lambda b: (0, 0, 0)),
            pl.BlockSpec((9, Cout, Cout), lambda b: (0, 0, 0)),
        ],
        out_specs=pl.BlockSpec((1, H2, W2, Cout), lambda b: (b, 0, 0, 0)),
        compiler_params=pltpu.CompilerParams(
            dimension_semantics=("parallel",),
            vmem_limit_bytes=_pick_vmem_limit()),
    )(xp, yr, w1x, w1y, w2r)

    return jnp.transpose(out, (0, 3, 1, 2))  # back to NCHW


def down_merge_ref(x, y, w1, b1, w2, b2, operand_dtype=jnp.float32):
    """Pure-JAX reference mirroring the PyTorch module semantics (with bias).

    With operand_dtype=bfloat16 the conv operands are rounded exactly the way
    the kernel rounds them (f32 accumulation kept) -> tight-tolerance check of
    the kernel; with float32 it is the exact module semantics.
    """
    xp = lax.reduce_window(x, -jnp.inf, lax.max,
                           (1, 1, 2, 2), (1, 1, 2, 2), 'VALID')
    z = jnp.concatenate([xp, y], axis=1)

    def block(z, w, b):
        z = z.astype(operand_dtype).astype(jnp.float32)
        w = w.astype(operand_dtype).astype(jnp.float32)
        out = lax.conv_general_dilated(
            z, w, window_strides=(1, 1), padding='SAME',
            dimension_numbers=('NCHW', 'HWIO', 'NCHW'),
            precision=lax.Precision.HIGHEST,
            preferred_element_type=jnp.float32)
        out = out + b.reshape(1, -1, 1, 1)
        mean = out.mean(axis=(2, 3), keepdims=True)
        var = ((out - mean) ** 2).mean(axis=(2, 3), keepdims=True)
        return jnp.maximum((out - mean) * lax.rsqrt(var + EPS), 0.0)

    return block(block(z, w1, b1), w2, b2)


if __name__ == "__main__":
    key = jax.random.PRNGKey(0)
    N, Cx, Cy, Cout, H, W = 2, 4, 4, 8, 16, 16
    Cin = Cx + Cy
    ks = jax.random.split(key, 6)

    x = jax.random.normal(ks[0], (N, Cx, H, W), jnp.float32)
    y = jax.random.normal(ks[1], (N, Cy, H // 2, W // 2), jnp.float32)
    # Deterministic synthetic parameters (HWIO layout for conv weights).
    w1 = jax.random.normal(ks[2], (3, 3, Cin, Cout), jnp.float32) * 0.1
    b1 = jax.random.normal(ks[3], (Cout,), jnp.float32) * 0.1
    w2 = jax.random.normal(ks[4], (3, 3, Cout, Cout), jnp.float32) * 0.1
    b2 = jax.random.normal(ks[5], (Cout,), jnp.float32) * 0.1

    out = jax.block_until_ready(down_merge_forward(x, y, w1, b1, w2, b2))
    assert out.shape == (N, Cout, H // 2, W // 2), out.shape

    # Matched-precision reference (same bf16 operand rounding, f32 accumulation):
    # validates the kernel implementation tightly.
    ref_bf16 = down_merge_ref(x, y, w1, b1, w2, b2, operand_dtype=jnp.bfloat16)
    err_bf16 = float(jnp.max(jnp.abs(out - ref_bf16)))
    assert jnp.allclose(out, ref_bf16, atol=5e-3, rtol=5e-3), \
        f"max abs err vs matched-precision ref {err_bf16}"

    # Exact-f32 PyTorch-semantics reference: the only difference is bf16
    # operand rounding on the MXU path, hence the looser tolerance.
    ref_f32 = down_merge_ref(x, y, w1, b1, w2, b2)
    err_f32 = float(jnp.max(jnp.abs(out - ref_f32)))
    assert jnp.allclose(out, ref_f32, atol=1e-1, rtol=1e-1), \
        f"max abs err vs f32 ref {err_f32}"

    print("KERNEL_OK")
</pallas_src>

<mosaic_0001>
module attributes {stable_mosaic.version = 11 : i64} {
  func.func @down_merge_kernel(%arg0: i32, %arg1: memref<1x8x8x4xbf16, #tpu.memory_space<vmem>>, %arg2: memref<1x8x8x4xbf16, #tpu.memory_space<vmem>>, %arg3: memref<9x4x8xbf16, #tpu.memory_space<vmem>>, %arg4: memref<9x4x8xbf16, #tpu.memory_space<vmem>>, %arg5: memref<9x8x8xbf16, #tpu.memory_space<vmem>>, %arg6: memref<1x8x8x8xf32, #tpu.memory_space<vmem>>) attributes {dimension_semantics = [#tpu.dimension_semantics<parallel>], iteration_bounds = array<i64: 2>, scalar_prefetch = 0 : i64, scratch_operands = 0 : i64, tpu.core_type = #tpu.core_type<tc>, window_params = [{transform_indices = @transform_0, window_bounds = array<i64: 1, 8, 8, 4>}, {transform_indices = @transform_1, window_bounds = array<i64: 1, 8, 8, 4>}, {pipeline_mode = #tpu.pipeline_mode<synchronous>, transform_indices = @transform_2, window_bounds = array<i64: 9, 4, 8>}, {pipeline_mode = #tpu.pipeline_mode<synchronous>, transform_indices = @transform_3, window_bounds = array<i64: 9, 4, 8>}, {pipeline_mode = #tpu.pipeline_mode<synchronous>, transform_indices = @transform_4, window_bounds = array<i64: 9, 8, 8>}, {transform_indices = @transform_5, window_bounds = array<i64: 1, 8, 8, 8>}]} {
    %c0 = arith.constant 0 : index
    %c0_0 = arith.constant 0 : index
    %c0_1 = arith.constant 0 : index
    %c0_2 = arith.constant 0 : index
    %0 = vector.load %arg1[%c0, %c0_0, %c0_1, %c0_2] : memref<1x8x8x4xbf16, #tpu.memory_space<vmem>>, vector<1x8x8x4xbf16>
    %1 = vector.shape_cast %0 : vector<1x8x8x4xbf16> to vector<8x8x4xbf16>
    %2 = arith.extf %1 : vector<8x8x4xbf16> to vector<8x8x4xf32>
    %c0_3 = arith.constant 0 : index
    %c0_4 = arith.constant 0 : index
    %c0_5 = arith.constant 0 : index
    %c0_6 = arith.constant 0 : index
    %3 = vector.load %arg2[%c0_3, %c0_4, %c0_5, %c0_6] : memref<1x8x8x4xbf16, #tpu.memory_space<vmem>>, vector<1x8x8x4xbf16>
    %4 = vector.shape_cast %3 : vector<1x8x8x4xbf16> to vector<8x8x4xbf16>
    %5 = arith.extf %4 : vector<8x8x4xbf16> to vector<8x8x4xf32>
    %c0_i32 = arith.constant 0 : i32
    %6 = arith.sitofp %c0_i32 : i32 to f32
    %7 = vector.broadcast %6 : f32 to vector<1x8x4xf32>
    %8 = tpu.concatenate %7, %2 in 0 : vector<1x8x4xf32>, vector<8x8x4xf32> -> vector<9x8x4xf32>
    %9 = vector.broadcast %6 : f32 to vector<1x8x4xf32>
    %10 = tpu.concatenate %8, %9 in 0 : vector<9x8x4xf32>, vector<1x8x4xf32> -> vector<10x8x4xf32>
    %11 = vector.broadcast %6 : f32 to vector<10x1x4xf32>
    %12 = tpu.concatenate %11, %10 in 1 : vector<10x1x4xf32>, vector<10x8x4xf32> -> vector<10x9x4xf32>
    %13 = vector.broadcast %6 : f32 to vector<10x1x4xf32>
    %14 = tpu.concatenate %12, %13 in 1 : vector<10x9x4xf32>, vector<10x1x4xf32> -> vector<10x10x4xf32>
    %cst = arith.constant 0.000000e+00 : f32
    %15 = vector.broadcast %cst : f32 to vector<64x8xf32>
    %16 = vector.extract_strided_slice %14 {offsets = [0, 0, 0], sizes = [8, 8, 4], strides = [1, 1, 1]} : vector<10x10x4xf32> to vector<8x8x4xf32>
    %17 = vector.shape_cast %16 : vector<8x8x4xf32> to vector<64x4xf32>
    %18 = arith.truncf %17 : vector<64x4xf32> to vector<64x4xbf16>
    %c0_7 = arith.constant 0 : index
    %c0_8 = arith.constant 0 : index
    %c0_9 = arith.constant 0 : index
    %19 = vector.load %arg3[%c0_7, %c0_8, %c0_9] : memref<9x4x8xbf16, #tpu.memory_space<vmem>>, vector<1x4x8xbf16>
    %20 = vector.shape_cast %19 : vector<1x4x8xbf16> to vector<4x8xbf16>
    %cst_10 = arith.constant dense<0.000000e+00> : vector<64x8xf32>
    %21 = tpu.matmul %18, %20, %cst_10 {dimension_numbers = #tpu.dot_dimension_numbers<[1], [0], [0], [1], [0, 0, 1, 1], [], []>} : vector<64x4xbf16>, vector<4x8xbf16>, vector<64x8xf32> -> vector<64x8xf32>
    %22 = arith.addf %15, %21 : vector<64x8xf32>
    %23 = vector.extract_strided_slice %14 {offsets = [0, 1, 0], sizes = [8, 8, 4], strides = [1, 1, 1]} : vector<10x10x4xf32> to vector<8x8x4xf32>
    %24 = vector.shape_cast %23 : vector<8x8x4xf32> to vector<64x4xf32>
    %25 = arith.truncf %24 : vector<64x4xf32> to vector<64x4xbf16>
    %c1 = arith.constant 1 : index
    %c0_11 = arith.constant 0 : index
    %c0_12 = arith.constant 0 : index
    %26 = vector.load %arg3[%c1, %c0_11, %c0_12] : memref<9x4x8xbf16, #tpu.memory_space<vmem>>, vector<1x4x8xbf16>
    %27 = vector.shape_cast %26 : vector<1x4x8xbf16> to vector<4x8xbf16>
    %cst_13 = arith.constant dense<0.000000e+00> : vector<64x8xf32>
    %28 = tpu.matmul %25, %27, %cst_13 {dimension_numbers = #tpu.dot_dimension_numbers<[1], [0], [0], [1], [0, 0, 1, 1], [], []>} : vector<64x4xbf16>, vector<4x8xbf16>, vector<64x8xf32> -> vector<64x8xf32>
    %29 = arith.addf %22, %28 : vector<64x8xf32>
    %30 = vector.extract_strided_slice %14 {offsets = [0, 2, 0], sizes = [8, 8, 4], strides = [1, 1, 1]} : vector<10x10x4xf32> to vector<8x8x4xf32>
    %31 = vector.shape_cast %30 : vector<8x8x4xf32> to vector<64x4xf32>
    %32 = arith.truncf %31 : vector<64x4xf32> to vector<64x4xbf16>
    %c2 = arith.constant 2 : index
    %c0_14 = arith.constant 0 : index
    %c0_15 = arith.constant 0 : index
    %33 = vector.load %arg3[%c2, %c0_14, %c0_15] : memref<9x4x8xbf16, #tpu.memory_space<vmem>>, vector<1x4x8xbf16>
    %34 = vector.shape_cast %33 : vector<1x4x8xbf16> to vector<4x8xbf16>
    %cst_16 = arith.constant dense<0.000000e+00> : vector<64x8xf32>
    %35 = tpu.matmul %32, %34, %cst_16 {dimension_numbers = #tpu.dot_dimension_numbers<[1], [0], [0], [1], [0, 0, 1, 1], [], []>} : vector<64x4xbf16>, vector<4x8xbf16>, vector<64x8xf32> -> vector<64x8xf32>
    %36 = arith.addf %29, %35 : vector<64x8xf32>
    %37 = vector.extract_strided_slice %14 {offsets = [1, 0, 0], sizes = [8, 8, 4], strides = [1, 1, 1]} : vector<10x10x4xf32> to vector<8x8x4xf32>
    %38 = vector.shape_cast %37 : vector<8x8x4xf32> to vector<64x4xf32>
    %39 = arith.truncf %38 : vector<64x4xf32> to vector<64x4xbf16>
    %c3 = arith.constant 3 : index
    %c0_17 = arith.constant 0 : index
    %c0_18 = arith.constant 0 : index
    %40 = vector.load %arg3[%c3, %c0_17, %c0_18] : memref<9x4x8xbf16, #tpu.memory_space<vmem>>, vector<1x4x8xbf16>
    %41 = vector.shape_cast %40 : vector<1x4x8xbf16> to vector<4x8xbf16>
    %cst_19 = arith.constant dense<0.000000e+00> : vector<64x8xf32>
    %42 = tpu.matmul %39, %41, %cst_19 {dimension_numbers = #tpu.dot_dimension_numbers<[1], [0], [0], [1], [0, 0, 1, 1], [], []>} : vector<64x4xbf16>, vector<4x8xbf16>, vector<64x8xf32> -> vector<64x8xf32>
    %43 = arith.addf %36, %42 : vector<64x8xf32>
    %44 = vector.extract_strided_slice %14 {offsets = [1, 1, 0], sizes = [8, 8, 4], strides = [1, 1, 1]} : vector<10x10x4xf32> to vector<8x8x4xf32>
    %45 = vector.shape_cast %44 : vector<8x8x4xf32> to vector<64x4xf32>
    %46 = arith.truncf %45 : vector<64x4xf32> to vector<64x4xbf16>
    %c4 = arith.constant 4 : index
    %c0_20 = arith.constant 0 : index
    %c0_21 = arith.constant 0 : index
    %47 = vector.load %arg3[%c4, %c0_20, %c0_21] : memref<9x4x8xbf16, #tpu.memory_space<vmem>>, vector<1x4x8xbf16>
    %48 = vector.shape_cast %47 : vector<1x4x8xbf16> to vector<4x8xbf16>
    %cst_22 = arith.constant dense<0.000000e+00> : vector<64x8xf32>
    %49 = tpu.matmul %46, %48, %cst_22 {dimension_numbers = #tpu.dot_dimension_numbers<[1], [0], [0], [1], [0, 0, 1, 1], [], []>} : vector<64x4xbf16>, vector<4x8xbf16>, vector<64x8xf32> -> vector<64x8xf32>
    %50 = arith.addf %43, %49 : vector<64x8xf32>
    %51 = vector.extract_strided_slice %14 {offsets = [1, 2, 0], sizes = [8, 8, 4], strides = [1, 1, 1]} : vector<10x10x4xf32> to vector<8x8x4xf32>
    %52 = vector.shape_cast %51 : vector<8x8x4xf32> to vector<64x4xf32>
    %53 = arith.truncf %52 : vector<64x4xf32> to vector<64x4xbf16>
    %c5 = arith.constant 5 : index
    %c0_23 = arith.constant 0 : index
    %c0_24 = arith.constant 0 : index
    %54 = vector.load %arg3[%c5, %c0_23, %c0_24] : memref<9x4x8xbf16, #tpu.memory_space<vmem>>, vector<1x4x8xbf16>
    %55 = vector.shape_cast %54 : vector<1x4x8xbf16> to vector<4x8xbf16>
    %cst_25 = arith.constant dense<0.000000e+00> : vector<64x8xf32>
    %56 = tpu.matmul %53, %55, %cst_25 {dimension_numbers = #tpu.dot_dimension_numbers<[1], [0], [0], [1], [0, 0, 1, 1], [], []>} : vector<64x4xbf16>, vector<4x8xbf16>, vector<64x8xf32> -> vector<64x8xf32>
    %57 = arith.addf %50, %56 : vector<64x8xf32>
    %58 = vector.extract_strided_slice %14 {offsets = [2, 0, 0], sizes = [8, 8, 4], strides = [1, 1, 1]} : vector<10x10x4xf32> to vector<8x8x4xf32>
    %59 = vector.shape_cast %58 : vector<8x8x4xf32> to vector<64x4xf32>
    %60 = arith.truncf %59 : vector<64x4xf32> to vector<64x4xbf16>
    %c6 = arith.constant 6 : index
    %c0_26 = arith.constant 0 : index
    %c0_27 = arith.constant 0 : index
    %61 = vector.load %arg3[%c6, %c0_26, %c0_27] : memref<9x4x8xbf16, #tpu.memory_space<vmem>>, vector<1x4x8xbf16>
    %62 = vector.shape_cast %61 : vector<1x4x8xbf16> to vector<4x8xbf16>
    %cst_28 = arith.constant dense<0.000000e+00> : vector<64x8xf32>
    %63 = tpu.matmul %60, %62, %cst_28 {dimension_numbers = #tpu.dot_dimension_numbers<[1], [0], [0], [1], [0, 0, 1, 1], [], []>} : vector<64x4xbf16>, vector<4x8xbf16>, vector<64x8xf32> -> vector<64x8xf32>
    %64 = arith.addf %57, %63 : vector<64x8xf32>
    %65 = vector.extract_strided_slice %14 {offsets = [2, 1, 0], sizes = [8, 8, 4], strides = [1, 1, 1]} : vector<10x10x4xf32> to vector<8x8x4xf32>
    %66 = vector.shape_cast %65 : vector<8x8x4xf32> to vector<64x4xf32>
    %67 = arith.truncf %66 : vector<64x4xf32> to vector<64x4xbf16>
    %c7 = arith.constant 7 : index
    %c0_29 = arith.constant 0 : index
    %c0_30 = arith.constant 0 : index
    %68 = vector.load %arg3[%c7, %c0_29, %c0_30] : memref<9x4x8xbf16, #tpu.memory_space<vmem>>, vector<1x4x8xbf16>
    %69 = vector.shape_cast %68 : vector<1x4x8xbf16> to vector<4x8xbf16>
    %cst_31 = arith.constant dense<0.000000e+00> : vector<64x8xf32>
    %70 = tpu.matmul %67, %69, %cst_31 {dimension_numbers = #tpu.dot_dimension_numbers<[1], [0], [0], [1], [0, 0, 1, 1], [], []>} : vector<64x4xbf16>, vector<4x8xbf16>, vector<64x8xf32> -> vector<64x8xf32>
    %71 = arith.addf %64, %70 : vector<64x8xf32>
    %72 = vector.extract_strided_slice %14 {offsets = [2, 2, 0], sizes = [8, 8, 4], strides = [1, 1, 1]} : vector<10x10x4xf32> to vector<8x8x4xf32>
    %73 = vector.shape_cast %72 : vector<8x8x4xf32> to vector<64x4xf32>
    %74 = arith.truncf %73 : vector<64x4xf32> to vector<64x4xbf16>
    %c8 = arith.constant 8 : index
    %c0_32 = arith.constant 0 : index
    %c0_33 = arith.constant 0 : index
    %75 = vector.load %arg3[%c8, %c0_32, %c0_33] : memref<9x4x8xbf16, #tpu.memory_space<vmem>>, vector<1x4x8xbf16>
    %76 = vector.shape_cast %75 : vector<1x4x8xbf16> to vector<4x8xbf16>
    %cst_34 = arith.constant dense<0.000000e+00> : vector<64x8xf32>
    %77 = tpu.matmul %74, %76, %cst_34 {dimension_numbers = #tpu.dot_dimension_numbers<[1], [0], [0], [1], [0, 0, 1, 1], [], []>} : vector<64x4xbf16>, vector<4x8xbf16>, vector<64x8xf32> -> vector<64x8xf32>
    %78 = arith.addf %71, %77 : vector<64x8xf32>
    %c0_i32_35 = arith.constant 0 : i32
    %79 = arith.sitofp %c0_i32_35 : i32 to f32
    %80 = vector.broadcast %79 : f32 to vector<1x8x4xf32>
    %81 = tpu.concatenate %80, %5 in 0 : vector<1x8x4xf32>, vector<8x8x4xf32> -> vector<9x8x4xf32>
    %82 = vector.broadcast %79 : f32 to vector<1x8x4xf32>
    %83 = tpu.concatenate %81, %82 in 0 : vector<9x8x4xf32>, vector<1x8x4xf32> -> vector<10x8x4xf32>
    %84 = vector.broadcast %79 : f32 to vector<10x1x4xf32>
    %85 = tpu.concatenate %84, %83 in 1 : vector<10x1x4xf32>, vector<10x8x4xf32> -> vector<10x9x4xf32>
    %86 = vector.broadcast %79 : f32 to vector<10x1x4xf32>
    %87 = tpu.concatenate %85, %86 in 1 : vector<10x9x4xf32>, vector<10x1x4xf32> -> vector<10x10x4xf32>
    %cst_36 = arith.constant 0.000000e+00 : f32
    %88 = vector.broadcast %cst_36 : f32 to vector<64x8xf32>
    %89 = vector.extract_strided_slice %87 {offsets = [0, 0, 0], sizes = [8, 8, 4], strides = [1, 1, 1]} : vector<10x10x4xf32> to vector<8x8x4xf32>
    %90 = vector.shape_cast %89 : vector<8x8x4xf32> to vector<64x4xf32>
    %91 = arith.truncf %90 : vector<64x4xf32> to vector<64x4xbf16>
    %c0_37 = arith.constant 0 : index
    %c0_38 = arith.constant 0 : index
    %c0_39 = arith.constant 0 : index
    %92 = vector.load %arg4[%c0_37, %c0_38, %c0_39] : memref<9x4x8xbf16, #tpu.memory_space<vmem>>, vector<1x4x8xbf16>
    %93 = vector.shape_cast %92 : vector<1x4x8xbf16> to vector<4x8xbf16>
    %cst_40 = arith.constant dense<0.000000e+00> : vector<64x8xf32>
    %94 = tpu.matmul %91, %93, %cst_40 {dimension_numbers = #tpu.dot_dimension_numbers<[1], [0], [0], [1], [0, 0, 1, 1], [], []>} : vector<64x4xbf16>, vector<4x8xbf16>, vector<64x8xf32> -> vector<64x8xf32>
    %95 = arith.addf %88, %94 : vector<64x8xf32>
    %96 = vector.extract_strided_slice %87 {offsets = [0, 1, 0], sizes = [8, 8, 4], strides = [1, 1, 1]} : vector<10x10x4xf32> to vector<8x8x4xf32>
    %97 = vector.shape_cast %96 : vector<8x8x4xf32> to vector<64x4xf32>
    %98 = arith.truncf %97 : vector<64x4xf32> to vector<64x4xbf16>
    %c1_41 = arith.constant 1 : index
    %c0_42 = arith.constant 0 : index
    %c0_43 = arith.constant 0 : index
    %99 = vector.load %arg4[%c1_41, %c0_42, %c0_43] : memref<9x4x8xbf16, #tpu.memory_space<vmem>>, vector<1x4x8xbf16>
    %100 = vector.shape_cast %99 : vector<1x4x8xbf16> to vector<4x8xbf16>
    %cst_44 = arith.constant dense<0.000000e+00> : vector<64x8xf32>
    %101 = tpu.matmul %98, %100, %cst_44 {dimension_numbers = #tpu.dot_dimension_numbers<[1], [0], [0], [1], [0, 0, 1, 1], [], []>} : vector<64x4xbf16>, vector<4x8xbf16>, vector<64x8xf32> -> vector<64x8xf32>
    %102 = arith.addf %95, %101 : vector<64x8xf32>
    %103 = vector.extract_strided_slice %87 {offsets = [0, 2, 0], sizes = [8, 8, 4], strides = [1, 1, 1]} : vector<10x10x4xf32> to vector<8x8x4xf32>
    %104 = vector.shape_cast %103 : vector<8x8x4xf32> to vector<64x4xf32>
    %105 = arith.truncf %104 : vector<64x4xf32> to vector<64x4xbf16>
    %c2_45 = arith.constant 2 : index
    %c0_46 = arith.constant 0 : index
    %c0_47 = arith.constant 0 : index
    %106 = vector.load %arg4[%c2_45, %c0_46, %c0_47] : memref<9x4x8xbf16, #tpu.memory_space<vmem>>, vector<1x4x8xbf16>
    %107 = vector.shape_cast %106 : vector<1x4x8xbf16> to vector<4x8xbf16>
    %cst_48 = arith.constant dense<0.000000e+00> : vector<64x8xf32>
    %108 = tpu.matmul %105, %107, %cst_48 {dimension_numbers = #tpu.dot_dimension_numbers<[1], [0], [0], [1], [0, 0, 1, 1], [], []>} : vector<64x4xbf16>, vector<4x8xbf16>, vector<64x8xf32> -> vector<64x8xf32>
    %109 = arith.addf %102, %108 : vector<64x8xf32>
    %110 = vector.extract_strided_slice %87 {offsets = [1, 0, 0], sizes = [8, 8, 4], strides = [1, 1, 1]} : vector<10x10x4xf32> to vector<8x8x4xf32>
    %111 = vector.shape_cast %110 : vector<8x8x4xf32> to vector<64x4xf32>
    %112 = arith.truncf %111 : vector<64x4xf32> to vector<64x4xbf16>
    %c3_49 = arith.constant 3 : index
    %c0_50 = arith.constant 0 : index
    %c0_51 = arith.constant 0 : index
    %113 = vector.load %arg4[%c3_49, %c0_50, %c0_51] : memref<9x4x8xbf16, #tpu.memory_space<vmem>>, vector<1x4x8xbf16>
    %114 = vector.shape_cast %113 : vector<1x4x8xbf16> to vector<4x8xbf16>
    %cst_52 = arith.constant dense<0.000000e+00> : vector<64x8xf32>
    %115 = tpu.matmul %112, %114, %cst_52 {dimension_numbers = #tpu.dot_dimension_numbers<[1], [0], [0], [1], [0, 0, 1, 1], [], []>} : vector<64x4xbf16>, vector<4x8xbf16>, vector<64x8xf32> -> vector<64x8xf32>
    %116 = arith.addf %109, %115 : vector<64x8xf32>
    %117 = vector.extract_strided_slice %87 {offsets = [1, 1, 0], sizes = [8, 8, 4], strides = [1, 1, 1]} : vector<10x10x4xf32> to vector<8x8x4xf32>
    %118 = vector.shape_cast %117 : vector<8x8x4xf32> to vector<64x4xf32>
    %119 = arith.truncf %118 : vector<64x4xf32> to vector<64x4xbf16>
    %c4_53 = arith.constant 4 : index
    %c0_54 = arith.constant 0 : index
    %c0_55 = arith.constant 0 : index
    %120 = vector.load %arg4[%c4_53, %c0_54, %c0_55] : memref<9x4x8xbf16, #tpu.memory_space<vmem>>, vector<1x4x8xbf16>
    %121 = vector.shape_cast %120 : vector<1x4x8xbf16> to vector<4x8xbf16>
    %cst_56 = arith.constant dense<0.000000e+00> : vector<64x8xf32>
    %122 = tpu.matmul %119, %121, %cst_56 {dimension_numbers = #tpu.dot_dimension_numbers<[1], [0], [0], [1], [0, 0, 1, 1], [], []>} : vector<64x4xbf16>, vector<4x8xbf16>, vector<64x8xf32> -> vector<64x8xf32>
    %123 = arith.addf %116, %122 : vector<64x8xf32>
    %124 = vector.extract_strided_slice %87 {offsets = [1, 2, 0], sizes = [8, 8, 4], strides = [1, 1, 1]} : vector<10x10x4xf32> to vector<8x8x4xf32>
    %125 = vector.shape_cast %124 : vector<8x8x4xf32> to vector<64x4xf32>
    %126 = arith.truncf %125 : vector<64x4xf32> to vector<64x4xbf16>
    %c5_57 = arith.constant 5 : index
    %c0_58 = arith.constant 0 : index
    %c0_59 = arith.constant 0 : index
    %127 = vector.load %arg4[%c5_57, %c0_58, %c0_59] : memref<9x4x8xbf16, #tpu.memory_space<vmem>>, vector<1x4x8xbf16>
    %128 = vector.shape_cast %127 : vector<1x4x8xbf16> to vector<4x8xbf16>
    %cst_60 = arith.constant dense<0.000000e+00> : vector<64x8xf32>
    %129 = tpu.matmul %126, %128, %cst_60 {dimension_numbers = #tpu.dot_dimension_numbers<[1], [0], [0], [1], [0, 0, 1, 1], [], []>} : vector<64x4xbf16>, vector<4x8xbf16>, vector<64x8xf32> -> vector<64x8xf32>
    %130 = arith.addf %123, %129 : vector<64x8xf32>
    %131 = vector.extract_strided_slice %87 {offsets = [2, 0, 0], sizes = [8, 8, 4], strides = [1, 1, 1]} : vector<10x10x4xf32> to vector<8x8x4xf32>
    %132 = vector.shape_cast %131 : vector<8x8x4xf32> to vector<64x4xf32>
    %133 = arith.truncf %132 : vector<64x4xf32> to vector<64x4xbf16>
    %c6_61 = arith.constant 6 : index
    %c0_62 = arith.constant 0 : index
    %c0_63 = arith.constant 0 : index
    %134 = vector.load %arg4[%c6_61, %c0_62, %c0_63] : memref<9x4x8xbf16, #tpu.memory_space<vmem>>, vector<1x4x8xbf16>
    %135 = vector.shape_cast %134 : vector<1x4x8xbf16> to vector<4x8xbf16>
    %cst_64 = arith.constant dense<0.000000e+00> : vector<64x8xf32>
    %136 = tpu.matmul %133, %135, %cst_64 {dimension_numbers = #tpu.dot_dimension_numbers<[1], [0], [0], [1], [0, 0, 1, 1], [], []>} : vector<64x4xbf16>, vector<4x8xbf16>, vector<64x8xf32> -> vector<64x8xf32>
    %137 = arith.addf %130, %136 : vector<64x8xf32>
    %138 = vector.extract_strided_slice %87 {offsets = [2, 1, 0], sizes = [8, 8, 4], strides = [1, 1, 1]} : vector<10x10x4xf32> to vector<8x8x4xf32>
    %139 = vector.shape_cast %138 : vector<8x8x4xf32> to vector<64x4xf32>
    %140 = arith.truncf %139 : vector<64x4xf32> to vector<64x4xbf16>
    %c7_65 = arith.constant 7 : index
    %c0_66 = arith.constant 0 : index
    %c0_67 = arith.constant 0 : index
    %141 = vector.load %arg4[%c7_65, %c0_66, %c0_67] : memref<9x4x8xbf16, #tpu.memory_space<vmem>>, vector<1x4x8xbf16>
    %142 = vector.shape_cast %141 : vector<1x4x8xbf16> to vector<4x8xbf16>
    %cst_68 = arith.constant dense<0.000000e+00> : vector<64x8xf32>
    %143 = tpu.matmul %140, %142, %cst_68 {dimension_numbers = #tpu.dot_dimension_numbers<[1], [0], [0], [1], [0, 0, 1, 1], [], []>} : vector<64x4xbf16>, vector<4x8xbf16>, vector<64x8xf32> -> vector<64x8xf32>
    %144 = arith.addf %137, %143 : vector<64x8xf32>
    %145 = vector.extract_strided_slice %87 {offsets = [2, 2, 0], sizes = [8, 8, 4], strides = [1, 1, 1]} : vector<10x10x4xf32> to vector<8x8x4xf32>
    %146 = vector.shape_cast %145 : vector<8x8x4xf32> to vector<64x4xf32>
    %147 = arith.truncf %146 : vector<64x4xf32> to vector<64x4xbf16>
    %c8_69 = arith.constant 8 : index
    %c0_70 = arith.constant 0 : index
    %c0_71 = arith.constant 0 : index
    %148 = vector.load %arg4[%c8_69, %c0_70, %c0_71] : memref<9x4x8xbf16, #tpu.memory_space<vmem>>, vector<1x4x8xbf16>
    %149 = vector.shape_cast %148 : vector<1x4x8xbf16> to vector<4x8xbf16>
    %cst_72 = arith.constant dense<0.000000e+00> : vector<64x8xf32>
    %150 = tpu.matmul %147, %149, %cst_72 {dimension_numbers = #tpu.dot_dimension_numbers<[1], [0], [0], [1], [0, 0, 1, 1], [], []>} : vector<64x4xbf16>, vector<4x8xbf16>, vector<64x8xf32> -> vector<64x8xf32>
    %151 = arith.addf %144, %150 : vector<64x8xf32>
    %152 = arith.addf %78, %151 : vector<64x8xf32>
    %cst_73 = arith.constant dense<0.000000e+00> : vector<8xf32>
    %153 = vector.multi_reduction <add>, %152, %cst_73 [0] : vector<64x8xf32> to vector<8xf32>
    %154 = vector.shape_cast %153 : vector<8xf32> to vector<1x8xf32>
    %cst_74 = arith.constant 1.562500e-02 : f32
    %155 = vector.broadcast %cst_74 : f32 to vector<1x8xf32>
    %156 = arith.mulf %154, %155 : vector<1x8xf32>
    %157 = arith.mulf %152, %152 : vector<64x8xf32>
    %cst_75 = arith.constant dense<0.000000e+00> : vector<8xf32>
    %158 = vector.multi_reduction <add>, %157, %cst_75 [0] : vector<64x8xf32> to vector<8xf32>
    %159 = vector.shape_cast %158 : vector<8xf32> to vector<1x8xf32>
    %cst_76 = arith.constant 1.562500e-02 : f32
    %160 = vector.broadcast %cst_76 : f32 to vector<1x8xf32>
    %161 = arith.mulf %159, %160 : vector<1x8xf32>
    %162 = arith.mulf %156, %156 : vector<1x8xf32>
    %163 = arith.subf %161, %162 : vector<1x8xf32>
    %cst_77 = arith.constant 0.000000e+00 : f32
    %164 = vector.broadcast %cst_77 : f32 to vector<1x8xf32>
    %165 = arith.maximumf %163, %164 : vector<1x8xf32>
    %166 = vector.broadcast %156 : vector<1x8xf32> to vector<64x8xf32>
    %167 = arith.subf %152, %166 : vector<64x8xf32>
    %cst_78 = arith.constant 9.99999974E-6 : f32
    %168 = vector.broadcast %cst_78 : f32 to vector<1x8xf32>
    %169 = arith.addf %165, %168 : vector<1x8xf32>
    %170 = math.rsqrt %169 : vector<1x8xf32>
    %171 = vector.broadcast %170 : vector<1x8xf32> to vector<64x8xf32>
    %172 = arith.mulf %167, %171 : vector<64x8xf32>
    %cst_79 = arith.constant 0.000000e+00 : f32
    %173 = vector.broadcast %cst_79 : f32 to vector<64x8xf32>
    %174 = arith.maximumf %172, %173 : vector<64x8xf32>
    %175 = vector.shape_cast %174 : vector<64x8xf32> to vector<8x8x8xf32>
    %c0_i32_80 = arith.constant 0 : i32
    %176 = arith.sitofp %c0_i32_80 : i32 to f32
    %177 = vector.broadcast %176 : f32 to vector<1x8x8xf32>
    %178 = tpu.concatenate %177, %175 in 0 : vector<1x8x8xf32>, vector<8x8x8xf32> -> vector<9x8x8xf32>
    %179 = vector.broadcast %176 : f32 to vector<1x8x8xf32>
    %180 = tpu.concatenate %178, %179 in 0 : vector<9x8x8xf32>, vector<1x8x8xf32> -> vector<10x8x8xf32>
    %181 = vector.broadcast %176 : f32 to vector<10x1x8xf32>
    %182 = tpu.concatenate %181, %180 in 1 : vector<10x1x8xf32>, vector<10x8x8xf32> -> vector<10x9x8xf32>
    %183 = vector.broadcast %176 : f32 to vector<10x1x8xf32>
    %184 = tpu.concatenate %182, %183 in 1 : vector<10x9x8xf32>, vector<10x1x8xf32> -> vector<10x10x8xf32>
    %cst_81 = arith.constant 0.000000e+00 : f32
    %185 = vector.broadcast %cst_81 : f32 to vector<64x8xf32>
    %186 = vector.extract_strided_slice %184 {offsets = [0, 0, 0], sizes = [8, 8, 8], strides = [1, 1, 1]} : vector<10x10x8xf32> to vector<8x8x8xf32>
    %187 = vector.shape_cast %186 : vector<8x8x8xf32> to vector<64x8xf32>
    %188 = arith.truncf %187 : vector<64x8xf32> to vector<64x8xbf16>
    %c0_82 = arith.constant 0 : index
    %c0_83 = arith.constant 0 : index
    %c0_84 = arith.constant 0 : index
    %189 = vector.load %arg5[%c0_82, %c0_83, %c0_84] : memref<9x8x8xbf16, #tpu.memory_space<vmem>>, vector<1x8x8xbf16>
    %190 = vector.shape_cast %189 : vector<1x8x8xbf16> to vector<8x8xbf16>
    %cst_85 = arith.constant dense<0.000000e+00> : vector<64x8xf32>
    %191 = tpu.matmul %188, %190, %cst_85 {dimension_numbers = #tpu.dot_dimension_numbers<[1], [0], [0], [1], [0, 0, 1, 1], [], []>} : vector<64x8xbf16>, vector<8x8xbf16>, vector<64x8xf32> -> vector<64x8xf32>
    %192 = arith.addf %185, %191 : vector<64x8xf32>
    %193 = vector.extract_strided_slice %184 {offsets = [0, 1, 0], sizes = [8, 8, 8], strides = [1, 1, 1]} : vector<10x10x8xf32> to vector<8x8x8xf32>
    %194 = vector.shape_cast %193 : vector<8x8x8xf32> to vector<64x8xf32>
    %195 = arith.truncf %194 : vector<64x8xf32> to vector<64x8xbf16>
    %c1_86 = arith.constant 1 : index
    %c0_87 = arith.constant 0 : index
    %c0_88 = arith.constant 0 : index
    %196 = vector.load %arg5[%c1_86, %c0_87, %c0_88] : memref<9x8x8xbf16, #tpu.memory_space<vmem>>, vector<1x8x8xbf16>
    %197 = vector.shape_cast %196 : vector<1x8x8xbf16> to vector<8x8xbf16>
    %cst_89 = arith.constant dense<0.000000e+00> : vector<64x8xf32>
    %198 = tpu.matmul %195, %197, %cst_89 {dimension_numbers = #tpu.dot_dimension_numbers<[1], [0], [0], [1], [0, 0, 1, 1], [], []>} : vector<64x8xbf16>, vector<8x8xbf16>, vector<64x8xf32> -> vector<64x8xf32>
    %199 = arith.addf %192, %198 : vector<64x8xf32>
    %200 = vector.extract_strided_slice %184 {offsets = [0, 2, 0], sizes = [8, 8, 8], strides = [1, 1, 1]} : vector<10x10x8xf32> to vector<8x8x8xf32>
    %201 = vector.shape_cast %200 : vector<8x8x8xf32> to vector<64x8xf32>
    %202 = arith.truncf %201 : vector<64x8xf32> to vector<64x8xbf16>
    %c2_90 = arith.constant 2 : index
    %c0_91 = arith.constant 0 : index
    %c0_92 = arith.constant 0 : index
    %203 = vector.load %arg5[%c2_90, %c0_91, %c0_92] : memref<9x8x8xbf16, #tpu.memory_space<vmem>>, vector<1x8x8xbf16>
    %204 = vector.shape_cast %203 : vector<1x8x8xbf16> to vector<8x8xbf16>
    %cst_93 = arith.constant dense<0.000000e+00> : vector<64x8xf32>
    %205 = tpu.matmul %202, %204, %cst_93 {dimension_numbers = #tpu.dot_dimension_numbers<[1], [0], [0], [1], [0, 0, 1, 1], [], []>} : vector<64x8xbf16>, vector<8x8xbf16>, vector<64x8xf32> -> vector<64x8xf32>
    %206 = arith.addf %199, %205 : vector<64x8xf32>
    %207 = vector.extract_strided_slice %184 {offsets = [1, 0, 0], sizes = [8, 8, 8], strides = [1, 1, 1]} : vector<10x10x8xf32> to vector<8x8x8xf32>
    %208 = vector.shape_cast %207 : vector<8x8x8xf32> to vector<64x8xf32>
    %209 = arith.truncf %208 : vector<64x8xf32> to vector<64x8xbf16>
    %c3_94 = arith.constant 3 : index
    %c0_95 = arith.constant 0 : index
    %c0_96 = arith.constant 0 : index
    %210 = vector.load %arg5[%c3_94, %c0_95, %c0_96] : memref<9x8x8xbf16, #tpu.memory_space<vmem>>, vector<1x8x8xbf16>
    %211 = vector.shape_cast %210 : vector<1x8x8xbf16> to vector<8x8xbf16>
    %cst_97 = arith.constant dense<0.000000e+00> : vector<64x8xf32>
    %212 = tpu.matmul %209, %211, %cst_97 {dimension_numbers = #tpu.dot_dimension_numbers<[1], [0], [0], [1], [0, 0, 1, 1], [], []>} : vector<64x8xbf16>, vector<8x8xbf16>, vector<64x8xf32> -> vector<64x8xf32>
    %213 = arith.addf %206, %212 : vector<64x8xf32>
    %214 = vector.extract_strided_slice %184 {offsets = [1, 1, 0], sizes = [8, 8, 8], strides = [1, 1, 1]} : vector<10x10x8xf32> to vector<8x8x8xf32>
    %215 = vector.shape_cast %214 : vector<8x8x8xf32> to vector<64x8xf32>
    %216 = arith.truncf %215 : vector<64x8xf32> to vector<64x8xbf16>
    %c4_98 = arith.constant 4 : index
    %c0_99 = arith.constant 0 : index
    %c0_100 = arith.constant 0 : index
    %217 = vector.load %arg5[%c4_98, %c0_99, %c0_100] : memref<9x8x8xbf16, #tpu.memory_space<vmem>>, vector<1x8x8xbf16>
    %218 = vector.shape_cast %217 : vector<1x8x8xbf16> to vector<8x8xbf16>
    %cst_101 = arith.constant dense<0.000000e+00> : vector<64x8xf32>
    %219 = tpu.matmul %216, %218, %cst_101 {dimension_numbers = #tpu.dot_dimension_numbers<[1], [0], [0], [1], [0, 0, 1, 1], [], []>} : vector<64x8xbf16>, vector<8x8xbf16>, vector<64x8xf32> -> vector<64x8xf32>
    %220 = arith.addf %213, %219 : vector<64x8xf32>
    %221 = vector.extract_strided_slice %184 {offsets = [1, 2, 0], sizes = [8, 8, 8], strides = [1, 1, 1]} : vector<10x10x8xf32> to vector<8x8x8xf32>
    %222 = vector.shape_cast %221 : vector<8x8x8xf32> to vector<64x8xf32>
    %223 = arith.truncf %222 : vector<64x8xf32> to vector<64x8xbf16>
    %c5_102 = arith.constant 5 : index
    %c0_103 = arith.constant 0 : index
    %c0_104 = arith.constant 0 : index
    %224 = vector.load %arg5[%c5_102, %c0_103, %c0_104] : memref<9x8x8xbf16, #tpu.memory_space<vmem>>, vector<1x8x8xbf16>
    %225 = vector.shape_cast %224 : vector<1x8x8xbf16> to vector<8x8xbf16>
    %cst_105 = arith.constant dense<0.000000e+00> : vector<64x8xf32>
    %226 = tpu.matmul %223, %225, %cst_105 {dimension_numbers = #tpu.dot_dimension_numbers<[1], [0], [0], [1], [0, 0, 1, 1], [], []>} : vector<64x8xbf16>, vector<8x8xbf16>, vector<64x8xf32> -> vector<64x8xf32>
    %227 = arith.addf %220, %226 : vector<64x8xf32>
    %228 = vector.extract_strided_slice %184 {offsets = [2, 0, 0], sizes = [8, 8, 8], strides = [1, 1, 1]} : vector<10x10x8xf32> to vector<8x8x8xf32>
    %229 = vector.shape_cast %228 : vector<8x8x8xf32> to vector<64x8xf32>
    %230 = arith.truncf %229 : vector<64x8xf32> to vector<64x8xbf16>
    %c6_106 = arith.constant 6 : index
    %c0_107 = arith.constant 0 : index
    %c0_108 = arith.constant 0 : index
    %231 = vector.load %arg5[%c6_106, %c0_107, %c0_108] : memref<9x8x8xbf16, #tpu.memory_space<vmem>>, vector<1x8x8xbf16>
    %232 = vector.shape_cast %231 : vector<1x8x8xbf16> to vector<8x8xbf16>
    %cst_109 = arith.constant dense<0.000000e+00> : vector<64x8xf32>
    %233 = tpu.matmul %230, %232, %cst_109 {dimension_numbers = #tpu.dot_dimension_numbers<[1], [0], [0], [1], [0, 0, 1, 1], [], []>} : vector<64x8xbf16>, vector<8x8xbf16>, vector<64x8xf32> -> vector<64x8xf32>
    %234 = arith.addf %227, %233 : vector<64x8xf32>
    %235 = vector.extract_strided_slice %184 {offsets = [2, 1, 0], sizes = [8, 8, 8], strides = [1, 1, 1]} : vector<10x10x8xf32> to vector<8x8x8xf32>
    %236 = vector.shape_cast %235 : vector<8x8x8xf32> to vector<64x8xf32>
    %237 = arith.truncf %236 : vector<64x8xf32> to vector<64x8xbf16>
    %c7_110 = arith.constant 7 : index
    %c0_111 = arith.constant 0 : index
    %c0_112 = arith.constant 0 : index
    %238 = vector.load %arg5[%c7_110, %c0_111, %c0_112] : memref<9x8x8xbf16, #tpu.memory_space<vmem>>, vector<1x8x8xbf16>
    %239 = vector.shape_cast %238 : vector<1x8x8xbf16> to vector<8x8xbf16>
    %cst_113 = arith.constant dense<0.000000e+00> : vector<64x8xf32>
    %240 = tpu.matmul %237, %239, %cst_113 {dimension_numbers = #tpu.dot_dimension_numbers<[1], [0], [0], [1], [0, 0, 1, 1], [], []>} : vector<64x8xbf16>, vector<8x8xbf16>, vector<64x8xf32> -> vector<64x8xf32>
    %241 = arith.addf %234, %240 : vector<64x8xf32>
    %242 = vector.extract_strided_slice %184 {offsets = [2, 2, 0], sizes = [8, 8, 8], strides = [1, 1, 1]} : vector<10x10x8xf32> to vector<8x8x8xf32>
    %243 = vector.shape_cast %242 : vector<8x8x8xf32> to vector<64x8xf32>
    %244 = arith.truncf %243 : vector<64x8xf32> to vector<64x8xbf16>
    %c8_114 = arith.constant 8 : index
    %c0_115 = arith.constant 0 : index
    %c0_116 = arith.constant 0 : index
    %245 = vector.load %arg5[%c8_114, %c0_115, %c0_116] : memref<9x8x8xbf16, #tpu.memory_space<vmem>>, vector<1x8x8xbf16>
    %246 = vector.shape_cast %245 : vector<1x8x8xbf16> to vector<8x8xbf16>
    %cst_117 = arith.constant dense<0.000000e+00> : vector<64x8xf32>
    %247 = tpu.matmul %244, %246, %cst_117 {dimension_numbers = #tpu.dot_dimension_numbers<[1], [0], [0], [1], [0, 0, 1, 1], [], []>} : vector<64x8xbf16>, vector<8x8xbf16>, vector<64x8xf32> -> vector<64x8xf32>
    %248 = arith.addf %241, %247 : vector<64x8xf32>
    %cst_118 = arith.constant dense<0.000000e+00> : vector<8xf32>
    %249 = vector.multi_reduction <add>, %248, %cst_118 [0] : vector<64x8xf32> to vector<8xf32>
    %250 = vector.shape_cast %249 : vector<8xf32> to vector<1x8xf32>
    %cst_119 = arith.constant 1.562500e-02 : f32
    %251 = vector.broadcast %cst_119 : f32 to vector<1x8xf32>
    %252 = arith.mulf %250, %251 : vector<1x8xf32>
    %253 = arith.mulf %248, %248 : vector<64x8xf32>
    %cst_120 = arith.constant dense<0.000000e+00> : vector<8xf32>
    %254 = vector.multi_reduction <add>, %253, %cst_120 [0] : vector<64x8xf32> to vector<8xf32>
    %255 = vector.shape_cast %254 : vector<8xf32> to vector<1x8xf32>
    %cst_121 = arith.constant 1.562500e-02 : f32
    %256 = vector.broadcast %cst_121 : f32 to vector<1x8xf32>
    %257 = arith.mulf %255, %256 : vector<1x8xf32>
    %258 = arith.mulf %252, %252 : vector<1x8xf32>
    %259 = arith.subf %257, %258 : vector<1x8xf32>
    %cst_122 = arith.constant 0.000000e+00 : f32
    %260 = vector.broadcast %cst_122 : f32 to vector<1x8xf32>
    %261 = arith.maximumf %259, %260 : vector<1x8xf32>
    %262 = vector.broadcast %252 : vector<1x8xf32> to vector<64x8xf32>
    %263 = arith.subf %248, %262 : vector<64x8xf32>
    %cst_123 = arith.constant 9.99999974E-6 : f32
    %264 = vector.broadcast %cst_123 : f32 to vector<1x8xf32>
    %265 = arith.addf %261, %264 : vector<1x8xf32>
    %266 = math.rsqrt %265 : vector<1x8xf32>
    %267 = vector.broadcast %266 : vector<1x8xf32> to vector<64x8xf32>
    %268 = arith.mulf %263, %267 : vector<64x8xf32>
    %cst_124 = arith.constant 0.000000e+00 : f32
    %269 = vector.broadcast %cst_124 : f32 to vector<64x8xf32>
    %270 = arith.maximumf %268, %269 : vector<64x8xf32>
    %271 = vector.shape_cast %270 : vector<64x8xf32> to vector<1x8x8x8xf32>
    %c0_125 = arith.constant 0 : index
    %c0_126 = arith.constant 0 : index
    %c0_127 = arith.constant 0 : index
    %c0_128 = arith.constant 0 : index
    %272 = vector.load %arg6[%c0_125, %c0_126, %c0_127, %c0_128] : memref<1x8x8x8xf32, #tpu.memory_space<vmem>>, vector<1x8x8x8xf32>
    tpu.vector_store %arg6[%c0_125, %c0_126, %c0_127, %c0_128], %271 {strides = array<i32>} : memref<1x8x8x8xf32, #tpu.memory_space<vmem>>, vector<1x8x8x8xf32>,
    return
  }
  func.func @transform_0(%arg0: i32) -> (i32, i32, i32, i32) {
    %c0_i32 = arith.constant 0 : i32
    %c0_i32_0 = arith.constant 0 : i32
    %c0_i32_1 = arith.constant 0 : i32
    %c0_i32_2 = arith.constant 0 : i32
    return %arg0, %c0_i32, %c0_i32_0, %c0_i32_1 : i32, i32, i32, i32
  }
  func.func @transform_1(%arg0: i32) -> (i32, i32, i32, i32) {
    %c0_i32 = arith.constant 0 : i32
    %c0_i32_0 = arith.constant 0 : i32
    %c0_i32_1 = arith.constant 0 : i32
    %c0_i32_2 = arith.constant 0 : i32
    return %arg0, %c0_i32, %c0_i32_0, %c0_i32_1 : i32, i32, i32, i32
  }
  func.func @transform_2(%arg0: i32) -> (i32, i32, i32) {
    %c0_i32 = arith.constant 0 : i32
    %c0_i32_0 = arith.constant 0 : i32
    %c0_i32_1 = arith.constant 0 : i32
    %c0_i32_2 = arith.constant 0 : i32
    return %c0_i32, %c0_i32_0, %c0_i32_1 : i32, i32, i32
  }
  func.func @transform_3(%arg0: i32) -> (i32, i32, i32) {
    %c0_i32 = arith.constant 0 : i32
    %c0_i32_0 = arith.constant 0 : i32
    %c0_i32_1 = arith.constant 0 : i32
    %c0_i32_2 = arith.constant 0 : i32
    return %c0_i32, %c0_i32_0, %c0_i32_1 : i32, i32, i32
  }
  func.func @transform_4(%arg0: i32) -> (i32, i32, i32) {
    %c0_i32 = arith.constant 0 : i32
    %c0_i32_0 = arith.constant 0 : i32
    %c0_i32_1 = arith.constant 0 : i32
    %c0_i32_2 = arith.constant 0 : i32
    return %c0_i32, %c0_i32_0, %c0_i32_1 : i32, i32, i32
  }
  func.func @transform_5(%arg0: i32) -> (i32, i32, i32, i32) {
    %c0_i32 = arith.constant 0 : i32
    %c0_i32_0 = arith.constant 0 : i32
    %c0_i32_1 = arith.constant 0 : i32
    %c0_i32_2 = arith.constant 0 : i32
    return %arg0, %c0_i32, %c0_i32_0, %c0_i32_1 : i32, i32, i32, i32
  }
}

</mosaic_0001>

<llo_original>
// kernel: tpu_custom_call.1
$region0: #{tpu_custom_call.1}
  #allocation0 [shape = 'u32[]', space=smem, size = 0x4, offset = 0x4, fixed_abs, tag = 'smem constant byte address 0x4 - core index']
  #allocation1 [shape = 'u32[144,128]{1,0:T(1,128)}', space=vmem, size = 0x12000, scoped, tag = 'internal scratch']
  %s0 = inlined_call_operand.vmem [shape: bf16[2,8,8,4], index: 0, kind: input, shape index: {}]
  %s1 = inlined_call_operand.vmem [shape: bf16[2,8,8,4], index: 1, kind: input, shape index: {}]
  %s2 = inlined_call_operand.vmem [shape: bf16[9,4,8], index: 2, kind: input, shape index: {}]
  %s3 = inlined_call_operand.vmem [shape: bf16[9,4,8], index: 3, kind: input, shape index: {}]
  %s4 = inlined_call_operand.vmem [shape: bf16[9,8,8], index: 4, kind: input, shape index: {}]
  %s5 = inlined_call_operand.hbm [shape: f32[2,8,8,8], index: 5, kind: output, shape index: {}]
  %s6 = sld [smem:[#allocation0]]
  $region53: #{tpu_custom_call.1} parent=0
    _
  %s8 = ssub.s32 1, %s6
  %s9 = scalar_select 0, %s8, %s6
  $region1: #{tpu_custom_call.1} parent=0
    #allocation2 [shape = 'u8[65536]{0}', space=vmem, size = 0x10000, scoped, tag = 'output window, operand 0']
    #allocation3 [shape = 's32[2]{0}', space=sflag, size = 0x8, scoped, tag = 'scoped memory for tpu_custom_call.1']
    %10 = vsyncpa [#allocation3], 0
    %s11 = scalar_lea.sflag [#allocation3], 1
    %12 = vsyncpa %s11, 0
    loop: start=0, step=1, limit=4
    $region2: #{tpu_custom_call.1} parent=1 // loop_pre_header
      _
    $region3: #{tpu_custom_call.1} parent=1 // loop_header
      %s14 = sphi 0, %s18
      %p15 = scmp.ge.s32.totalorder %s14, 4
      %s24 = sphi 0, %s26
      %s27 = sphi 0, %s24
      %s28 = sphi 0, %s27
      %s44 = sphi 0, %s28
      %s50 = sphi 0, %s52
      %s53 = sphi 0, %s50
      %s54 = sphi 0, %s53
      %s70 = sphi 0, %s54
      %s74 = sphi 0, %s74
      %s76 = sphi 0, %s74
      %s77 = sphi 0, %s76
      %s91 = sphi 0, %s77
      %s95 = sphi 0, %s95
      %s97 = sphi 0, %s95
      %s98 = sphi 0, %s97
      %s112 = sphi 0, %s98
      %s116 = sphi 0, %s116
      %s118 = sphi 0, %s116
      %s119 = sphi 0, %s118
      %s133 = sphi 0, %s119
      %s139 = sphi 0, %s141
      %s142 = sphi 0, %s139
      %s143 = sphi 0, %s142
      %s159 = sphi 0, %s143
    $region4: #{tpu_custom_call.1} parent=1 // loop_header_branch
      %17 = sbr.rel (%p15) target = $region8
    $region5: #{tpu_custom_call.1} parent=1 // loop_body
      %s19 = ssub.s32 %s14, 1
      %s20 = ssub.s32 %s14, 2
      %s21 = sadd.s32 %s14, 1
      %s22 = ssub.s32 %s14, %s21
      %p23 = scmp.eq.s32.totalorder %s22, 0
      %s25 = sadd.s32 %s24, 1
      %s26 = scalar_select %p23, %s24, %s25
      %p29 = pneg %p23
      %p30 = scmp.eq.s32.totalorder %s14, 1
      %p31 = por %p29, %p30
      %p32 = scmp.ne.s32.totalorder %s24, %s27
      %p33 = scmp.eq.s32.totalorder %s14, 0
      %p34 = por %p32, %p33
      %p35 = scmp.ne.s32.totalorder %s24, %s27
      %p36 = scmp.eq.s32.totalorder %s19, 1
      %p37 = por %p35, %p36
      %p38 = scmp.ne.s32.totalorder %s27, %s28
      %p39 = scmp.eq.s32.totalorder %s19, 0
      %p40 = por %p38, %p39
      %p41 = scmp.ne.s32.totalorder %s27, %s28
      %p42 = scmp.eq.s32.totalorder %s20, 1
      %p43 = por %p41, %p42
      %p45 = scmp.ne.s32.totalorder %s28, %s44
      %p46 = scmp.eq.s32.totalorder %s20, 0
      %p47 = por %p45, %p46
      %s48 = ssub.s32 %s14, %s21
      %p49 = scmp.eq.s32.totalorder %s48, 0
      %s51 = sadd.s32 %s50, 1
      %s52 = scalar_select %p49, %s50, %s51
      %p55 = pneg %p49
      %p56 = scmp.eq.s32.totalorder %s14, 1
      %p57 = por %p55, %p56
      %p58 = scmp.ne.s32.totalorder %s50, %s53
      %p59 = scmp.eq.s32.totalorder %s14, 0
      %p60 = por %p58, %p59
      %p61 = scmp.ne.s32.totalorder %s50, %s53
      %p62 = scmp.eq.s32.totalorder %s19, 1
      %p63 = por %p61, %p62
      %p64 = scmp.ne.s32.totalorder %s53, %s54
      %p65 = scmp.eq.s32.totalorder %s19, 0
      %p66 = por %p64, %p65
      %p67 = scmp.ne.s32.totalorder %s53, %s54
      %p68 = scmp.eq.s32.totalorder %s20, 1
      %p69 = por %p67, %p68
      %p71 = scmp.ne.s32.totalorder %s54, %s70
      %p72 = scmp.eq.s32.totalorder %s20, 0
      %p73 = por %p71, %p72
      %s75 = sadd.s32 %s74, 1
      %p78 = scmp.eq.s32.totalorder %s14, 1
      %p79 = scmp.ne.s32.totalorder %s74, %s76
      %p80 = scmp.eq.s32.totalorder %s14, 0
      %p81 = por %p79, %p80
      %p82 = scmp.ne.s32.totalorder %s74, %s76
      %p83 = scmp.eq.s32.totalorder %s19, 1
      %p84 = por %p82, %p83
      %p85 = scmp.ne.s32.totalorder %s76, %s77
      %p86 = scmp.eq.s32.totalorder %s19, 0
      %p87 = por %p85, %p86
      %p88 = scmp.ne.s32.totalorder %s76, %s77
      %p89 = scmp.eq.s32.totalorder %s20, 1
      %p90 = por %p88, %p89
      %p92 = scmp.ne.s32.totalorder %s77, %s91
      %p93 = scmp.eq.s32.totalorder %s20, 0
      %p94 = por %p92, %p93
      %s96 = sadd.s32 %s95, 1
      %p99 = scmp.eq.s32.totalorder %s14, 1
      %p100 = scmp.ne.s32.totalorder %s95, %s97
      %p101 = scmp.eq.s32.totalorder %s14, 0
      %p102 = por %p100, %p101
      %p103 = scmp.ne.s32.totalorder %s95, %s97
      %p104 = scmp.eq.s32.totalorder %s19, 1
      %p105 = por %p103, %p104
      %p106 = scmp.ne.s32.totalorder %s97, %s98
      %p107 = scmp.eq.s32.totalorder %s19, 0
      %p108 = por %p106, %p107
      %p109 = scmp.ne.s32.totalorder %s97, %s98
      %p110 = scmp.eq.s32.totalorder %s20, 1
      %p111 = por %p109, %p110
      %p113 = scmp.ne.s32.totalorder %s98, %s112
      %p114 = scmp.eq.s32.totalorder %s20, 0
      %p115 = por %p113, %p114
      %s117 = sadd.s32 %s116, 1
      %p120 = scmp.eq.s32.totalorder %s14, 1
      %p121 = scmp.ne.s32.totalorder %s116, %s118
      %p122 = scmp.eq.s32.totalorder %s14, 0
      %p123 = por %p121, %p122
      %p124 = scmp.ne.s32.totalorder %s116, %s118
      %p125 = scmp.eq.s32.totalorder %s19, 1
      %p126 = por %p124, %p125
      %p127 = scmp.ne.s32.totalorder %s118, %s119
      %p128 = scmp.eq.s32.totalorder %s19, 0
      %p129 = por %p127, %p128
      %p130 = scmp.ne.s32.totalorder %s118, %s119
      %p131 = scmp.eq.s32.totalorder %s20, 1
      %p132 = por %p130, %p131
      %p134 = scmp.ne.s32.totalorder %s119, %s133
      %p135 = scmp.eq.s32.totalorder %s20, 0
      %p136 = por %p134, %p135
      %s137 = ssub.s32 %s14, %s21
      %p138 = scmp.eq.s32.totalorder %s137, 0
      %s140 = sadd.s32 %s139, 1
      %s141 = scalar_select %p138, %s139, %s140
      %p144 = pneg %p138
      %p145 = scmp.eq.s32.totalorder %s14, 1
      %p146 = por %p144, %p145
      %p147 = scmp.ne.s32.totalorder %s139, %s142
      %p148 = scmp.eq.s32.totalorder %s14, 0
      %p149 = por %p147, %p148
      %p150 = scmp.ne.s32.totalorder %s139, %s142
      %p151 = scmp.eq.s32.totalorder %s19, 1
      %p152 = por %p150, %p151
      %p153 = scmp.ne.s32.totalorder %s142, %s143
      %p154 = scmp.eq.s32.totalorder %s19, 0
      %p155 = por %p153, %p154
      %p156 = scmp.ne.s32.totalorder %s142, %s143
      %p157 = scmp.eq.s32.totalorder %s20, 1
      %p158 = por %p156, %p157
      %p160 = scmp.ne.s32.totalorder %s143, %s159
      %p161 = scmp.eq.s32.totalorder %s20, 0
      %p162 = por %p160, %p161
      %p163 = scmp.le.s32.totalorder 1, %s14
      %p164 = scmp.lt.s32.totalorder %s14, 3
      %p165 = pnand %p163, %p164
      %p166 = pneg %p165
      // Predicated region
      $region9: #{tpu_custom_call.1} parent=5 // pred_check
        _
      $region10: #{tpu_custom_call.1} parent=5 // pred_check_branch
        %168 = sbr.rel (%p165) target = $region12
      $region11: #{tpu_custom_call.1} parent=5 // pred_region
        %s169 = ssub.s32 %s14, 1
        // Predicated region
        $region13: #{tpu_custom_call.1} parent=11 // pred_check
          %p170 = pneg %p87
        $region14: #{tpu_custom_call.1} parent=11 // pred_check_branch
          %172 = sbr.rel (%p170) target = $region16
        $region15: #{tpu_custom_call.1} parent=11 // pred_region
          _
        $region16: #{tpu_custom_call.1} parent=11 // pred_fallthru
          _
        // Predicated region
        $region17: #{tpu_custom_call.1} parent=11 // pred_check
          %p173 = pneg %p108
        $region18: #{tpu_custom_call.1} parent=11 // pred_check_branch
          %175 = sbr.rel (%p173) target = $region20
        $region19: #{tpu_custom_call.1} parent=11 // pred_region
          _
        $region20: #{tpu_custom_call.1} parent=11 // pred_fallthru
          _
        // Predicated region
        $region21: #{tpu_custom_call.1} parent=11 // pred_check
          %p176 = pneg %p129
        $region22: #{tpu_custom_call.1} parent=11 // pred_check_branch
          %178 = sbr.rel (%p176) target = $region24
        $region23: #{tpu_custom_call.1} parent=11 // pred_region
          _
        $region24: #{tpu_custom_call.1} parent=11 // pred_fallthru
          _
      $region12: #{tpu_custom_call.1} parent=5 // pred_fallthru
        _
      %p179 = scmp.lt.s32.totalorder %s14, 2
      // Predicated region
      $region25: #{tpu_custom_call.1} parent=5 // pred_check
        %p180 = pneg %p179
      $region26: #{tpu_custom_call.1} parent=5 // pred_check_branch
        %182 = sbr.rel (%p180) target = $region28
      $region27: #{tpu_custom_call.1} parent=5 // pred_region
        // Predicated region
        $region29: #{tpu_custom_call.1} parent=27 // pred_check
          %p183 = pneg %p34
        $region30: #{tpu_custom_call.1} parent=27 // pred_check_branch
          %185 = sbr.rel (%p183) target = $region32
        $region31: #{tpu_custom_call.1} parent=27 // pred_region
          %p186 = scmp.lt.s32.totalorder %s14, 1
          %s187 = scalar_select %p186, %s14, 1
          %s188 = smul.addr %s187, 8
          %s189 = smul.addr %s188, 4
          %s190 = scalar_lea.vmem %s0, %s189
        $region32: #{tpu_custom_call.1} parent=27 // pred_fallthru
          _
        // Predicated region
        $region33: #{tpu_custom_call.1} parent=27 // pred_check
          %p191 = pneg %p60
        $region34: #{tpu_custom_call.1} parent=27 // pred_check_branch
          %193 = sbr.rel (%p191) target = $region36
        $region35: #{tpu_custom_call.1} parent=27 // pred_region
          %p194 = scmp.lt.s32.totalorder %s14, 1
          %s195 = scalar_select %p194, %s14, 1
          %s196 = smul.addr %s195, 8
          %s197 = smul.addr %s196, 4
          %s198 = scalar_lea.vmem %s1, %s197
        $region36: #{tpu_custom_call.1} parent=27 // pred_fallthru
          _
      $region28: #{tpu_custom_call.1} parent=5 // pred_fallthru
        _
      %p199 = scmp.le.s32.totalorder 1, %s14
      %p200 = scmp.lt.s32.totalorder %s14, 3
      %p201 = pnand %p199, %p200
      %p202 = pneg %p201
      // Predicated region
      $region37: #{tpu_custom_call.1} parent=5 // pred_check
        _
      $region38: #{tpu_custom_call.1} parent=5 // pred_check_branch
        %204 = sbr.rel (%p201) target = $region40
      $region39: #{tpu_custom_call.1} parent=5 // pred_region
        %s205 = ssub.s32 %s14, 1
        %p206 = scmp.lt.s32.totalorder %s19, 1
        %s207 = scalar_select %p206, %s19, 1
        %s208 = smul.addr %s207, 8
        %s209 = smul.addr %s208, 4
        %s210 = scalar_lea.vmem %s0, %s209
        %p211 = pneg %p40
        %p212 = pneg %p37
        %p213 = scmp.lt.s32.totalorder %s19, 1
        %s214 = scalar_select %p213, %s19, 1
        %s215 = smul.addr %s214, 8
        %s216 = smul.addr %s215, 4
        %s217 = scalar_lea.vmem %s1, %s216
        %p218 = pneg %p66
        %p219 = pneg %p63
        %p220 = pneg %p87
        %p221 = pneg %p84
        %p222 = pneg %p108
        %p223 = pneg %p105
        %p224 = pneg %p129
        %p225 = pneg %p126
        %p226 = pneg %p155
        %p227 = pneg %p152
        %s228 = sand.u32 %s142, 1
        %s229 = scalar_lea.sflag [#allocation3], %s228
        %s230 = sand.u32 %s142, 1
        %s231 = smul.addr %s230, 64
        %s232 = scalar_lea.vmem [#allocation2], %s231
        %p233 = scmp.lt.s32.totalorder %s19, 1
        %s234 = scalar_select %p233, %s19, 1
        %s235 = smul.addr %s234, 8
        %s236 = smul.addr %s235, 4
        %s237 = scalar_lea.vmem %s0, %s236
        %p238 = scmp.lt.s32.totalorder %s19, 1
        %s239 = scalar_select %p238, %s19, 1
        %s240 = smul.addr %s239, 8
        %s241 = smul.addr %s240, 4
        %s242 = scalar_lea.vmem %s1, %s241
        %v244 = vld [vmem:[%s237] sm:$0xf]
        %v245 = vld [vmem:[%s237 + $0x4] sm:$0xf]
        %v246 = vld [vmem:[%s237 + $0x8] sm:$0xf]
        %v247 = vld [vmem:[%s237 + $0xc] sm:$0xf]
        %v248 = vld [vmem:[%s237 + $0x10] sm:$0xf]
        %v249 = vld [vmem:[%s237 + $0x14] sm:$0xf]
        %v250 = vld [vmem:[%s237 + $0x18] sm:$0xf]
        %v251 = vld [vmem:[%s237 + $0x1c] sm:$0xf]
        %v252 = vunpack.c.l.bf16 %v244
        %v253 = vunpack.c.l.bf16 %v245
        %v254 = vunpack.c.l.bf16 %v246
        %v255 = vunpack.c.l.bf16 %v247
        %v256 = vunpack.c.l.bf16 %v248
        %v257 = vunpack.c.l.bf16 %v249
        %v258 = vunpack.c.l.bf16 %v250
        %v259 = vunpack.c.l.bf16 %v251
        %v260 = vld [vmem:[%s242] sm:$0xf]
        %v261 = vld [vmem:[%s242 + $0x4] sm:$0xf]
        %v262 = vld [vmem:[%s242 + $0x8] sm:$0xf]
        %v263 = vld [vmem:[%s242 + $0xc] sm:$0xf]
        %v264 = vld [vmem:[%s242 + $0x10] sm:$0xf]
        %v265 = vld [vmem:[%s242 + $0x14] sm:$0xf]
        %v266 = vld [vmem:[%s242 + $0x18] sm:$0xf]
        %v267 = vld [vmem:[%s242 + $0x1c] sm:$0xf]
        %v268 = vunpack.c.l.bf16 %v260
        %v269 = vunpack.c.l.bf16 %v261
        %v270 = vunpack.c.l.bf16 %v262
        %v271 = vunpack.c.l.bf16 %v263
        %v272 = vunpack.c.l.bf16 %v264
        %v273 = vunpack.c.l.bf16 %v265
        %v274 = vunpack.c.l.bf16 %v266
        %v275 = vunpack.c.l.bf16 %v267
        %v285 = vrot.slane 0.0, 7
        %v286 = vrot.slane %v252, 7
        %v287 = vrot.slane %v253, 7
        %v288 = vrot.slane %v254, 7
        %v289 = vrot.slane %v255, 7
        %v290 = vrot.slane %v256, 7
        %v291 = vrot.slane %v257, 7
        %v292 = vrot.slane %v258, 7
        %v293 = vrot.slane %v259, 7
        %vm303 = vcmask 1040384
        %v304 = vsel %vm303, 0.0, %v285
        %v305 = vsel %vm303, 0.0, %v286
        %v306 = vsel %vm303, 0.0, %v287
        %v307 = vsel %vm303, 0.0, %v288
        %v308 = vsel %vm303, 0.0, %v289
        %v309 = vsel %vm303, 0.0, %v290
        %v310 = vsel %vm303, 0.0, %v291
        %v311 = vsel %vm303, 0.0, %v292
        %v312 = vsel %vm303, 0.0, %v293
        %v313 = vsel %vm303, %v285, 0.0
        %v314 = vsel %vm303, %v286, 0.0
        %v315 = vsel %vm303, %v287, 0.0
        %v316 = vsel %vm303, %v288, 0.0
        %v317 = vsel %vm303, %v289, 0.0
        %v318 = vsel %vm303, %v290, 0.0
        %v319 = vsel %vm303, %v291, 0.0
        %v320 = vsel %vm303, %v292, 0.0
        %v321 = vsel %vm303, %v293, 0.0
        %v322 = vpack.c.bf16 %v305, %v304
        %v323 = vpack.c.bf16 %v307, %v306
        %v324 = vpack.c.bf16 %v309, %v308
        %v325 = vpack.c.bf16 %v311, %v310
        %v326 = vld [vmem:[%s2] sm:$0x3]
        %vm343 = vcmask 1046528
        %v344 = vrot.slane %v304, 1
        %v345 = vrot.slane %v313, 1
        %v346 = vsel %vm343, %v344, %v345
        %v347 = vrot.slane %v305, 1
        %v348 = vrot.slane %v314, 1
        %v349 = vsel %vm343, %v347, %v348
        %v350 = vrot.slane %v306, 1
        %v351 = vrot.slane %v315, 1
        %v352 = vsel %vm343, %v350, %v351
        %v353 = vrot.slane %v307, 1
        %v354 = vrot.slane %v316, 1
        %v355 = vsel %vm343, %v353, %v354
        %v356 = vrot.slane %v308, 1
        %v357 = vrot.slane %v317, 1
        %v358 = vsel %vm343, %v356, %v357
        %v359 = vrot.slane %v309, 1
        %v360 = vrot.slane %v318, 1
        %v361 = vsel %vm343, %v359, %v360
        %v362 = vrot.slane %v310, 1
        %v363 = vrot.slane %v319, 1
        %v364 = vsel %vm343, %v362, %v363
        %v365 = vrot.slane %v311, 1
        %v366 = vrot.slane %v320, 1
        %v367 = vsel %vm343, %v365, %v366
        %v376 = vpack.c.bf16 %v349, %v346
        %v377 = vpack.c.bf16 %v355, %v352
        %v378 = vpack.c.bf16 %v361, %v358
        %v379 = vpack.c.bf16 %v367, %v364
        %s380 = scalar_lea.vmem %s2, 2
        %v381 = vld [vmem:[%s380] sm:$0x3]
        %vm382 = vcmask 31744
        %v384 = vsel %vm382, %v376, 0
        %v387 = vsel %vm382, %v377, 0
        %v390 = vsel %vm382, %v378, 0
        %v393 = vsel %vm382, %v379, 0
        %vm395 = vcmask 1041408
        %v397 = vsel %vm395, %v381, 0
        %399 = vmatprep.subr.bf16.mxu0 0
        %400 = vmatpush1.bf16.msra.mxu0 %v397
        %401 = vmatprep.subr.bf16.mxu0 0
        %402 = vmatpush1.bf16.msra.mxu0 0
        %403 = vmatprep.subr.bf16.mxu0 0
        %404 = vmatpush1.bf16.msra.mxu0 0
        %405 = vmatprep.subr.bf16.mxu0 0
        %406 = vmatpush1.bf16.msra.mxu0 0
        %407 = vmatprep.subr.bf16.mxu0 0
        %408 = vmatpush1.bf16.msra.mxu0 0
        %409 = vmatprep.subr.bf16.mxu0 0
        %410 = vmatpush1.bf16.msra.mxu0 0
        %411 = vmatprep.subr.bf16.mxu0 0
        %412 = vmatpush1.bf16.msra.mxu0 0
        %413 = vmatprep.subr.bf16.mxu0 0
        %414 = vmatpush1.bf16.msra.mxu0 0
        %415 = vmatprep.subr.bf16.mxu0 0
        %416 = vmatpush1.bf16.msra.mxu0 0
        %417 = vmatprep.subr.bf16.mxu0 0
        %418 = vmatpush1.bf16.msra.mxu0 0
        %419 = vmatprep.subr.bf16.mxu0 0
        %420 = vmatpush1.bf16.msra.mxu0 0
        %421 = vmatprep.subr.bf16.mxu0 0
        %422 = vmatpush1.bf16.msra.mxu0 0
        %423 = vmatprep.subr.bf16.mxu0 0
        %424 = vmatpush1.bf16.msra.mxu0 0
        %425 = vmatprep.subr.bf16.mxu0 0
        %426 = vmatpush1.bf16.msra.mxu0 0
        %427 = vmatprep.subr.bf16.mxu0 0
        %428 = vmatpush1.bf16.msra.mxu0 0
        %429 = vmatprep.subr.bf16.mxu0 0
        %430 = vmatpush1.bf16.msra.mxu0 0
        %431 = vmatprep.mubr.bf16.mxu0 0
        %432 = vmatmul.mubr.bf16.gmra.mrb[0].mxu0 %v384
        %v433 = vpop.f32.mrb[0].mxu0
        %v434 = vadd.f32 0.0, %v433
        %v435 = vpop.f32.mrb[0].mxu0
        %v436 = vpop.f32.mrb[0].mxu0
        %v437 = vadd.f32 0.0, %v436
        %v438 = vpop.f32.mrb[0].mxu0
        %439 = vmatprep.mubr.bf16.mxu0 0
        %440 = vmatmul.mubr.bf16.gmra.mrb[0].mxu0 %v387
        %v441 = vpop.f32.mrb[0].mxu0
        %v442 = vadd.f32 0.0, %v441
        %v443 = vpop.f32.mrb[0].mxu0
        %v444 = vpop.f32.mrb[0].mxu0
        %v445 = vadd.f32 0.0, %v444
        %v446 = vpop.f32.mrb[0].mxu0
        %447 = vmatprep.mubr.bf16.mxu0 0
        %448 = vmatmul.mubr.bf16.gmra.mrb[0].mxu0 %v390
        %v449 = vpop.f32.mrb[0].mxu0
        %v450 = vadd.f32 0.0, %v449
        %v451 = vpop.f32.mrb[0].mxu0
        %v452 = vpop.f32.mrb[0].mxu0
        %v453 = vadd.f32 0.0, %v452
        %v454 = vpop.f32.mrb[0].mxu0
        %455 = vmatprep.mubr.bf16.mxu0 0
        %456 = vmatmul.mubr.bf16.gmra.mrb[0].mxu0 %v393
        %v457 = vpop.f32.mrb[0].mxu0
        %v458 = vadd.f32 0.0, %v457
        %v459 = vpop.f32.mrb[0].mxu0
        %v460 = vpop.f32.mrb[0].mxu0
        %v461 = vadd.f32 0.0, %v460
        %v462 = vpop.f32.mrb[0].mxu0
        %463 = vdwg.mxu0
        %v465 = vsel %vm382, %v322, 0
        %v468 = vsel %vm382, %v323, 0
        %v471 = vsel %vm382, %v324, 0
        %v474 = vsel %vm382, %v325, 0
        %v477 = vsel %vm395, %v326, 0
        %479 = vmatprep.subr.bf16.mxu0 0
        %480 = vmatpush1.bf16.msra.mxu0 %v477
        %481 = vmatprep.subr.bf16.mxu0 0
        %482 = vmatpush1.bf16.msra.mxu0 0
        %483 = vmatprep.subr.bf16.mxu0 0
        %484 = vmatpush1.bf16.msra.mxu0 0
        %485 = vmatprep.subr.bf16.mxu0 0
        %486 = vmatpush1.bf16.msra.mxu0 0
        %487 = vmatprep.subr.bf16.mxu0 0
        %488 = vmatpush1.bf16.msra.mxu0 0
        %489 = vmatprep.subr.bf16.mxu0 0
        %490 = vmatpush1.bf16.msra.mxu0 0
        %491 = vmatprep.subr.bf16.mxu0 0
        %492 = vmatpush1.bf16.msra.mxu0 0
        %493 = vmatprep.subr.bf16.mxu0 0
        %494 = vmatpush1.bf16.msra.mxu0 0
        %495 = vmatprep.subr.bf16.mxu0 0
        %496 = vmatpush1.bf16.msra.mxu0 0
        %497 = vmatprep.subr.bf16.mxu0 0
        %498 = vmatpush1.bf16.msra.mxu0 0
        %499 = vmatprep.subr.bf16.mxu0 0
        %500 = vmatpush1.bf16.msra.mxu0 0
        %501 = vmatprep.subr.bf16.mxu0 0
        %502 = vmatpush1.bf16.msra.mxu0 0
        %503 = vmatprep.subr.bf16.mxu0 0
        %504 = vmatpush1.bf16.msra.mxu0 0
        %505 = vmatprep.subr.bf16.mxu0 0
        %506 = vmatpush1.bf16.msra.mxu0 0
        %507 = vmatprep.subr.bf16.mxu0 0
        %508 = vmatpush1.bf16.msra.mxu0 0
        %509 = vmatprep.subr.bf16.mxu0 0
        %510 = vmatpush1.bf16.msra.mxu0 0
        %511 = vmatprep.mubr.bf16.mxu0 0
        %512 = vmatmul.mubr.bf16.gmra.mrb[0].mxu0 %v465
        %v513 = vpop.f32.mrb[0].mxu0
        %v514 = vadd.f32 %v434, %v513
        %v515 = vpop.f32.mrb[0].mxu0
        %v516 = vpop.f32.mrb[0].mxu0
        %v517 = vadd.f32 %v437, %v516
        %v518 = vpop.f32.mrb[0].mxu0
        %519 = vmatprep.mubr.bf16.mxu0 0
        %520 = vmatmul.mubr.bf16.gmra.mrb[0].mxu0 %v468
        %v521 = vpop.f32.mrb[0].mxu0
        %v522 = vadd.f32 %v442, %v521
        %v523 = vpop.f32.mrb[0].mxu0
        %v524 = vpop.f32.mrb[0].mxu0
        %v525 = vadd.f32 %v445, %v524
        %v526 = vpop.f32.mrb[0].mxu0
        %527 = vmatprep.mubr.bf16.mxu0 0
        %528 = vmatmul.mubr.bf16.gmra.mrb[0].mxu0 %v471
        %v529 = vpop.f32.mrb[0].mxu0
        %v530 = vadd.f32 %v450, %v529
        %v531 = vpop.f32.mrb[0].mxu0
        %v532 = vpop.f32.mrb[0].mxu0
        %v533 = vadd.f32 %v453, %v532
        %v534 = vpop.f32.mrb[0].mxu0
        %535 = vmatprep.mubr.bf16.mxu0 0
        %536 = vmatmul.mubr.bf16.gmra.mrb[0].mxu0 %v474
        %v537 = vpop.f32.mrb[0].mxu0
        %v538 = vadd.f32 %v458, %v537
        %v539 = vpop.f32.mrb[0].mxu0
        %v540 = vpop.f32.mrb[0].mxu0
        %v541 = vadd.f32 %v461, %v540
        %v542 = vpop.f32.mrb[0].mxu0
        %543 = vdwg.mxu0
        %vm544 = vcmask 1045504
        %v545 = vrot.slane %v304, 2
        %v546 = vrot.slane %v313, 2
        %v547 = vsel %vm544, %v545, %v546
        %v548 = vrot.slane %v305, 2
        %v549 = vrot.slane %v314, 2
        %v550 = vsel %vm544, %v548, %v549
        %v551 = vrot.slane %v306, 2
        %v552 = vrot.slane %v315, 2
        %v553 = vsel %vm544, %v551, %v552
        %v554 = vrot.slane %v307, 2
        %v555 = vrot.slane %v316, 2
        %v556 = vsel %vm544, %v554, %v555
        %v557 = vrot.slane %v308, 2
        %v558 = vrot.slane %v317, 2
        %v559 = vsel %vm544, %v557, %v558
        %v560 = vrot.slane %v309, 2
        %v561 = vrot.slane %v318, 2
        %v562 = vsel %vm544, %v560, %v561
        %v563 = vrot.slane %v310, 2
        %v564 = vrot.slane %v319, 2
        %v565 = vsel %vm544, %v563, %v564
        %v566 = vrot.slane %v311, 2
        %v567 = vrot.slane %v320, 2
        %v568 = vsel %vm544, %v566, %v567
        %v577 = vpack.c.bf16 %v550, %v547
        %v578 = vpack.c.bf16 %v556, %v553
        %v579 = vpack.c.bf16 %v562, %v559
        %v580 = vpack.c.bf16 %v568, %v565
        %s581 = scalar_lea.vmem %s2, 4
        %v582 = vld [vmem:[%s581] sm:$0x3]
        %v584 = vsel %vm382, %v577, 0
        %v587 = vsel %vm382, %v578, 0
        %v590 = vsel %vm382, %v579, 0
        %v593 = vsel %vm382, %v580, 0
        %v596 = vsel %vm395, %v582, 0
        %598 = vmatprep.subr.bf16.mxu0 0
        %599 = vmatpush1.bf16.msra.mxu0 %v596
        %600 = vmatprep.subr.bf16.mxu0 0
        %601 = vmatpush1.bf16.msra.mxu0 0
        %602 = vmatprep.subr.bf16.mxu0 0
        %603 = vmatpush1.bf16.msra.mxu0 0
        %604 = vmatprep.subr.bf16.mxu0 0
        %605 = vmatpush1.bf16.msra.mxu0 0
        %606 = vmatprep.subr.bf16.mxu0 0
        %607 = vmatpush1.bf16.msra.mxu0 0
        %608 = vmatprep.subr.bf16.mxu0 0
        %609 = vmatpush1.bf16.msra.mxu0 0
        %610 = vmatprep.subr.bf16.mxu0 0
        %611 = vmatpush1.bf16.msra.mxu0 0
        %612 = vmatprep.subr.bf16.mxu0 0
        %613 = vmatpush1.bf16.msra.mxu0 0
        %614 = vmatprep.subr.bf16.mxu0 0
        %615 = vmatpush1.bf16.msra.mxu0 0
        %616 = vmatprep.subr.bf16.mxu0 0
        %617 = vmatpush1.bf16.msra.mxu0 0
        %618 = vmatprep.subr.bf16.mxu0 0
        %619 = vmatpush1.bf16.msra.mxu0 0
        %620 = vmatprep.subr.bf16.mxu0 0
        %621 = vmatpush1.bf16.msra.mxu0 0
        %622 = vmatprep.subr.bf16.mxu0 0
        %623 = vmatpush1.bf16.msra.mxu0 0
        %624 = vmatprep.subr.bf16.mxu0 0
        %625 = vmatpush1.bf16.msra.mxu0 0
        %626 = vmatprep.subr.bf16.mxu0 0
        %627 = vmatpush1.bf16.msra.mxu0 0
        %628 = vmatprep.subr.bf16.mxu0 0
        %629 = vmatpush1.bf16.msra.mxu0 0
        %630 = vmatprep.mubr.bf16.mxu0 0
        %631 = vmatmul.mubr.bf16.gmra.mrb[0].mxu0 %v584
        %v632 = vpop.f32.mrb[0].mxu0
        %v633 = vadd.f32 0.0, %v632
        %v634 = vpop.f32.mrb[0].mxu0
        %v635 = vpop.f32.mrb[0].mxu0
        %v636 = vadd.f32 0.0, %v635
        %v637 = vpop.f32.mrb[0].mxu0
        %638 = vmatprep.mubr.bf16.mxu0 0
        %639 = vmatmul.mubr.bf16.gmra.mrb[0].mxu0 %v587
        %v640 = vpop.f32.mrb[0].mxu0
        %v641 = vadd.f32 0.0, %v640
        %v642 = vpop.f32.mrb[0].mxu0
        %v643 = vpop.f32.mrb[0].mxu0
        %v644 = vadd.f32 0.0, %v643
        %v645 = vpop.f32.mrb[0].mxu0
        %646 = vmatprep.mubr.bf16.mxu0 0
        %647 = vmatmul.mubr.bf16.gmra.mrb[0].mxu0 %v590
        %v648 = vpop.f32.mrb[0].mxu0
        %v649 = vadd.f32 0.0, %v648
        %v650 = vpop.f32.mrb[0].mxu0
        %v651 = vpop.f32.mrb[0].mxu0
        %v652 = vadd.f32 0.0, %v651
        %v653 = vpop.f32.mrb[0].mxu0
        %654 = vmatprep.mubr.bf16.mxu0 0
        %655 = vmatmul.mubr.bf16.gmra.mrb[0].mxu0 %v593
        %v656 = vpop.f32.mrb[0].mxu0
        %v657 = vadd.f32 0.0, %v656
        %v658 = vpop.f32.mrb[0].mxu0
        %v659 = vpop.f32.mrb[0].mxu0
        %v660 = vadd.f32 0.0, %v659
        %v661 = vpop.f32.mrb[0].mxu0
        %662 = vdwg.mxu0
        %v663 = vadd.f32 %v514, %v633
        %v664 = vadd.f32 %v517, %v636
        %v665 = vadd.f32 %v522, %v641
        %v666 = vadd.f32 %v525, %v644
        %v667 = vadd.f32 %v530, %v649
        %v668 = vadd.f32 %v533, %v652
        %v669 = vadd.f32 %v538, %v657
        %v670 = vadd.f32 %v541, %v660
        %v671 = vpack.c.bf16 %v306, %v305
        %v672 = vpack.c.bf16 %v308, %v307
        %v673 = vpack.c.bf16 %v310, %v309
        %v674 = vpack.c.bf16 %v312, %v311
        %s675 = scalar_lea.vmem %s2, 6
        %v676 = vld [vmem:[%s675] sm:$0x3]
        %v678 = vsel %vm382, %v671, 0
        %v681 = vsel %vm382, %v672, 0
        %v684 = vsel %vm382, %v673, 0
        %v687 = vsel %vm382, %v674, 0
        %v690 = vsel %vm395, %v676, 0
        %692 = vmatprep.subr.bf16.mxu0 0
        %693 = vmatpush1.bf16.msra.mxu0 %v690
        %694 = vmatprep.subr.bf16.mxu0 0
        %695 = vmatpush1.bf16.msra.mxu0 0
        %696 = vmatprep.subr.bf16.mxu0 0
        %697 = vmatpush1.bf16.msra.mxu0 0
        %698 = vmatprep.subr.bf16.mxu0 0
        %699 = vmatpush1.bf16.msra.mxu0 0
        %700 = vmatprep.subr.bf16.mxu0 0
        %701 = vmatpush1.bf16.msra.mxu0 0
        %702 = vmatprep.subr.bf16.mxu0 0
        %703 = vmatpush1.bf16.msra.mxu0 0
        %704 = vmatprep.subr.bf16.mxu0 0
        %705 = vmatpush1.bf16.msra.mxu0 0
        %706 = vmatprep.subr.bf16.mxu0 0
        %707 = vmatpush1.bf16.msra.mxu0 0
        %708 = vmatprep.subr.bf16.mxu0 0
        %709 = vmatpush1.bf16.msra.mxu0 0
        %710 = vmatprep.subr.bf16.mxu0 0
        %711 = vmatpush1.bf16.msra.mxu0 0
        %712 = vmatprep.subr.bf16.mxu0 0
        %713 = vmatpush1.bf16.msra.mxu0 0
        %714 = vmatprep.subr.bf16.mxu0 0
        %715 = vmatpush1.bf16.msra.mxu0 0
        %716 = vmatprep.subr.bf16.mxu0 0
        %717 = vmatpush1.bf16.msra.mxu0 0
        %718 = vmatprep.subr.bf16.mxu0 0
        %719 = vmatpush1.bf16.msra.mxu0 0
        %720 = vmatprep.subr.bf16.mxu0 0
        %721 = vmatpush1.bf16.msra.mxu0 0
        %722 = vmatprep.subr.bf16.mxu0 0
        %723 = vmatpush1.bf16.msra.mxu0 0
        %724 = vmatprep.mubr.bf16.mxu0 0
        %725 = vmatmul.mubr.bf16.gmra.mrb[0].mxu0 %v678
        %v726 = vpop.f32.mrb[0].mxu0
        %v727 = vadd.f32 0.0, %v726
        %v728 = vpop.f32.mrb[0].mxu0
        %v729 = vpop.f32.mrb[0].mxu0
        %v730 = vadd.f32 0.0, %v729
        %v731 = vpop.f32.mrb[0].mxu0
        %732 = vmatprep.mubr.bf16.mxu0 0
        %733 = vmatmul.mubr.bf16.gmra.mrb[0].mxu0 %v681
        %v734 = vpop.f32.mrb[0].mxu0
        %v735 = vadd.f32 0.0, %v734
        %v736 = vpop.f32.mrb[0].mxu0
        %v737 = vpop.f32.mrb[0].mxu0
        %v738 = vadd.f32 0.0, %v737
        %v739 = vpop.f32.mrb[0].mxu0
        %740 = vmatprep.mubr.bf16.mxu0 0
        %741 = vmatmul.mubr.bf16.gmra.mrb[0].mxu0 %v684
        %v742 = vpop.f32.mrb[0].mxu0
        %v743 = vadd.f32 0.0, %v742
        %v744 = vpop.f32.mrb[0].mxu0
        %v745 = vpop.f32.mrb[0].mxu0
        %v746 = vadd.f32 0.0, %v745
        %v747 = vpop.f32.mrb[0].mxu0
        %748 = vmatprep.mubr.bf16.mxu0 0
        %749 = vmatmul.mubr.bf16.gmra.mrb[0].mxu0 %v687
        %v750 = vpop.f32.mrb[0].mxu0
        %v751 = vadd.f32 0.0, %v750
        %v752 = vpop.f32.mrb[0].mxu0
        %v753 = vpop.f32.mrb[0].mxu0
        %v754 = vadd.f32 0.0, %v753
        %v755 = vpop.f32.mrb[0].mxu0
        %756 = vdwg.mxu0
        %v757 = vadd.f32 %v663, %v727
        %v758 = vadd.f32 %v664, %v730
        %v759 = vadd.f32 %v665, %v735
        %v760 = vadd.f32 %v666, %v738
        %v761 = vadd.f32 %v667, %v743
        %v762 = vadd.f32 %v668, %v746
        %v763 = vadd.f32 %v669, %v751
        %v764 = vadd.f32 %v670, %v754
        %v767 = vrot.slane %v312, 1
        %v768 = vrot.slane %v321, 1
        %v769 = vsel %vm343, %v767, %v768
        %v771 = vpack.c.bf16 %v352, %v349
        %v772 = vpack.c.bf16 %v358, %v355
        %v773 = vpack.c.bf16 %v364, %v361
        %v774 = vpack.c.bf16 %v769, %v367
        %s775 = scalar_lea.vmem %s2, 8
        %v776 = vld [vmem:[%s775] sm:$0x3]
        %v778 = vsel %vm382, %v771, 0
        %v781 = vsel %vm382, %v772, 0
        %v784 = vsel %vm382, %v773, 0
        %v787 = vsel %vm382, %v774, 0
        %v790 = vsel %vm395, %v776, 0
        %792 = vmatprep.subr.bf16.mxu0 0
        %793 = vmatpush1.bf16.msra.mxu0 %v790
        %794 = vmatprep.subr.bf16.mxu0 0
        %795 = vmatpush1.bf16.msra.mxu0 0
        %796 = vmatprep.subr.bf16.mxu0 0
        %797 = vmatpush1.bf16.msra.mxu0 0
        %798 = vmatprep.subr.bf16.mxu0 0
        %799 = vmatpush1.bf16.msra.mxu0 0
        %800 = vmatprep.subr.bf16.mxu0 0
        %801 = vmatpush1.bf16.msra.mxu0 0
        %802 = vmatprep.subr.bf16.mxu0 0
        %803 = vmatpush1.bf16.msra.mxu0 0
        %804 = vmatprep.subr.bf16.mxu0 0
        %805 = vmatpush1.bf16.msra.mxu0 0
        %806 = vmatprep.subr.bf16.mxu0 0
        %807 = vmatpush1.bf16.msra.mxu0 0
        %808 = vmatprep.subr.bf16.mxu0 0
        %809 = vmatpush1.bf16.msra.mxu0 0
        %810 = vmatprep.subr.bf16.mxu0 0
        %811 = vmatpush1.bf16.msra.mxu0 0
        %812 = vmatprep.subr.bf16.mxu0 0
        %813 = vmatpush1.bf16.msra.mxu0 0
        %814 = vmatprep.subr.bf16.mxu0 0
        %815 = vmatpush1.bf16.msra.mxu0 0
        %816 = vmatprep.subr.bf16.mxu0 0
        %817 = vmatpush1.bf16.msra.mxu0 0
        %818 = vmatprep.subr.bf16.mxu0 0
        %819 = vmatpush1.bf16.msra.mxu0 0
        %820 = vmatprep.subr.bf16.mxu0 0
        %821 = vmatpush1.bf16.msra.mxu0 0
        %822 = vmatprep.subr.bf16.mxu0 0
        %823 = vmatpush1.bf16.msra.mxu0 0
        %824 = vmatprep.mubr.bf16.mxu0 0
        %825 = vmatmul.mubr.bf16.gmra.mrb[0].mxu0 %v778
        %v826 = vpop.f32.mrb[0].mxu0
        %v827 = vadd.f32 0.0, %v826
        %v828 = vpop.f32.mrb[0].mxu0
        %v829 = vpop.f32.mrb[0].mxu0
        %v830 = vadd.f32 0.0, %v829
        %v831 = vpop.f32.mrb[0].mxu0
        %832 = vmatprep.mubr.bf16.mxu0 0
        %833 = vmatmul.mubr.bf16.gmra.mrb[0].mxu0 %v781
        %v834 = vpop.f32.mrb[0].mxu0
        %v835 = vadd.f32 0.0, %v834
        %v836 = vpop.f32.mrb[0].mxu0
        %v837 = vpop.f32.mrb[0].mxu0
        %v838 = vadd.f32 0.0, %v837
        %v839 = vpop.f32.mrb[0].mxu0
        %840 = vmatprep.mubr.bf16.mxu0 0
        %841 = vmatmul.mubr.bf16.gmra.mrb[0].mxu0 %v784
        %v842 = vpop.f32.mrb[0].mxu0
        %v843 = vadd.f32 0.0, %v842
        %v844 = vpop.f32.mrb[0].mxu0
        %v845 = vpop.f32.mrb[0].mxu0
        %v846 = vadd.f32 0.0, %v845
        %v847 = vpop.f32.mrb[0].mxu0
        %848 = vmatprep.mubr.bf16.mxu0 0
        %849 = vmatmul.mubr.bf16.gmra.mrb[0].mxu0 %v787
        %v850 = vpop.f32.mrb[0].mxu0
        %v851 = vadd.f32 0.0, %v850
        %v852 = vpop.f32.mrb[0].mxu0
        %v853 = vpop.f32.mrb[0].mxu0
        %v854 = vadd.f32 0.0, %v853
        %v855 = vpop.f32.mrb[0].mxu0
        %856 = vdwg.mxu0
        %v857 = vadd.f32 %v757, %v827
        %v858 = vadd.f32 %v758, %v830
        %v859 = vadd.f32 %v759, %v835
        %v860 = vadd.f32 %v760, %v838
        %v861 = vadd.f32 %v761, %v843
        %v862 = vadd.f32 %v762, %v846
        %v863 = vadd.f32 %v763, %v851
        %v864 = vadd.f32 %v764, %v854
        %v865 = vrot.slane %v312, 2
        %v866 = vrot.slane %v321, 2
        %v867 = vsel %vm544, %v865, %v866
        %v869 = vpack.c.bf16 %v553, %v550
        %v870 = vpack.c.bf16 %v559, %v556
        %v871 = vpack.c.bf16 %v565, %v562
        %v872 = vpack.c.bf16 %v867, %v568
        %s873 = scalar_lea.vmem %s2, 10
        %v874 = vld [vmem:[%s873] sm:$0x3]
        %v876 = vsel %vm382, %v869, 0
        %v879 = vsel %vm382, %v870, 0
        %v882 = vsel %vm382, %v871, 0
        %v885 = vsel %vm382, %v872, 0
        %v888 = vsel %vm395, %v874, 0
        %890 = vmatprep.subr.bf16.mxu0 0
        %891 = vmatpush1.bf16.msra.mxu0 %v888
        %892 = vmatprep.subr.bf16.mxu0 0
        %893 = vmatpush1.bf16.msra.mxu0 0
        %894 = vmatprep.subr.bf16.mxu0 0
        %895 = vmatpush1.bf16.msra.mxu0 0
        %896 = vmatprep.subr.bf16.mxu0 0
        %897 = vmatpush1.bf16.msra.mxu0 0
        %898 = vmatprep.subr.bf16.mxu0 0
        %899 = vmatpush1.bf16.msra.mxu0 0
        %900 = vmatprep.subr.bf16.mxu0 0
        %901 = vmatpush1.bf16.msra.mxu0 0
        %902 = vmatprep.subr.bf16.mxu0 0
        %903 = vmatpush1.bf16.msra.mxu0 0
        %904 = vmatprep.subr.bf16.mxu0 0
        %905 = vmatpush1.bf16.msra.mxu0 0
        %906 = vmatprep.subr.bf16.mxu0 0
        %907 = vmatpush1.bf16.msra.mxu0 0
        %908 = vmatprep.subr.bf16.mxu0 0
        %909 = vmatpush1.bf16.msra.mxu0 0
        %910 = vmatprep.subr.bf16.mxu0 0
        %911 = vmatpush1.bf16.msra.mxu0 0
        %912 = vmatprep.subr.bf16.mxu0 0
        %913 = vmatpush1.bf16.msra.mxu0 0
        %914 = vmatprep.subr.bf16.mxu0 0
        %915 = vmatpush1.bf16.msra.mxu0 0
        %916 = vmatprep.subr.bf16.mxu0 0
        %917 = vmatpush1.bf16.msra.mxu0 0
        %918 = vmatprep.subr.bf16.mxu0 0
        %919 = vmatpush1.bf16.msra.mxu0 0
        %920 = vmatprep.subr.bf16.mxu0 0
        %921 = vmatpush1.bf16.msra.mxu0 0
        %922 = vmatprep.mubr.bf16.mxu0 0
        %923 = vmatmul.mubr.bf16.gmra.mrb[0].mxu0 %v876
        %v924 = vpop.f32.mrb[0].mxu0
        %v925 = vadd.f32 0.0, %v924
        %v926 = vpop.f32.mrb[0].mxu0
        %v927 = vpop.f32.mrb[0].mxu0
        %v928 = vadd.f32 0.0, %v927
        %v929 = vpop.f32.mrb[0].mxu0
        %930 = vmatprep.mubr.bf16.mxu0 0
        %931 = vmatmul.mubr.bf16.gmra.mrb[0].mxu0 %v879
        %v932 = vpop.f32.mrb[0].mxu0
        %v933 = vadd.f32 0.0, %v932
        %v934 = vpop.f32.mrb[0].mxu0
        %v935 = vpop.f32.mrb[0].mxu0
        %v936 = vadd.f32 0.0, %v935
        %v937 = vpop.f32.mrb[0].mxu0
        %938 = vmatprep.mubr.bf16.mxu0 0
        %939 = vmatmul.mubr.bf16.gmra.mrb[0].mxu0 %v882
        %v940 = vpop.f32.mrb[0].mxu0
        %v941 = vadd.f32 0.0, %v940
        %v942 = vpop.f32.mrb[0].mxu0
        %v943 = vpop.f32.mrb[0].mxu0
        %v944 = vadd.f32 0.0, %v943
        %v945 = vpop.f32.mrb[0].mxu0
        %946 = vmatprep.mubr.bf16.mxu0 0
        %947 = vmatmul.mubr.bf16.gmra.mrb[0].mxu0 %v885
        %v948 = vpop.f32.mrb[0].mxu0
        %v949 = vadd.f32 0.0, %v948
        %v950 = vpop.f32.mrb[0].mxu0
        %v951 = vpop.f32.mrb[0].mxu0
        %v952 = vadd.f32 0.0, %v951
        %v953 = vpop.f32.mrb[0].mxu0
        %954 = vdwg.mxu0
        %v955 = vadd.f32 %v857, %v925
        %v956 = vadd.f32 %v858, %v928
        %v957 = vadd.f32 %v859, %v933
        %v958 = vadd.f32 %v860, %v936
        %v959 = vadd.f32 %v861, %v941
        %v960 = vadd.f32 %v862, %v944
        %v961 = vadd.f32 %v863, %v949
        %v962 = vadd.f32 %v864, %v952
        %v963 = vpack.c.bf16 %v304, %v312
        %s964 = scalar_lea.vmem %s2, 12
        %v965 = vld [vmem:[%s964] sm:$0x3]
        %v967 = vsel %vm382, %v963, 0
        %v970 = vsel %vm395, %v965, 0
        %972 = vmatprep.subr.bf16.mxu0 0
        %973 = vmatpush1.bf16.msra.mxu0 %v970
        %974 = vmatprep.subr.bf16.mxu0 0
        %975 = vmatpush1.bf16.msra.mxu0 0
        %976 = vmatprep.subr.bf16.mxu0 0
        %977 = vmatpush1.bf16.msra.mxu0 0
        %978 = vmatprep.subr.bf16.mxu0 0
        %979 = vmatpush1.bf16.msra.mxu0 0
        %980 = vmatprep.subr.bf16.mxu0 0
        %981 = vmatpush1.bf16.msra.mxu0 0
        %982 = vmatprep.subr.bf16.mxu0 0
        %983 = vmatpush1.bf16.msra.mxu0 0
        %984 = vmatprep.subr.bf16.mxu0 0
        %985 = vmatpush1.bf16.msra.mxu0 0
        %986 = vmatprep.subr.bf16.mxu0 0
        %987 = vmatpush1.bf16.msra.mxu0 0
        %988 = vmatprep.subr.bf16.mxu0 0
        %989 = vmatpush1.bf16.msra.mxu0 0
        %990 = vmatprep.subr.bf16.mxu0 0
        %991 = vmatpush1.bf16.msra.mxu0 0
        %992 = vmatprep.subr.bf16.mxu0 0
        %993 = vmatpush1.bf16.msra.mxu0 0
        %994 = vmatprep.subr.bf16.mxu0 0
        %995 = vmatpush1.bf16.msra.mxu0 0
        %996 = vmatprep.subr.bf16.mxu0 0
        %997 = vmatpush1.bf16.msra.mxu0 0
        %998 = vmatprep.subr.bf16.mxu0 0
        %999 = vmatpush1.bf16.msra.mxu0 0
        %1000 = vmatprep.subr.bf16.mxu0 0
        %1001 = vmatpush1.bf16.msra.mxu0 0
        %1002 = vmatprep.subr.bf16.mxu0 0
        %1003 = vmatpush1.bf16.msra.mxu0 0
        %1004 = vmatprep.mubr.bf16.mxu0 0
        %1005 = vmatmul.mubr.bf16.gmra.mrb[0].mxu0 %v468
        %v1006 = vpop.f32.mrb[0].mxu0
        %v1007 = vadd.f32 0.0, %v1006
        %v1008 = vpop.f32.mrb[0].mxu0
        %v1009 = vpop.f32.mrb[0].mxu0
        %v1010 = vadd.f32 0.0, %v1009
        %v1011 = vpop.f32.mrb[0].mxu0
        %1012 = vmatprep.mubr.bf16.mxu0 0
        %1013 = vmatmul.mubr.bf16.gmra.mrb[0].mxu0 %v471
        %v1014 = vpop.f32.mrb[0].mxu0
        %v1015 = vadd.f32 0.0, %v1014
        %v1016 = vpop.f32.mrb[0].mxu0
        %v1017 = vpop.f32.mrb[0].mxu0
        %v1018 = vadd.f32 0.0, %v1017
        %v1019 = vpop.f32.mrb[0].mxu0
        %1020 = vmatprep.mubr.bf16.mxu0 0
        %1021 = vmatmul.mubr.bf16.gmra.mrb[0].mxu0 %v474
        %v1022 = vpop.f32.mrb[0].mxu0
        %v1023 = vadd.f32 0.0, %v1022
        %v1024 = vpop.f32.mrb[0].mxu0
        %v1025 = vpop.f32.mrb[0].mxu0
        %v1026 = vadd.f32 0.0, %v1025
        %v1027 = vpop.f32.mrb[0].mxu0
        %1028 = vmatprep.mubr.bf16.mxu0 0
        %1029 = vmatmul.mubr.bf16.gmra.mrb[0].mxu0 %v967
        %v1030 = vpop.f32.mrb[0].mxu0
        %v1031 = vadd.f32 0.0, %v1030
        %v1032 = vpop.f32.mrb[0].mxu0
        %v1033 = vpop.f32.mrb[0].mxu0
        %v1034 = vadd.f32 0.0, %v1033
        %v1035 = vpop.f32.mrb[0].mxu0
        %1036 = vdwg.mxu0
        %v1037 = vadd.f32 %v955, %v1007
        %v1038 = vadd.f32 %v956, %v1010
        %v1039 = vadd.f32 %v957, %v1015
        %v1040 = vadd.f32 %v958, %v1018
        %v1041 = vadd.f32 %v959, %v1023
        %v1042 = vadd.f32 %v960, %v1026
        %v1043 = vadd.f32 %v961, %v1031
        %v1044 = vadd.f32 %v962, %v1034
        %v1045 = vpack.c.bf16 %v346, %v769
        %s1046 = scalar_lea.vmem %s2, 14
        %v1047 = vld [vmem:[%s1046] sm:$0x3]
        %v1049 = vsel %vm382, %v1045, 0
        %v1052 = vsel %vm395, %v1047, 0
        %1054 = vmatprep.subr.bf16.mxu0 0
        %1055 = vmatpush1.bf16.msra.mxu0 %v1052
        %1056 = vmatprep.subr.bf16.mxu0 0
        %1057 = vmatpush1.bf16.msra.mxu0 0
        %1058 = vmatprep.subr.bf16.mxu0 0
        %1059 = vmatpush1.bf16.msra.mxu0 0
        %1060 = vmatprep.subr.bf16.mxu0 0
        %1061 = vmatpush1.bf16.msra.mxu0 0
        %1062 = vmatprep.subr.bf16.mxu0 0
        %1063 = vmatpush1.bf16.msra.mxu0 0
        %1064 = vmatprep.subr.bf16.mxu0 0
        %1065 = vmatpush1.bf16.msra.mxu0 0
        %1066 = vmatprep.subr.bf16.mxu0 0
        %1067 = vmatpush1.bf16.msra.mxu0 0
        %1068 = vmatprep.subr.bf16.mxu0 0
        %1069 = vmatpush1.bf16.msra.mxu0 0
        %1070 = vmatprep.subr.bf16.mxu0 0
        %1071 = vmatpush1.bf16.msra.mxu0 0
        %1072 = vmatprep.subr.bf16.mxu0 0
        %1073 = vmatpush1.bf16.msra.mxu0 0
        %1074 = vmatprep.subr.bf16.mxu0 0
        %1075 = vmatpush1.bf16.msra.mxu0 0
        %1076 = vmatprep.subr.bf16.mxu0 0
        %1077 = vmatpush1.bf16.msra.mxu0 0
        %1078 = vmatprep.subr.bf16.mxu0 0
        %1079 = vmatpush1.bf16.msra.mxu0 0
        %1080 = vmatprep.subr.bf16.mxu0 0
        %1081 = vmatpush1.bf16.msra.mxu0 0
        %1082 = vmatprep.subr.bf16.mxu0 0
        %1083 = vmatpush1.bf16.msra.mxu0 0
        %1084 = vmatprep.subr.bf16.mxu0 0
        %1085 = vmatpush1.bf16.msra.mxu0 0
        %1086 = vmatprep.mubr.bf16.mxu0 0
        %1087 = vmatmul.mubr.bf16.gmra.mrb[0].mxu0 %v387
        %v1088 = vpop.f32.mrb[0].mxu0
        %v1089 = vadd.f32 0.0, %v1088
        %v1090 = vpop.f32.mrb[0].mxu0
        %v1091 = vpop.f32.mrb[0].mxu0
        %v1092 = vadd.f32 0.0, %v1091
        %v1093 = vpop.f32.mrb[0].mxu0
        %1094 = vmatprep.mubr.bf16.mxu0 0
        %1095 = vmatmul.mubr.bf16.gmra.mrb[0].mxu0 %v390
        %v1096 = vpop.f32.mrb[0].mxu0
        %v1097 = vadd.f32 0.0, %v1096
        %v1098 = vpop.f32.mrb[0].mxu0
        %v1099 = vpop.f32.mrb[0].mxu0
        %v1100 = vadd.f32 0.0, %v1099
        %v1101 = vpop.f32.mrb[0].mxu0
        %1102 = vmatprep.mubr.bf16.mxu0 0
        %1103 = vmatmul.mubr.bf16.gmra.mrb[0].mxu0 %v393
        %v1104 = vpop.f32.mrb[0].mxu0
        %v1105 = vadd.f32 0.0, %v1104
        %v1106 = vpop.f32.mrb[0].mxu0
        %v1107 = vpop.f32.mrb[0].mxu0
        %v1108 = vadd.f32 0.0, %v1107
        %v1109 = vpop.f32.mrb[0].mxu0
        %1110 = vmatprep.mubr.bf16.mxu0 0
        %1111 = vmatmul.mubr.bf16.gmra.mrb[0].mxu0 %v1049
        %v1112 = vpop.f32.mrb[0].mxu0
        %v1113 = vadd.f32 0.0, %v1112
        %v1114 = vpop.f32.mrb[0].mxu0
        %v1115 = vpop.f32.mrb[0].mxu0
        %v1116 = vadd.f32 0.0, %v1115
        %v1117 = vpop.f32.mrb[0].mxu0
        %1118 = vdwg.mxu0
        %v1119 = vadd.f32 %v1037, %v1089
        %v1120 = vadd.f32 %v1038, %v1092
        %v1121 = vadd.f32 %v1039, %v1097
        %v1122 = vadd.f32 %v1040, %v1100
        %v1123 = vadd.f32 %v1041, %v1105
        %v1124 = vadd.f32 %v1042, %v1108
        %v1125 = vadd.f32 %v1043, %v1113
        %v1126 = vadd.f32 %v1044, %v1116
        %v1127 = vpack.c.bf16 %v547, %v867
        %s1128 = scalar_lea.vmem %s2, 16
        %v1129 = vld [vmem:[%s1128] sm:$0x3]
        %v1131 = vsel %vm382, %v1127, 0
        %v1134 = vsel %vm395, %v1129, 0
        %1136 = vmatprep.subr.bf16.mxu0 0
        %1137 = vmatpush1.bf16.msra.mxu0 %v1134
        %1138 = vmatprep.subr.bf16.mxu0 0
        %1139 = vmatpush1.bf16.msra.mxu0 0
        %1140 = vmatprep.subr.bf16.mxu0 0
        %1141 = vmatpush1.bf16.msra.mxu0 0
        %1142 = vmatprep.subr.bf16.mxu0 0
        %1143 = vmatpush1.bf16.msra.mxu0 0
        %1144 = vmatprep.subr.bf16.mxu0 0
        %1145 = vmatpush1.bf16.msra.mxu0 0
        %1146 = vmatprep.subr.bf16.mxu0 0
        %1147 = vmatpush1.bf16.msra.mxu0 0
        %1148 = vmatprep.subr.bf16.mxu0 0
        %1149 = vmatpush1.bf16.msra.mxu0 0
        %1150 = vmatprep.subr.bf16.mxu0 0
        %1151 = vmatpush1.bf16.msra.mxu0 0
        %1152 = vmatprep.subr.bf16.mxu0 0
        %1153 = vmatpush1.bf16.msra.mxu0 0
        %1154 = vmatprep.subr.bf16.mxu0 0
        %1155 = vmatpush1.bf16.msra.mxu0 0
        %1156 = vmatprep.subr.bf16.mxu0 0
        %1157 = vmatpush1.bf16.msra.mxu0 0
        %1158 = vmatprep.subr.bf16.mxu0 0
        %1159 = vmatpush1.bf16.msra.mxu0 0
        %1160 = vmatprep.subr.bf16.mxu0 0
        %1161 = vmatpush1.bf16.msra.mxu0 0
        %1162 = vmatprep.subr.bf16.mxu0 0
        %1163 = vmatpush1.bf16.msra.mxu0 0
        %1164 = vmatprep.subr.bf16.mxu0 0
        %1165 = vmatpush1.bf16.msra.mxu0 0
        %1166 = vmatprep.subr.bf16.mxu0 0
        %1167 = vmatpush1.bf16.msra.mxu0 0
        %1168 = vmatprep.mubr.bf16.mxu0 0
        %1169 = vmatmul.mubr.bf16.gmra.mrb[0].mxu0 %v587
        %v1170 = vpop.f32.mrb[0].mxu0
        %v1171 = vadd.f32 0.0, %v1170
        %v1172 = vpop.f32.mrb[0].mxu0
        %v1173 = vpop.f32.mrb[0].mxu0
        %v1174 = vadd.f32 0.0, %v1173
        %v1175 = vpop.f32.mrb[0].mxu0
        %1176 = vmatprep.mubr.bf16.mxu0 0
        %1177 = vmatmul.mubr.bf16.gmra.mrb[0].mxu0 %v590
        %v1178 = vpop.f32.mrb[0].mxu0
        %v1179 = vadd.f32 0.0, %v1178
        %v1180 = vpop.f32.mrb[0].mxu0
        %v1181 = vpop.f32.mrb[0].mxu0
        %v1182 = vadd.f32 0.0, %v1181
        %v1183 = vpop.f32.mrb[0].mxu0
        %1184 = vmatprep.mubr.bf16.mxu0 0
        %1185 = vmatmul.mubr.bf16.gmra.mrb[0].mxu0 %v593
        %v1186 = vpop.f32.mrb[0].mxu0
        %v1187 = vadd.f32 0.0, %v1186
        %v1188 = vpop.f32.mrb[0].mxu0
        %v1189 = vpop.f32.mrb[0].mxu0
        %v1190 = vadd.f32 0.0, %v1189
        %v1191 = vpop.f32.mrb[0].mxu0
        %1192 = vmatprep.mubr.bf16.mxu0 0
        %1193 = vmatmul.mubr.bf16.gmra.mrb[0].mxu0 %v1131
        %v1194 = vpop.f32.mrb[0].mxu0
        %v1195 = vadd.f32 0.0, %v1194
        %v1196 = vpop.f32.mrb[0].mxu0
        %v1197 = vpop.f32.mrb[0].mxu0
        %v1198 = vadd.f32 0.0, %v1197
        %v1199 = vpop.f32.mrb[0].mxu0
        %1200 = vdwg.mxu0
        %v1201 = vadd.f32 %v1119, %v1171
        %v1202 = vadd.f32 %v1120, %v1174
        %v1203 = vadd.f32 %v1121, %v1179
        %v1204 = vadd.f32 %v1122, %v1182
        %v1205 = vadd.f32 %v1123, %v1187
        %v1206 = vadd.f32 %v1124, %v1190
        %v1207 = vadd.f32 %v1125, %v1195
        %v1208 = vadd.f32 %v1126, %v1198
        %v1217 = vrot.slane %v268, 7
        %v1218 = vrot.slane %v269, 7
        %v1219 = vrot.slane %v270, 7
        %v1220 = vrot.slane %v271, 7
        %v1221 = vrot.slane %v272, 7
        %v1222 = vrot.slane %v273, 7
        %v1223 = vrot.slane %v274, 7
        %v1224 = vrot.slane %v275, 7
        %v1233 = vsel %vm303, 0.0, %v1217
        %v1234 = vsel %vm303, 0.0, %v1218
        %v1235 = vsel %vm303, 0.0, %v1219
        %v1236 = vsel %vm303, 0.0, %v1220
        %v1237 = vsel %vm303, 0.0, %v1221
        %v1238 = vsel %vm303, 0.0, %v1222
        %v1239 = vsel %vm303, 0.0, %v1223
        %v1240 = vsel %vm303, 0.0, %v1224
        %v1241 = vsel %vm303, %v1217, 0.0
        %v1242 = vsel %vm303, %v1218, 0.0
        %v1243 = vsel %vm303, %v1219, 0.0
        %v1244 = vsel %vm303, %v1220, 0.0
        %v1245 = vsel %vm303, %v1221, 0.0
        %v1246 = vsel %vm303, %v1222, 0.0
        %v1247 = vsel %vm303, %v1223, 0.0
        %v1248 = vsel %vm303, %v1224, 0.0
        %v1249 = vpack.c.bf16 %v1233, %v304
        %v1250 = vpack.c.bf16 %v1235, %v1234
        %v1251 = vpack.c.bf16 %v1237, %v1236
        %v1252 = vpack.c.bf16 %v1239, %v1238
        %v1253 = vld [vmem:[%s3] sm:$0x3]
        %v1268 = vrot.slane %v1233, 1
        %v1269 = vrot.slane %v1241, 1
        %v1270 = vsel %vm343, %v1268, %v1269
        %v1271 = vrot.slane %v1234, 1
        %v1272 = vrot.slane %v1242, 1
        %v1273 = vsel %vm343, %v1271, %v1272
        %v1274 = vrot.slane %v1235, 1
        %v1275 = vrot.slane %v1243, 1
        %v1276 = vsel %vm343, %v1274, %v1275
        %v1277 = vrot.slane %v1236, 1
        %v1278 = vrot.slane %v1244, 1
        %v1279 = vsel %vm343, %v1277, %v1278
        %v1280 = vrot.slane %v1237, 1
        %v1281 = vrot.slane %v1245, 1
        %v1282 = vsel %vm343, %v1280, %v1281
        %v1283 = vrot.slane %v1238, 1
        %v1284 = vrot.slane %v1246, 1
        %v1285 = vsel %vm343, %v1283, %v1284
        %v1286 = vrot.slane %v1239, 1
        %v1287 = vrot.slane %v1247, 1
        %v1288 = vsel %vm343, %v1286, %v1287
        %v1296 = vpack.c.bf16 %v1270, %v346
        %v1297 = vpack.c.bf16 %v1276, %v1273
        %v1298 = vpack.c.bf16 %v1282, %v1279
        %v1299 = vpack.c.bf16 %v1288, %v1285
        %s1300 = scalar_lea.vmem %s3, 2
        %v1301 = vld [vmem:[%s1300] sm:$0x3]
        %v1303 = vsel %vm382, %v1296, 0
        %v1306 = vsel %vm382, %v1297, 0
        %v1309 = vsel %vm382, %v1298, 0
        %v1312 = vsel %vm382, %v1299, 0
        %v1315 = vsel %vm395, %v1301, 0
        %1317 = vmatprep.subr.bf16.mxu0 0
        %1318 = vmatpush1.bf16.msra.mxu0 %v1315
        %1319 = vmatprep.subr.bf16.mxu0 0
        %1320 = vmatpush1.bf16.msra.mxu0 0
        %1321 = vmatprep.subr.bf16.mxu0 0
        %1322 = vmatpush1.bf16.msra.mxu0 0
        %1323 = vmatprep.subr.bf16.mxu0 0
        %1324 = vmatpush1.bf16.msra.mxu0 0
        %1325 = vmatprep.subr.bf16.mxu0 0
        %1326 = vmatpush1.bf16.msra.mxu0 0
        %1327 = vmatprep.subr.bf16.mxu0 0
        %1328 = vmatpush1.bf16.msra.mxu0 0
        %1329 = vmatprep.subr.bf16.mxu0 0
        %1330 = vmatpush1.bf16.msra.mxu0 0
        %1331 = vmatprep.subr.bf16.mxu0 0
        %1332 = vmatpush1.bf16.msra.mxu0 0
        %1333 = vmatprep.subr.bf16.mxu0 0
        %1334 = vmatpush1.bf16.msra.mxu0 0
        %1335 = vmatprep.subr.bf16.mxu0 0
        %1336 = vmatpush1.bf16.msra.mxu0 0
        %1337 = vmatprep.subr.bf16.mxu0 0
        %1338 = vmatpush1.bf16.msra.mxu0 0
        %1339 = vmatprep.subr.bf16.mxu0 0
        %1340 = vmatpush1.bf16.msra.mxu0 0
        %1341 = vmatprep.subr.bf16.mxu0 0
        %1342 = vmatpush1.bf16.msra.mxu0 0
        %1343 = vmatprep.subr.bf16.mxu0 0
        %1344 = vmatpush1.bf16.msra.mxu0 0
        %1345 = vmatprep.subr.bf16.mxu0 0
        %1346 = vmatpush1.bf16.msra.mxu0 0
        %1347 = vmatprep.subr.bf16.mxu0 0
        %1348 = vmatpush1.bf16.msra.mxu0 0
        %1349 = vmatprep.mubr.bf16.mxu0 0
        %1350 = vmatmul.mubr.bf16.gmra.mrb[0].mxu0 %v1303
        %v1351 = vpop.f32.mrb[0].mxu0
        %v1352 = vadd.f32 0.0, %v1351
        %v1353 = vpop.f32.mrb[0].mxu0
        %v1354 = vpop.f32.mrb[0].mxu0
        %v1355 = vadd.f32 0.0, %v1354
        %v1356 = vpop.f32.mrb[0].mxu0
        %1357 = vmatprep.mubr.bf16.mxu0 0
        %1358 = vmatmul.mubr.bf16.gmra.mrb[0].mxu0 %v1306
        %v1359 = vpop.f32.mrb[0].mxu0
        %v1360 = vadd.f32 0.0, %v1359
        %v1361 = vpop.f32.mrb[0].mxu0
        %v1362 = vpop.f32.mrb[0].mxu0
        %v1363 = vadd.f32 0.0, %v1362
        %v1364 = vpop.f32.mrb[0].mxu0
        %1365 = vmatprep.mubr.bf16.mxu0 0
        %1366 = vmatmul.mubr.bf16.gmra.mrb[0].mxu0 %v1309
        %v1367 = vpop.f32.mrb[0].mxu0
        %v1368 = vadd.f32 0.0, %v1367
        %v1369 = vpop.f32.mrb[0].mxu0
        %v1370 = vpop.f32.mrb[0].mxu0
        %v1371 = vadd.f32 0.0, %v1370
        %v1372 = vpop.f32.mrb[0].mxu0
        %1373 = vmatprep.mubr.bf16.mxu0 0
        %1374 = vmatmul.mubr.bf16.gmra.mrb[0].mxu0 %v1312
        %v1375 = vpop.f32.mrb[0].mxu0
        %v1376 = vadd.f32 0.0, %v1375
        %v1377 = vpop.f32.mrb[0].mxu0
        %v1378 = vpop.f32.mrb[0].mxu0
        %v1379 = vadd.f32 0.0, %v1378
        %v1380 = vpop.f32.mrb[0].mxu0
        %1381 = vdwg.mxu0
        %v1383 = vsel %vm382, %v1249, 0
        %v1386 = vsel %vm382, %v1250, 0
        %v1389 = vsel %vm382, %v1251, 0
        %v1392 = vsel %vm382, %v1252, 0
        %v1395 = vsel %vm395, %v1253, 0
        %1397 = vmatprep.subr.bf16.mxu0 0
        %1398 = vmatpush1.bf16.msra.mxu0 %v1395
        %1399 = vmatprep.subr.bf16.mxu0 0
        %1400 = vmatpush1.bf16.msra.mxu0 0
        %1401 = vmatprep.subr.bf16.mxu0 0
        %1402 = vmatpush1.bf16.msra.mxu0 0
        %1403 = vmatprep.subr.bf16.mxu0 0
        %1404 = vmatpush1.bf16.msra.mxu0 0
        %1405 = vmatprep.subr.bf16.mxu0 0
        %1406 = vmatpush1.bf16.msra.mxu0 0
        %1407 = vmatprep.subr.bf16.mxu0 0
        %1408 = vmatpush1.bf16.msra.mxu0 0
        %1409 = vmatprep.subr.bf16.mxu0 0
        %1410 = vmatpush1.bf16.msra.mxu0 0
        %1411 = vmatprep.subr.bf16.mxu0 0
        %1412 = vmatpush1.bf16.msra.mxu0 0
        %1413 = vmatprep.subr.bf16.mxu0 0
        %1414 = vmatpush1.bf16.msra.mxu0 0
        %1415 = vmatprep.subr.bf16.mxu0 0
        %1416 = vmatpush1.bf16.msra.mxu0 0
        %1417 = vmatprep.subr.bf16.mxu0 0
        %1418 = vmatpush1.bf16.msra.mxu0 0
        %1419 = vmatprep.subr.bf16.mxu0 0
        %1420 = vmatpush1.bf16.msra.mxu0 0
        %1421 = vmatprep.subr.bf16.mxu0 0
        %1422 = vmatpush1.bf16.msra.mxu0 0
        %1423 = vmatprep.subr.bf16.mxu0 0
        %1424 = vmatpush1.bf16.msra.mxu0 0
        %1425 = vmatprep.subr.bf16.mxu0 0
        %1426 = vmatpush1.bf16.msra.mxu0 0
        %1427 = vmatprep.subr.bf16.mxu0 0
        %1428 = vmatpush1.bf16.msra.mxu0 0
        %1429 = vmatprep.mubr.bf16.mxu0 0
        %1430 = vmatmul.mubr.bf16.gmra.mrb[0].mxu0 %v1383
        %v1431 = vpop.f32.mrb[0].mxu0
        %v1432 = vadd.f32 %v1352, %v1431
        %v1433 = vpop.f32.mrb[0].mxu0
        %v1434 = vpop.f32.mrb[0].mxu0
        %v1435 = vadd.f32 %v1355, %v1434
        %v1436 = vpop.f32.mrb[0].mxu0
        %1437 = vmatprep.mubr.bf16.mxu0 0
        %1438 = vmatmul.mubr.bf16.gmra.mrb[0].mxu0 %v1386
        %v1439 = vpop.f32.mrb[0].mxu0
        %v1440 = vadd.f32 %v1360, %v1439
        %v1441 = vpop.f32.mrb[0].mxu0
        %v1442 = vpop.f32.mrb[0].mxu0
        %v1443 = vadd.f32 %v1363, %v1442
        %v1444 = vpop.f32.mrb[0].mxu0
        %1445 = vmatprep.mubr.bf16.mxu0 0
        %1446 = vmatmul.mubr.bf16.gmra.mrb[0].mxu0 %v1389
        %v1447 = vpop.f32.mrb[0].mxu0
        %v1448 = vadd.f32 %v1368, %v1447
        %v1449 = vpop.f32.mrb[0].mxu0
        %v1450 = vpop.f32.mrb[0].mxu0
        %v1451 = vadd.f32 %v1371, %v1450
        %v1452 = vpop.f32.mrb[0].mxu0
        %1453 = vmatprep.mubr.bf16.mxu0 0
        %1454 = vmatmul.mubr.bf16.gmra.mrb[0].mxu0 %v1392
        %v1455 = vpop.f32.mrb[0].mxu0
        %v1456 = vadd.f32 %v1376, %v1455
        %v1457 = vpop.f32.mrb[0].mxu0
        %v1458 = vpop.f32.mrb[0].mxu0
        %v1459 = vadd.f32 %v1379, %v1458
        %v1460 = vpop.f32.mrb[0].mxu0
        %1461 = vdwg.mxu0
        %v1462 = vrot.slane %v1233, 2
        %v1463 = vrot.slane %v1241, 2
        %v1464 = vsel %vm544, %v1462, %v1463
        %v1465 = vrot.slane %v1234, 2
        %v1466 = vrot.slane %v1242, 2
        %v1467 = vsel %vm544, %v1465, %v1466
        %v1468 = vrot.slane %v1235, 2
        %v1469 = vrot.slane %v1243, 2
        %v1470 = vsel %vm544, %v1468, %v1469
        %v1471 = vrot.slane %v1236, 2
        %v1472 = vrot.slane %v1244, 2
        %v1473 = vsel %vm544, %v1471, %v1472
        %v1474 = vrot.slane %v1237, 2
        %v1475 = vrot.slane %v1245, 2
        %v1476 = vsel %vm544, %v1474, %v1475
        %v1477 = vrot.slane %v1238, 2
        %v1478 = vrot.slane %v1246, 2
        %v1479 = vsel %vm544, %v1477, %v1478
        %v1480 = vrot.slane %v1239, 2
        %v1481 = vrot.slane %v1247, 2
        %v1482 = vsel %vm544, %v1480, %v1481
        %v1490 = vpack.c.bf16 %v1464, %v547
        %v1491 = vpack.c.bf16 %v1470, %v1467
        %v1492 = vpack.c.bf16 %v1476, %v1473
        %v1493 = vpack.c.bf16 %v1482, %v1479
        %s1494 = scalar_lea.vmem %s3, 4
        %v1495 = vld [vmem:[%s1494] sm:$0x3]
        %v1497 = vsel %vm382, %v1490, 0
        %v1500 = vsel %vm382, %v1491, 0
        %v1503 = vsel %vm382, %v1492, 0
        %v1506 = vsel %vm382, %v1493, 0
        %v1509 = vsel %vm395, %v1495, 0
        %1511 = vmatprep.subr.bf16.mxu0 0
        %1512 = vmatpush1.bf16.msra.mxu0 %v1509
        %1513 = vmatprep.subr.bf16.mxu0 0
        %1514 = vmatpush1.bf16.msra.mxu0 0
        %1515 = vmatprep.subr.bf16.mxu0 0
        %1516 = vmatpush1.bf16.msra.mxu0 0
        %1517 = vmatprep.subr.bf16.mxu0 0
        %1518 = vmatpush1.bf16.msra.mxu0 0
        %1519 = vmatprep.subr.bf16.mxu0 0
        %1520 = vmatpush1.bf16.msra.mxu0 0
        %1521 = vmatprep.subr.bf16.mxu0 0
        %1522 = vmatpush1.bf16.msra.mxu0 0
        %1523 = vmatprep.subr.bf16.mxu0 0
        %1524 = vmatpush1.bf16.msra.mxu0 0
        %1525 = vmatprep.subr.bf16.mxu0 0
        %1526 = vmatpush1.bf16.msra.mxu0 0
        %1527 = vmatprep.subr.bf16.mxu0 0
        %1528 = vmatpush1.bf16.msra.mxu0 0
        %1529 = vmatprep.subr.bf16.mxu0 0
        %1530 = vmatpush1.bf16.msra.mxu0 0
        %1531 = vmatprep.subr.bf16.mxu0 0
        %1532 = vmatpush1.bf16.msra.mxu0 0
        %1533 = vmatprep.subr.bf16.mxu0 0
        %1534 = vmatpush1.bf16.msra.mxu0 0
        %1535 = vmatprep.subr.bf16.mxu0 0
        %1536 = vmatpush1.bf16.msra.mxu0 0
        %1537 = vmatprep.subr.bf16.mxu0 0
        %1538 = vmatpush1.bf16.msra.mxu0 0
        %1539 = vmatprep.subr.bf16.mxu0 0
        %1540 = vmatpush1.bf16.msra.mxu0 0
        %1541 = vmatprep.subr.bf16.mxu0 0
        %1542 = vmatpush1.bf16.msra.mxu0 0
        %1543 = vmatprep.mubr.bf16.mxu0 0
        %1544 = vmatmul.mubr.bf16.gmra.mrb[0].mxu0 %v1497
        %v1545 = vpop.f32.mrb[0].mxu0
        %v1546 = vadd.f32 0.0, %v1545
        %v1547 = vpop.f32.mrb[0].mxu0
        %v1548 = vpop.f32.mrb[0].mxu0
        %v1549 = vadd.f32 0.0, %v1548
        %v1550 = vpop.f32.mrb[0].mxu0
        %1551 = vmatprep.mubr.bf16.mxu0 0
        %1552 = vmatmul.mubr.bf16.gmra.mrb[0].mxu0 %v1500
        %v1553 = vpop.f32.mrb[0].mxu0
        %v1554 = vadd.f32 0.0, %v1553
        %v1555 = vpop.f32.mrb[0].mxu0
        %v1556 = vpop.f32.mrb[0].mxu0
        %v1557 = vadd.f32 0.0, %v1556
        %v1558 = vpop.f32.mrb[0].mxu0
        %1559 = vmatprep.mubr.bf16.mxu0 0
        %1560 = vmatmul.mubr.bf16.gmra.mrb[0].mxu0 %v1503
        %v1561 = vpop.f32.mrb[0].mxu0
        %v1562 = vadd.f32 0.0, %v1561
        %v1563 = vpop.f32.mrb[0].mxu0
        %v1564 = vpop.f32.mrb[0].mxu0
        %v1565 = vadd.f32 0.0, %v1564
        %v1566 = vpop.f32.mrb[0].mxu0
        %1567 = vmatprep.mubr.bf16.mxu0 0
        %1568 = vmatmul.mubr.bf16.gmra.mrb[0].mxu0 %v1506
        %v1569 = vpop.f32.mrb[0].mxu0
        %v1570 = vadd.f32 0.0, %v1569
        %v1571 = vpop.f32.mrb[0].mxu0
        %v1572 = vpop.f32.mrb[0].mxu0
        %v1573 = vadd.f32 0.0, %v1572
        %v1574 = vpop.f32.mrb[0].mxu0
        %1575 = vdwg.mxu0
        %v1576 = vadd.f32 %v1432, %v1546
        %v1577 = vadd.f32 %v1435, %v1549
        %v1578 = vadd.f32 %v1440, %v1554
        %v1579 = vadd.f32 %v1443, %v1557
        %v1580 = vadd.f32 %v1448, %v1562
        %v1581 = vadd.f32 %v1451, %v1565
        %v1582 = vadd.f32 %v1456, %v1570
        %v1583 = vadd.f32 %v1459, %v1573
        %v1584 = vpack.c.bf16 %v1234, %v1233
        %v1585 = vpack.c.bf16 %v1236, %v1235
        %v1586 = vpack.c.bf16 %v1238, %v1237
        %v1587 = vpack.c.bf16 %v1240, %v1239
        %s1588 = scalar_lea.vmem %s3, 6
        %v1589 = vld [vmem:[%s1588] sm:$0x3]
        %v1591 = vsel %vm382, %v1584, 0
        %v1594 = vsel %vm382, %v1585, 0
        %v1597 = vsel %vm382, %v1586, 0
        %v1600 = vsel %vm382, %v1587, 0
        %v1603 = vsel %vm395, %v1589, 0
        %1605 = vmatprep.subr.bf16.mxu0 0
        %1606 = vmatpush1.bf16.msra.mxu0 %v1603
        %1607 = vmatprep.subr.bf16.mxu0 0
        %1608 = vmatpush1.bf16.msra.mxu0 0
        %1609 = vmatprep.subr.bf16.mxu0 0
        %1610 = vmatpush1.bf16.msra.mxu0 0
        %1611 = vmatprep.subr.bf16.mxu0 0
        %1612 = vmatpush1.bf16.msra.mxu0 0
        %1613 = vmatprep.subr.bf16.mxu0 0
        %1614 = vmatpush1.bf16.msra.mxu0 0
        %1615 = vmatprep.subr.bf16.mxu0 0
        %1616 = vmatpush1.bf16.msra.mxu0 0
        %1617 = vmatprep.subr.bf16.mxu0 0
        %1618 = vmatpush1.bf16.msra.mxu0 0
        %1619 = vmatprep.subr.bf16.mxu0 0
        %1620 = vmatpush1.bf16.msra.mxu0 0
        %1621 = vmatprep.subr.bf16.mxu0 0
        %1622 = vmatpush1.bf16.msra.mxu0 0
        %1623 = vmatprep.subr.bf16.mxu0 0
        %1624 = vmatpush1.bf16.msra.mxu0 0
        %1625 = vmatprep.subr.bf16.mxu0 0
        %1626 = vmatpush1.bf16.msra.mxu0 0
        %1627 = vmatprep.subr.bf16.mxu0 0
        %1628 = vmatpush1.bf16.msra.mxu0 0
        %1629 = vmatprep.subr.bf16.mxu0 0
        %1630 = vmatpush1.bf16.msra.mxu0 0
        %1631 = vmatprep.subr.bf16.mxu0 0
        %1632 = vmatpush1.bf16.msra.mxu0 0
        %1633 = vmatprep.subr.bf16.mxu0 0
        %1634 = vmatpush1.bf16.msra.mxu0 0
        %1635 = vmatprep.subr.bf16.mxu0 0
        %1636 = vmatpush1.bf16.msra.mxu0 0
        %1637 = vmatprep.mubr.bf16.mxu0 0
        %1638 = vmatmul.mubr.bf16.gmra.mrb[0].mxu0 %v1591
        %v1639 = vpop.f32.mrb[0].mxu0
        %v1640 = vadd.f32 0.0, %v1639
        %v1641 = vpop.f32.mrb[0].mxu0
        %v1642 = vpop.f32.mrb[0].mxu0
        %v1643 = vadd.f32 0.0, %v1642
        %v1644 = vpop.f32.mrb[0].mxu0
        %1645 = vmatprep.mubr.bf16.mxu0 0
        %1646 = vmatmul.mubr.bf16.gmra.mrb[0].mxu0 %v1594
        %v1647 = vpop.f32.mrb[0].mxu0
        %v1648 = vadd.f32 0.0, %v1647
        %v1649 = vpop.f32.mrb[0].mxu0
        %v1650 = vpop.f32.mrb[0].mxu0
        %v1651 = vadd.f32 0.0, %v1650
        %v1652 = vpop.f32.mrb[0].mxu0
        %1653 = vmatprep.mubr.bf16.mxu0 0
        %1654 = vmatmul.mubr.bf16.gmra.mrb[0].mxu0 %v1597
        %v1655 = vpop.f32.mrb[0].mxu0
        %v1656 = vadd.f32 0.0, %v1655
        %v1657 = vpop.f32.mrb[0].mxu0
        %v1658 = vpop.f32.mrb[0].mxu0
        %v1659 = vadd.f32 0.0, %v1658
        %v1660 = vpop.f32.mrb[0].mxu0
        %1661 = vmatprep.mubr.bf16.mxu0 0
        %1662 = vmatmul.mubr.bf16.gmra.mrb[0].mxu0 %v1600
        %v1663 = vpop.f32.mrb[0].mxu0
        %v1664 = vadd.f32 0.0, %v1663
        %v1665 = vpop.f32.mrb[0].mxu0
        %v1666 = vpop.f32.mrb[0].mxu0
        %v1667 = vadd.f32 0.0, %v1666
        %v1668 = vpop.f32.mrb[0].mxu0
        %1669 = vdwg.mxu0
        %v1670 = vadd.f32 %v1576, %v1640
        %v1671 = vadd.f32 %v1577, %v1643
        %v1672 = vadd.f32 %v1578, %v1648
        %v1673 = vadd.f32 %v1579, %v1651
        %v1674 = vadd.f32 %v1580, %v1656
        %v1675 = vadd.f32 %v1581, %v1659
        %v1676 = vadd.f32 %v1582, %v1664
        %v1677 = vadd.f32 %v1583, %v1667
        %v1680 = vrot.slane %v1240, 1
        %v1681 = vrot.slane %v1248, 1
        %v1682 = vsel %vm343, %v1680, %v1681
        %v1684 = vpack.c.bf16 %v1273, %v1270
        %v1685 = vpack.c.bf16 %v1279, %v1276
        %v1686 = vpack.c.bf16 %v1285, %v1282
        %v1687 = vpack.c.bf16 %v1682, %v1288
        %s1688 = scalar_lea.vmem %s3, 8
        %v1689 = vld [vmem:[%s1688] sm:$0x3]
        %v1691 = vsel %vm382, %v1684, 0
        %v1694 = vsel %vm382, %v1685, 0
        %v1697 = vsel %vm382, %v1686, 0
        %v1700 = vsel %vm382, %v1687, 0
        %v1703 = vsel %vm395, %v1689, 0
        %1705 = vmatprep.subr.bf16.mxu0 0
        %1706 = vmatpush1.bf16.msra.mxu0 %v1703
        %1707 = vmatprep.subr.bf16.mxu0 0
        %1708 = vmatpush1.bf16.msra.mxu0 0
        %1709 = vmatprep.subr.bf16.mxu0 0
        %1710 = vmatpush1.bf16.msra.mxu0 0
        %1711 = vmatprep.subr.bf16.mxu0 0
        %1712 = vmatpush1.bf16.msra.mxu0 0
        %1713 = vmatprep.subr.bf16.mxu0 0
        %1714 = vmatpush1.bf16.msra.mxu0 0
        %1715 = vmatprep.subr.bf16.mxu0 0
        %1716 = vmatpush1.bf16.msra.mxu0 0
        %1717 = vmatprep.subr.bf16.mxu0 0
        %1718 = vmatpush1.bf16.msra.mxu0 0
        %1719 = vmatprep.subr.bf16.mxu0 0
        %1720 = vmatpush1.bf16.msra.mxu0 0
        %1721 = vmatprep.subr.bf16.mxu0 0
        %1722 = vmatpush1.bf16.msra.mxu0 0
        %1723 = vmatprep.subr.bf16.mxu0 0
        %1724 = vmatpush1.bf16.msra.mxu0 0
        %1725 = vmatprep.subr.bf16.mxu0 0
        %1726 = vmatpush1.bf16.msra.mxu0 0
        %1727 = vmatprep.subr.bf16.mxu0 0
        %1728 = vmatpush1.bf16.msra.mxu0 0
        %1729 = vmatprep.subr.bf16.mxu0 0
        %1730 = vmatpush1.bf16.msra.mxu0 0
        %1731 = vmatprep.subr.bf16.mxu0 0
        %1732 = vmatpush1.bf16.msra.mxu0 0
        %1733 = vmatprep.subr.bf16.mxu0 0
        %1734 = vmatpush1.bf16.msra.mxu0 0
        %1735 = vmatprep.subr.bf16.mxu0 0
        %1736 = vmatpush1.bf16.msra.mxu0 0
        %1737 = vmatprep.mubr.bf16.mxu0 0
        %1738 = vmatmul.mubr.bf16.gmra.mrb[0].mxu0 %v1691
        %v1739 = vpop.f32.mrb[0].mxu0
        %v1740 = vadd.f32 0.0, %v1739
        %v1741 = vpop.f32.mrb[0].mxu0
        %v1742 = vpop.f32.mrb[0].mxu0
        %v1743 = vadd.f32 0.0, %v1742
        %v1744 = vpop.f32.mrb[0].mxu0
        %1745 = vmatprep.mubr.bf16.mxu0 0
        %1746 = vmatmul.mubr.bf16.gmra.mrb[0].mxu0 %v1694
        %v1747 = vpop.f32.mrb[0].mxu0
        %v1748 = vadd.f32 0.0, %v1747
        %v1749 = vpop.f32.mrb[0].mxu0
        %v1750 = vpop.f32.mrb[0].mxu0
        %v1751 = vadd.f32 0.0, %v1750
        %v1752 = vpop.f32.mrb[0].mxu0
        %1753 = vmatprep.mubr.bf16.mxu0 0
        %1754 = vmatmul.mubr.bf16.gmra.mrb[0].mxu0 %v1697
        %v1755 = vpop.f32.mrb[0].mxu0
        %v1756 = vadd.f32 0.0, %v1755
        %v1757 = vpop.f32.mrb[0].mxu0
        %v1758 = vpop.f32.mrb[0].mxu0
        %v1759 = vadd.f32 0.0, %v1758
        %v1760 = vpop.f32.mrb[0].mxu0
        %1761 = vmatprep.mubr.bf16.mxu0 0
        %1762 = vmatmul.mubr.bf16.gmra.mrb[0].mxu0 %v1700
        %v1763 = vpop.f32.mrb[0].mxu0
        %v1764 = vadd.f32 0.0, %v1763
        %v1765 = vpop.f32.mrb[0].mxu0
        %v1766 = vpop.f32.mrb[0].mxu0
        %v1767 = vadd.f32 0.0, %v1766
        %v1768 = vpop.f32.mrb[0].mxu0
        %1769 = vdwg.mxu0
        %v1770 = vadd.f32 %v1670, %v1740
        %v1771 = vadd.f32 %v1671, %v1743
        %v1772 = vadd.f32 %v1672, %v1748
        %v1773 = vadd.f32 %v1673, %v1751
        %v1774 = vadd.f32 %v1674, %v1756
        %v1775 = vadd.f32 %v1675, %v1759
        %v1776 = vadd.f32 %v1676, %v1764
        %v1777 = vadd.f32 %v1677, %v1767
        %v1778 = vrot.slane %v1240, 2
        %v1779 = vrot.slane %v1248, 2
        %v1780 = vsel %vm544, %v1778, %v1779
        %v1782 = vpack.c.bf16 %v1467, %v1464
        %v1783 = vpack.c.bf16 %v1473, %v1470
        %v1784 = vpack.c.bf16 %v1479, %v1476
        %v1785 = vpack.c.bf16 %v1780, %v1482
        %s1786 = scalar_lea.vmem %s3, 10
        %v1787 = vld [vmem:[%s1786] sm:$0x3]
        %v1789 = vsel %vm382, %v1782, 0
        %v1792 = vsel %vm382, %v1783, 0
        %v1795 = vsel %vm382, %v1784, 0
        %v1798 = vsel %vm382, %v1785, 0
        %v1801 = vsel %vm395, %v1787, 0
        %1803 = vmatprep.subr.bf16.mxu0 0
        %1804 = vmatpush1.bf16.msra.mxu0 %v1801
        %1805 = vmatprep.subr.bf16.mxu0 0
        %1806 = vmatpush1.bf16.msra.mxu0 0
        %1807 = vmatprep.subr.bf16.mxu0 0
        %1808 = vmatpush1.bf16.msra.mxu0 0
        %1809 = vmatprep.subr.bf16.mxu0 0
        %1810 = vmatpush1.bf16.msra.mxu0 0
        %1811 = vmatprep.subr.bf16.mxu0 0
        %1812 = vmatpush1.bf16.msra.mxu0 0
        %1813 = vmatprep.subr.bf16.mxu0 0
        %1814 = vmatpush1.bf16.msra.mxu0 0
        %1815 = vmatprep.subr.bf16.mxu0 0
        %1816 = vmatpush1.bf16.msra.mxu0 0
        %1817 = vmatprep.subr.bf16.mxu0 0
        %1818 = vmatpush1.bf16.msra.mxu0 0
        %1819 = vmatprep.subr.bf16.mxu0 0
        %1820 = vmatpush1.bf16.msra.mxu0 0
        %1821 = vmatprep.subr.bf16.mxu0 0
        %1822 = vmatpush1.bf16.msra.mxu0 0
        %1823 = vmatprep.subr.bf16.mxu0 0
        %1824 = vmatpush1.bf16.msra.mxu0 0
        %1825 = vmatprep.subr.bf16.mxu0 0
        %1826 = vmatpush1.bf16.msra.mxu0 0
        %1827 = vmatprep.subr.bf16.mxu0 0
        %1828 = vmatpush1.bf16.msra.mxu0 0
        %1829 = vmatprep.subr.bf16.mxu0 0
        %1830 = vmatpush1.bf16.msra.mxu0 0
        %1831 = vmatprep.subr.bf16.mxu0 0
        %1832 = vmatpush1.bf16.msra.mxu0 0
        %1833 = vmatprep.subr.bf16.mxu0 0
        %1834 = vmatpush1.bf16.msra.mxu0 0
        %1835 = vmatprep.mubr.bf16.mxu0 0
        %1836 = vmatmul.mubr.bf16.gmra.mrb[0].mxu0 %v1789
        %v1837 = vpop.f32.mrb[0].mxu0
        %v1838 = vadd.f32 0.0, %v1837
        %v1839 = vpop.f32.mrb[0].mxu0
        %v1840 = vpop.f32.mrb[0].mxu0
        %v1841 = vadd.f32 0.0, %v1840
        %v1842 = vpop.f32.mrb[0].mxu0
        %1843 = vmatprep.mubr.bf16.mxu0 0
        %1844 = vmatmul.mubr.bf16.gmra.mrb[0].mxu0 %v1792
        %v1845 = vpop.f32.mrb[0].mxu0
        %v1846 = vadd.f32 0.0, %v1845
        %v1847 = vpop.f32.mrb[0].mxu0
        %v1848 = vpop.f32.mrb[0].mxu0
        %v1849 = vadd.f32 0.0, %v1848
        %v1850 = vpop.f32.mrb[0].mxu0
        %1851 = vmatprep.mubr.bf16.mxu0 0
        %1852 = vmatmul.mubr.bf16.gmra.mrb[0].mxu0 %v1795
        %v1853 = vpop.f32.mrb[0].mxu0
        %v1854 = vadd.f32 0.0, %v1853
        %v1855 = vpop.f32.mrb[0].mxu0
        %v1856 = vpop.f32.mrb[0].mxu0
        %v1857 = vadd.f32 0.0, %v1856
        %v1858 = vpop.f32.mrb[0].mxu0
        %1859 = vmatprep.mubr.bf16.mxu0 0
        %1860 = vmatmul.mubr.bf16.gmra.mrb[0].mxu0 %v1798
        %v1861 = vpop.f32.mrb[0].mxu0
        %v1862 = vadd.f32 0.0, %v1861
        %v1863 = vpop.f32.mrb[0].mxu0
        %v1864 = vpop.f32.mrb[0].mxu0
        %v1865 = vadd.f32 0.0, %v1864
        %v1866 = vpop.f32.mrb[0].mxu0
        %1867 = vdwg.mxu0
        %v1868 = vadd.f32 %v1770, %v1838
        %v1869 = vadd.f32 %v1771, %v1841
        %v1870 = vadd.f32 %v1772, %v1846
        %v1871 = vadd.f32 %v1773, %v1849
        %v1872 = vadd.f32 %v1774, %v1854
        %v1873 = vadd.f32 %v1775, %v1857
        %v1874 = vadd.f32 %v1776, %v1862
        %v1875 = vadd.f32 %v1777, %v1865
        %v1876 = vpack.c.bf16 %v304, %v1240
        %s1877 = scalar_lea.vmem %s3, 12
        %v1878 = vld [vmem:[%s1877] sm:$0x3]
        %v1880 = vsel %vm382, %v1876, 0
        %v1883 = vsel %vm395, %v1878, 0
        %1885 = vmatprep.subr.bf16.mxu0 0
        %1886 = vmatpush1.bf16.msra.mxu0 %v1883
        %1887 = vmatprep.subr.bf16.mxu0 0
        %1888 = vmatpush1.bf16.msra.mxu0 0
        %1889 = vmatprep.subr.bf16.mxu0 0
        %1890 = vmatpush1.bf16.msra.mxu0 0
        %1891 = vmatprep.subr.bf16.mxu0 0
        %1892 = vmatpush1.bf16.msra.mxu0 0
        %1893 = vmatprep.subr.bf16.mxu0 0
        %1894 = vmatpush1.bf16.msra.mxu0 0
        %1895 = vmatprep.subr.bf16.mxu0 0
        %1896 = vmatpush1.bf16.msra.mxu0 0
        %1897 = vmatprep.subr.bf16.mxu0 0
        %1898 = vmatpush1.bf16.msra.mxu0 0
        %1899 = vmatprep.subr.bf16.mxu0 0
        %1900 = vmatpush1.bf16.msra.mxu0 0
        %1901 = vmatprep.subr.bf16.mxu0 0
        %1902 = vmatpush1.bf16.msra.mxu0 0
        %1903 = vmatprep.subr.bf16.mxu0 0
        %1904 = vmatpush1.bf16.msra.mxu0 0
        %1905 = vmatprep.subr.bf16.mxu0 0
        %1906 = vmatpush1.bf16.msra.mxu0 0
        %1907 = vmatprep.subr.bf16.mxu0 0
        %1908 = vmatpush1.bf16.msra.mxu0 0
        %1909 = vmatprep.subr.bf16.mxu0 0
        %1910 = vmatpush1.bf16.msra.mxu0 0
        %1911 = vmatprep.subr.bf16.mxu0 0
        %1912 = vmatpush1.bf16.msra.mxu0 0
        %1913 = vmatprep.subr.bf16.mxu0 0
        %1914 = vmatpush1.bf16.msra.mxu0 0
        %1915 = vmatprep.subr.bf16.mxu0 0
        %1916 = vmatpush1.bf16.msra.mxu0 0
        %1917 = vmatprep.mubr.bf16.mxu0 0
        %1918 = vmatmul.mubr.bf16.gmra.mrb[0].mxu0 %v1386
        %v1919 = vpop.f32.mrb[0].mxu0
        %v1920 = vadd.f32 0.0, %v1919
        %v1921 = vpop.f32.mrb[0].mxu0
        %v1922 = vpop.f32.mrb[0].mxu0
        %v1923 = vadd.f32 0.0, %v1922
        %v1924 = vpop.f32.mrb[0].mxu0
        %1925 = vmatprep.mubr.bf16.mxu0 0
        %1926 = vmatmul.mubr.bf16.gmra.mrb[0].mxu0 %v1389
        %v1927 = vpop.f32.mrb[0].mxu0
        %v1928 = vadd.f32 0.0, %v1927
        %v1929 = vpop.f32.mrb[0].mxu0
        %v1930 = vpop.f32.mrb[0].mxu0
        %v1931 = vadd.f32 0.0, %v1930
        %v1932 = vpop.f32.mrb[0].mxu0
        %1933 = vmatprep.mubr.bf16.mxu0 0
        %1934 = vmatmul.mubr.bf16.gmra.mrb[0].mxu0 %v1392
        %v1935 = vpop.f32.mrb[0].mxu0
        %v1936 = vadd.f32 0.0, %v1935
        %v1937 = vpop.f32.mrb[0].mxu0
        %v1938 = vpop.f32.mrb[0].mxu0
        %v1939 = vadd.f32 0.0, %v1938
        %v1940 = vpop.f32.mrb[0].mxu0
        %1941 = vmatprep.mubr.bf16.mxu0 0
        %1942 = vmatmul.mubr.bf16.gmra.mrb[0].mxu0 %v1880
        %v1943 = vpop.f32.mrb[0].mxu0
        %v1944 = vadd.f32 0.0, %v1943
        %v1945 = vpop.f32.mrb[0].mxu0
        %v1946 = vpop.f32.mrb[0].mxu0
        %v1947 = vadd.f32 0.0, %v1946
        %v1948 = vpop.f32.mrb[0].mxu0
        %1949 = vdwg.mxu0
        %v1950 = vadd.f32 %v1868, %v1920
        %v1951 = vadd.f32 %v1869, %v1923
        %v1952 = vadd.f32 %v1870, %v1928
        %v1953 = vadd.f32 %v1871, %v1931
        %v1954 = vadd.f32 %v1872, %v1936
        %v1955 = vadd.f32 %v1873, %v1939
        %v1956 = vadd.f32 %v1874, %v1944
        %v1957 = vadd.f32 %v1875, %v1947
        %v1958 = vpack.c.bf16 %v346, %v1682
        %s1959 = scalar_lea.vmem %s3, 14
        %v1960 = vld [vmem:[%s1959] sm:$0x3]
        %v1962 = vsel %vm382, %v1958, 0
        %v1965 = vsel %vm395, %v1960, 0
        %1967 = vmatprep.subr.bf16.mxu0 0
        %1968 = vmatpush1.bf16.msra.mxu0 %v1965
        %1969 = vmatprep.subr.bf16.mxu0 0
        %1970 = vmatpush1.bf16.msra.mxu0 0
        %1971 = vmatprep.subr.bf16.mxu0 0
        %1972 = vmatpush1.bf16.msra.mxu0 0
        %1973 = vmatprep.subr.bf16.mxu0 0
        %1974 = vmatpush1.bf16.msra.mxu0 0
        %1975 = vmatprep.subr.bf16.mxu0 0
        %1976 = vmatpush1.bf16.msra.mxu0 0
        %1977 = vmatprep.subr.bf16.mxu0 0
        %1978 = vmatpush1.bf16.msra.mxu0 0
        %1979 = vmatprep.subr.bf16.mxu0 0
        %1980 = vmatpush1.bf16.msra.mxu0 0
        %1981 = vmatprep.subr.bf16.mxu0 0
        %1982 = vmatpush1.bf16.msra.mxu0 0
        %1983 = vmatprep.subr.bf16.mxu0 0
        %1984 = vmatpush1.bf16.msra.mxu0 0
        %1985 = vmatprep.subr.bf16.mxu0 0
        %1986 = vmatpush1.bf16.msra.mxu0 0
        %1987 = vmatprep.subr.bf16.mxu0 0
        %1988 = vmatpush1.bf16.msra.mxu0 0
        %1989 = vmatprep.subr.bf16.mxu0 0
        %1990 = vmatpush1.bf16.msra.mxu0 0
        %1991 = vmatprep.subr.bf16.mxu0 0
        %1992 = vmatpush1.bf16.msra.mxu0 0
        %1993 = vmatprep.subr.bf16.mxu0 0
        %1994 = vmatpush1.bf16.msra.mxu0 0
        %1995 = vmatprep.subr.bf16.mxu0 0
        %1996 = vmatpush1.bf16.msra.mxu0 0
        %1997 = vmatprep.subr.bf16.mxu0 0
        %1998 = vmatpush1.bf16.msra.mxu0 0
        %1999 = vmatprep.mubr.bf16.mxu0 0
        %2000 = vmatmul.mubr.bf16.gmra.mrb[0].mxu0 %v1306
        %v2001 = vpop.f32.mrb[0].mxu0
        %v2002 = vadd.f32 0.0, %v2001
        %v2003 = vpop.f32.mrb[0].mxu0
        %v2004 = vpop.f32.mrb[0].mxu0
        %v2005 = vadd.f32 0.0, %v2004
        %v2006 = vpop.f32.mrb[0].mxu0
        %2007 = vmatprep.mubr.bf16.mxu0 0
        %2008 = vmatmul.mubr.bf16.gmra.mrb[0].mxu0 %v1309
        %v2009 = vpop.f32.mrb[0].mxu0
        %v2010 = vadd.f32 0.0, %v2009
        %v2011 = vpop.f32.mrb[0].mxu0
        %v2012 = vpop.f32.mrb[0].mxu0
        %v2013 = vadd.f32 0.0, %v2012
        %v2014 = vpop.f32.mrb[0].mxu0
        %2015 = vmatprep.mubr.bf16.mxu0 0
        %2016 = vmatmul.mubr.bf16.gmra.mrb[0].mxu0 %v1312
        %v2017 = vpop.f32.mrb[0].mxu0
        %v2018 = vadd.f32 0.0, %v2017
        %v2019 = vpop.f32.mrb[0].mxu0
        %v2020 = vpop.f32.mrb[0].mxu0
        %v2021 = vadd.f32 0.0, %v2020
        %v2022 = vpop.f32.mrb[0].mxu0
        %2023 = vmatprep.mubr.bf16.mxu0 0
        %2024 = vmatmul.mubr.bf16.gmra.mrb[0].mxu0 %v1962
        %v2025 = vpop.f32.mrb[0].mxu0
        %v2026 = vadd.f32 0.0, %v2025
        %v2027 = vpop.f32.mrb[0].mxu0
        %v2028 = vpop.f32.mrb[0].mxu0
        %v2029 = vadd.f32 0.0, %v2028
        %v2030 = vpop.f32.mrb[0].mxu0
        %2031 = vdwg.mxu0
        %v2032 = vadd.f32 %v1950, %v2002
        %v2033 = vadd.f32 %v1951, %v2005
        %v2034 = vadd.f32 %v1952, %v2010
        %v2035 = vadd.f32 %v1953, %v2013
        %v2036 = vadd.f32 %v1954, %v2018
        %v2037 = vadd.f32 %v1955, %v2021
        %v2038 = vadd.f32 %v1956, %v2026
        %v2039 = vadd.f32 %v1957, %v2029
        %v2040 = vpack.c.bf16 %v547, %v1780
        %s2041 = scalar_lea.vmem %s3, 16
        %v2042 = vld [vmem:[%s2041] sm:$0x3]
        %v2044 = vsel %vm382, %v2040, 0
        %v2047 = vsel %vm395, %v2042, 0
        %2049 = vmatprep.subr.bf16.mxu0 0
        %2050 = vmatpush1.bf16.msra.mxu0 %v2047
        %2051 = vmatprep.subr.bf16.mxu0 0
        %2052 = vmatpush1.bf16.msra.mxu0 0
        %2053 = vmatprep.subr.bf16.mxu0 0
        %2054 = vmatpush1.bf16.msra.mxu0 0
        %2055 = vmatprep.subr.bf16.mxu0 0
        %2056 = vmatpush1.bf16.msra.mxu0 0
        %2057 = vmatprep.subr.bf16.mxu0 0
        %2058 = vmatpush1.bf16.msra.mxu0 0
        %2059 = vmatprep.subr.bf16.mxu0 0
        %2060 = vmatpush1.bf16.msra.mxu0 0
        %2061 = vmatprep.subr.bf16.mxu0 0
        %2062 = vmatpush1.bf16.msra.mxu0 0
        %2063 = vmatprep.subr.bf16.mxu0 0
        %2064 = vmatpush1.bf16.msra.mxu0 0
        %2065 = vmatprep.subr.bf16.mxu0 0
        %2066 = vmatpush1.bf16.msra.mxu0 0
        %2067 = vmatprep.subr.bf16.mxu0 0
        %2068 = vmatpush1.bf16.msra.mxu0 0
        %2069 = vmatprep.subr.bf16.mxu0 0
        %2070 = vmatpush1.bf16.msra.mxu0 0
        %2071 = vmatprep.subr.bf16.mxu0 0
        %2072 = vmatpush1.bf16.msra.mxu0 0
        %2073 = vmatprep.subr.bf16.mxu0 0
        %2074 = vmatpush1.bf16.msra.mxu0 0
        %2075 = vmatprep.subr.bf16.mxu0 0
        %2076 = vmatpush1.bf16.msra.mxu0 0
        %2077 = vmatprep.subr.bf16.mxu0 0
        %2078 = vmatpush1.bf16.msra.mxu0 0
        %2079 = vmatprep.subr.bf16.mxu0 0
        %2080 = vmatpush1.bf16.msra.mxu0 0
        %2081 = vmatprep.mubr.bf16.mxu0 0
        %2082 = vmatmul.mubr.bf16.gmra.mrb[0].mxu0 %v1500
        %v2083 = vpop.f32.mrb[0].mxu0
        %v2084 = vadd.f32 0.0, %v2083
        %v2085 = vpop.f32.mrb[0].mxu0
        %v2086 = vpop.f32.mrb[0].mxu0
        %v2087 = vadd.f32 0.0, %v2086
        %v2088 = vpop.f32.mrb[0].mxu0
        %2089 = vmatprep.mubr.bf16.mxu0 0
        %2090 = vmatmul.mubr.bf16.gmra.mrb[0].mxu0 %v1503
        %v2091 = vpop.f32.mrb[0].mxu0
        %v2092 = vadd.f32 0.0, %v2091
        %v2093 = vpop.f32.mrb[0].mxu0
        %v2094 = vpop.f32.mrb[0].mxu0
        %v2095 = vadd.f32 0.0, %v2094
        %v2096 = vpop.f32.mrb[0].mxu0
        %2097 = vmatprep.mubr.bf16.mxu0 0
        %2098 = vmatmul.mubr.bf16.gmra.mrb[0].mxu0 %v1506
        %v2099 = vpop.f32.mrb[0].mxu0
        %v2100 = vadd.f32 0.0, %v2099
        %v2101 = vpop.f32.mrb[0].mxu0
        %v2102 = vpop.f32.mrb[0].mxu0
        %v2103 = vadd.f32 0.0, %v2102
        %v2104 = vpop.f32.mrb[0].mxu0
        %2105 = vmatprep.mubr.bf16.mxu0 0
        %2106 = vmatmul.mubr.bf16.gmra.mrb[0].mxu0 %v2044
        %v2107 = vpop.f32.mrb[0].mxu0
        %v2108 = vadd.f32 0.0, %v2107
        %v2109 = vpop.f32.mrb[0].mxu0
        %v2110 = vpop.f32.mrb[0].mxu0
        %v2111 = vadd.f32 0.0, %v2110
        %v2112 = vpop.f32.mrb[0].mxu0
        %2113 = vdwg.mxu0
        %v2114 = vadd.f32 %v2032, %v2084
        %v2115 = vadd.f32 %v2033, %v2087
        %v2116 = vadd.f32 %v2034, %v2092
        %v2117 = vadd.f32 %v2035, %v2095
        %v2118 = vadd.f32 %v2036, %v2100
        %v2119 = vadd.f32 %v2037, %v2103
        %v2120 = vadd.f32 %v2038, %v2108
        %v2121 = vadd.f32 %v2039, %v2111
        %v2122 = vadd.f32 %v1201, %v2114
        %v2123 = vadd.f32 %v1202, %v2115
        %v2124 = vadd.f32 %v1203, %v2116
        %v2125 = vadd.f32 %v1204, %v2117
        %v2126 = vadd.f32 %v1205, %v2118
        %v2127 = vadd.f32 %v1206, %v2119
        %v2128 = vadd.f32 %v1207, %v2120
        %v2129 = vadd.f32 %v1208, %v2121
        %vm2130 = vcmask 64512
        %v2131 = vsel %vm2130, %v2122, 0.0
        %v2132 = vsel %vm2130, %v2123, 0.0
        %v2133 = vadd.f32 %v2131, %v2132
        %v2134 = vsel %vm2130, %v2124, 0.0
        %v2135 = vadd.f32 %v2133, %v2134
        %v2136 = vsel %vm2130, %v2125, 0.0
        %v2137 = vadd.f32 %v2135, %v2136
        %v2138 = vsel %vm2130, %v2126, 0.0
        %v2139 = vadd.f32 %v2137, %v2138
        %v2140 = vsel %vm2130, %v2127, 0.0
        %v2141 = vadd.f32 %v2139, %v2140
        %v2142 = vsel %vm2130, %v2128, 0.0
        %v2143 = vadd.f32 %v2141, %v2142
        %v2144 = vsel %vm2130, %v2129, 0.0
        %v2145 = vadd.f32 %v2143, %v2144
        %v2146 = vrot.slane %v2145, 4
        %v2147 = vadd.f32 %v2145, %v2146
        %v2148 = vrot.slane %v2147, 2
        %v2149 = vadd.f32 %v2147, %v2148
        %v2150 = vrot.slane %v2149, 1
        %v2151 = vadd.f32 %v2149, %v2150
        %v2152 = vmul.f32 %v2151, 0.015625
        %v2153 = vmul.f32 %v2122, %v2122
        %v2154 = vmul.f32 %v2123, %v2123
        %v2155 = vmul.f32 %v2124, %v2124
        %v2156 = vmul.f32 %v2125, %v2125
        %v2157 = vmul.f32 %v2126, %v2126
        %v2158 = vmul.f32 %v2127, %v2127
        %v2159 = vmul.f32 %v2128, %v2128
        %v2160 = vmul.f32 %v2129, %v2129
        %v2161 = vsel %vm2130, %v2153, 0.0
        %v2162 = vsel %vm2130, %v2154, 0.0
        %v2163 = vadd.f32 %v2161, %v2162
        %v2164 = vsel %vm2130, %v2155, 0.0
        %v2165 = vadd.f32 %v2163, %v2164
        %v2166 = vsel %vm2130, %v2156, 0.0
        %v2167 = vadd.f32 %v2165, %v2166
        %v2168 = vsel %vm2130, %v2157, 0.0
        %v2169 = vadd.f32 %v2167, %v2168
        %v2170 = vsel %vm2130, %v2158, 0.0
        %v2171 = vadd.f32 %v2169, %v2170
        %v2172 = vsel %vm2130, %v2159, 0.0
        %v2173 = vadd.f32 %v2171, %v2172
        %v2174 = vsel %vm2130, %v2160, 0.0
        %v2175 = vadd.f32 %v2173, %v2174
        %v2176 = vrot.slane %v2175, 4
        %v2177 = vadd.f32 %v2175, %v2176
        %v2178 = vrot.slane %v2177, 2
        %v2179 = vadd.f32 %v2177, %v2178
        %v2180 = vrot.slane %v2179, 1
        %v2181 = vadd.f32 %v2179, %v2180
        %v2182 = vmul.f32 %v2181, 0.015625
        %v2183 = vmul.f32 %v2152, %v2152
        %v2184 = vsub.f32 %v2182, %v2183
        %v2185 = vmax.f32 %v2184, 0.0
        %v2186 = vsub.f32 %v2122, %v2152
        %v2187 = vsub.f32 %v2123, %v2152
        %v2188 = vsub.f32 %v2124, %v2152
        %v2189 = vsub.f32 %v2125, %v2152
        %v2190 = vsub.f32 %v2126, %v2152
        %v2191 = vsub.f32 %v2127, %v2152
        %v2192 = vsub.f32 %v2128, %v2152
        %v2193 = vsub.f32 %v2129, %v2152
        %v2194 = vadd.f32 %v2185, 1e-05
        %v2195 = vrsqrt.pop %v2194
        %v2196 = vmul.f32 %v2186, %v2195
        %v2197 = vmul.f32 %v2187, %v2195
        %v2198 = vmul.f32 %v2188, %v2195
        %v2199 = vmul.f32 %v2189, %v2195
        %v2200 = vmul.f32 %v2190, %v2195
        %v2201 = vmul.f32 %v2191, %v2195
        %v2202 = vmul.f32 %v2192, %v2195
        %v2203 = vmul.f32 %v2193, %v2195
        %v2204 = vmax.f32 %v2196, 0.0
        %v2205 = vmax.f32 %v2197, 0.0
        %v2206 = vmax.f32 %v2198, 0.0
        %v2207 = vmax.f32 %v2199, 0.0
        %v2208 = vmax.f32 %v2200, 0.0
        %v2209 = vmax.f32 %v2201, 0.0
        %v2210 = vmax.f32 %v2202, 0.0
        %v2211 = vmax.f32 %v2203, 0.0
        %v2220 = vrot.slane %v2204, 7
        %v2221 = vrot.slane %v2205, 7
        %v2222 = vrot.slane %v2206, 7
        %v2223 = vrot.slane %v2207, 7
        %v2224 = vrot.slane %v2208, 7
        %v2225 = vrot.slane %v2209, 7
        %v2226 = vrot.slane %v2210, 7
        %v2227 = vrot.slane %v2211, 7
        %v2236 = vsel %vm303, 0.0, %v2220
        %v2237 = vsel %vm303, 0.0, %v2221
        %v2238 = vsel %vm303, 0.0, %v2222
        %v2239 = vsel %vm303, 0.0, %v2223
        %v2240 = vsel %vm303, 0.0, %v2224
        %v2241 = vsel %vm303, 0.0, %v2225
        %v2242 = vsel %vm303, 0.0, %v2226
        %v2243 = vsel %vm303, 0.0, %v2227
        %v2244 = vsel %vm303, %v2220, 0.0
        %v2245 = vsel %vm303, %v2221, 0.0
        %v2246 = vsel %vm303, %v2222, 0.0
        %v2247 = vsel %vm303, %v2223, 0.0
        %v2248 = vsel %vm303, %v2224, 0.0
        %v2249 = vsel %vm303, %v2225, 0.0
        %v2250 = vsel %vm303, %v2226, 0.0
        %v2251 = vsel %vm303, %v2227, 0.0
        %v2252 = vpack.c.bf16 %v2236, %v304
        %v2253 = vpack.c.bf16 %v2238, %v2237
        %v2254 = vpack.c.bf16 %v2240, %v2239
        %v2255 = vpack.c.bf16 %v2242, %v2241
        %v2256 = vld [vmem:[%s4] sm:$0xf]
        %v2271 = vrot.slane %v2236, 1
        %v2272 = vrot.slane %v2244, 1
        %v2273 = vsel %vm343, %v2271, %v2272
        %v2274 = vrot.slane %v2237, 1
        %v2275 = vrot.slane %v2245, 1
        %v2276 = vsel %vm343, %v2274, %v2275
        %v2277 = vrot.slane %v2238, 1
        %v2278 = vrot.slane %v2246, 1
        %v2279 = vsel %vm343, %v2277, %v2278
        %v2280 = vrot.slane %v2239, 1
        %v2281 = vrot.slane %v2247, 1
        %v2282 = vsel %vm343, %v2280, %v2281
        %v2283 = vrot.slane %v2240, 1
        %v2284 = vrot.slane %v2248, 1
        %v2285 = vsel %vm343, %v2283, %v2284
        %v2286 = vrot.slane %v2241, 1
        %v2287 = vrot.slane %v2249, 1
        %v2288 = vsel %vm343, %v2286, %v2287
        %v2289 = vrot.slane %v2242, 1
        %v2290 = vrot.slane %v2250, 1
        %v2291 = vsel %vm343, %v2289, %v2290
        %v2299 = vpack.c.bf16 %v2273, %v346
        %v2300 = vpack.c.bf16 %v2279, %v2276
        %v2301 = vpack.c.bf16 %v2285, %v2282
        %v2302 = vpack.c.bf16 %v2291, %v2288
        %s2303 = scalar_lea.vmem %s4, 4
        %v2304 = vld [vmem:[%s2303] sm:$0xf]
        %v2306 = vsel %vm2130, %v2299, 0
        %v2309 = vsel %vm2130, %v2300, 0
        %v2312 = vsel %vm2130, %v2301, 0
        %v2315 = vsel %vm2130, %v2302, 0
        %vm2317 = vcmask 1043456
        %v2319 = vsel %vm2317, %v2304, 0
        %2321 = vmatprep.subr.bf16.mxu0 0
        %2322 = vmatpush1.bf16.msra.mxu0 %v2319
        %2323 = vmatprep.subr.bf16.mxu0 0
        %2324 = vmatpush1.bf16.msra.mxu0 0
        %2325 = vmatprep.subr.bf16.mxu0 0
        %2326 = vmatpush1.bf16.msra.mxu0 0
        %2327 = vmatprep.subr.bf16.mxu0 0
        %2328 = vmatpush1.bf16.msra.mxu0 0
        %2329 = vmatprep.subr.bf16.mxu0 0
        %2330 = vmatpush1.bf16.msra.mxu0 0
        %2331 = vmatprep.subr.bf16.mxu0 0
        %2332 = vmatpush1.bf16.msra.mxu0 0
        %2333 = vmatprep.subr.bf16.mxu0 0
        %2334 = vmatpush1.bf16.msra.mxu0 0
        %2335 = vmatprep.subr.bf16.mxu0 0
        %2336 = vmatpush1.bf16.msra.mxu0 0
        %2337 = vmatprep.subr.bf16.mxu0 0
        %2338 = vmatpush1.bf16.msra.mxu0 0
        %2339 = vmatprep.subr.bf16.mxu0 0
        %2340 = vmatpush1.bf16.msra.mxu0 0
        %2341 = vmatprep.subr.bf16.mxu0 0
        %2342 = vmatpush1.bf16.msra.mxu0 0
        %2343 = vmatprep.subr.bf16.mxu0 0
        %2344 = vmatpush1.bf16.msra.mxu0 0
        %2345 = vmatprep.subr.bf16.mxu0 0
        %2346 = vmatpush1.bf16.msra.mxu0 0
        %2347 = vmatprep.subr.bf16.mxu0 0
        %2348 = vmatpush1.bf16.msra.mxu0 0
        %2349 = vmatprep.subr.bf16.mxu0 0
        %2350 = vmatpush1.bf16.msra.mxu0 0
        %2351 = vmatprep.subr.bf16.mxu0 0
        %2352 = vmatpush1.bf16.msra.mxu0 0
        %2353 = vmatprep.mubr.bf16.mxu0 0
        %2354 = vmatmul.mubr.bf16.gmra.mrb[0].mxu0 %v2306
        %v2355 = vpop.f32.mrb[0].mxu0
        %v2356 = vadd.f32 0.0, %v2355
        %v2357 = vpop.f32.mrb[0].mxu0
        %v2358 = vpop.f32.mrb[0].mxu0
        %v2359 = vadd.f32 0.0, %v2358
        %v2360 = vpop.f32.mrb[0].mxu0
        %2361 = vmatprep.mubr.bf16.mxu0 0
        %2362 = vmatmul.mubr.bf16.gmra.mrb[0].mxu0 %v2309
        %v2363 = vpop.f32.mrb[0].mxu0
        %v2364 = vadd.f32 0.0, %v2363
        %v2365 = vpop.f32.mrb[0].mxu0
        %v2366 = vpop.f32.mrb[0].mxu0
        %v2367 = vadd.f32 0.0, %v2366
        %v2368 = vpop.f32.mrb[0].mxu0
        %2369 = vmatprep.mubr.bf16.mxu0 0
        %2370 = vmatmul.mubr.bf16.gmra.mrb[0].mxu0 %v2312
        %v2371 = vpop.f32.mrb[0].mxu0
        %v2372 = vadd.f32 0.0, %v2371
        %v2373 = vpop.f32.mrb[0].mxu0
        %v2374 = vpop.f32.mrb[0].mxu0
        %v2375 = vadd.f32 0.0, %v2374
        %v2376 = vpop.f32.mrb[0].mxu0
        %2377 = vmatprep.mubr.bf16.mxu0 0
        %2378 = vmatmul.mubr.bf16.gmra.mrb[0].mxu0 %v2315
        %v2379 = vpop.f32.mrb[0].mxu0
        %v2380 = vadd.f32 0.0, %v2379
        %v2381 = vpop.f32.mrb[0].mxu0
        %v2382 = vpop.f32.mrb[0].mxu0
        %v2383 = vadd.f32 0.0, %v2382
        %v2384 = vpop.f32.mrb[0].mxu0
        %2385 = vdwg.mxu0
        %v2387 = vsel %vm2130, %v2252, 0
        %v2390 = vsel %vm2130, %v2253, 0
        %v2393 = vsel %vm2130, %v2254, 0
        %v2396 = vsel %vm2130, %v2255, 0
        %v2399 = vsel %vm2317, %v2256, 0
        %2401 = vmatprep.subr.bf16.mxu0 0
        %2402 = vmatpush1.bf16.msra.mxu0 %v2399
        %2403 = vmatprep.subr.bf16.mxu0 0
        %2404 = vmatpush1.bf16.msra.mxu0 0
        %2405 = vmatprep.subr.bf16.mxu0 0
        %2406 = vmatpush1.bf16.msra.mxu0 0
        %2407 = vmatprep.subr.bf16.mxu0 0
        %2408 = vmatpush1.bf16.msra.mxu0 0
        %2409 = vmatprep.subr.bf16.mxu0 0
        %2410 = vmatpush1.bf16.msra.mxu0 0
        %2411 = vmatprep.subr.bf16.mxu0 0
        %2412 = vmatpush1.bf16.msra.mxu0 0
        %2413 = vmatprep.subr.bf16.mxu0 0
        %2414 = vmatpush1.bf16.msra.mxu0 0
        %2415 = vmatprep.subr.bf16.mxu0 0
        %2416 = vmatpush1.bf16.msra.mxu0 0
        %2417 = vmatprep.subr.bf16.mxu0 0
        %2418 = vmatpush1.bf16.msra.mxu0 0
        %2419 = vmatprep.subr.bf16.mxu0 0
        %2420 = vmatpush1.bf16.msra.mxu0 0
        %2421 = vmatprep.subr.bf16.mxu0 0
        %2422 = vmatpush1.bf16.msra.mxu0 0
        %2423 = vmatprep.subr.bf16.mxu0 0
        %2424 = vmatpush1.bf16.msra.mxu0 0
        %2425 = vmatprep.subr.bf16.mxu0 0
        %2426 = vmatpush1.bf16.msra.mxu0 0
        %2427 = vmatprep.subr.bf16.mxu0 0
        %2428 = vmatpush1.bf16.msra.mxu0 0
        %2429 = vmatprep.subr.bf16.mxu0 0
        %2430 = vmatpush1.bf16.msra.mxu0 0
        %2431 = vmatprep.subr.bf16.mxu0 0
        %2432 = vmatpush1.bf16.msra.mxu0 0
        %2433 = vmatprep.mubr.bf16.mxu0 0
        %2434 = vmatmul.mubr.bf16.gmra.mrb[0].mxu0 %v2387
        %v2435 = vpop.f32.mrb[0].mxu0
        %v2436 = vadd.f32 %v2356, %v2435
        %v2437 = vpop.f32.mrb[0].mxu0
        %v2438 = vpop.f32.mrb[0].mxu0
        %v2439 = vadd.f32 %v2359, %v2438
        %v2440 = vpop.f32.mrb[0].mxu0
        %2441 = vmatprep.mubr.bf16.mxu0 0
        %2442 = vmatmul.mubr.bf16.gmra.mrb[0].mxu0 %v2390
        %v2443 = vpop.f32.mrb[0].mxu0
        %v2444 = vadd.f32 %v2364, %v2443
        %v2445 = vpop.f32.mrb[0].mxu0
        %v2446 = vpop.f32.mrb[0].mxu0
        %v2447 = vadd.f32 %v2367, %v2446
        %v2448 = vpop.f32.mrb[0].mxu0
        %2449 = vmatprep.mubr.bf16.mxu0 0
        %2450 = vmatmul.mubr.bf16.gmra.mrb[0].mxu0 %v2393
        %v2451 = vpop.f32.mrb[0].mxu0
        %v2452 = vadd.f32 %v2372, %v2451
        %v2453 = vpop.f32.mrb[0].mxu0
        %v2454 = vpop.f32.mrb[0].mxu0
        %v2455 = vadd.f32 %v2375, %v2454
        %v2456 = vpop.f32.mrb[0].mxu0
        %2457 = vmatprep.mubr.bf16.mxu0 0
        %2458 = vmatmul.mubr.bf16.gmra.mrb[0].mxu0 %v2396
        %v2459 = vpop.f32.mrb[0].mxu0
        %v2460 = vadd.f32 %v2380, %v2459
        %v2461 = vpop.f32.mrb[0].mxu0
        %v2462 = vpop.f32.mrb[0].mxu0
        %v2463 = vadd.f32 %v2383, %v2462
        %v2464 = vpop.f32.mrb[0].mxu0
        %2465 = vdwg.mxu0
        %v2466 = vrot.slane %v2236, 2
        %v2467 = vrot.slane %v2244, 2
        %v2468 = vsel %vm544, %v2466, %v2467
        %v2469 = vrot.slane %v2237, 2
        %v2470 = vrot.slane %v2245, 2
        %v2471 = vsel %vm544, %v2469, %v2470
        %v2472 = vrot.slane %v2238, 2
        %v2473 = vrot.slane %v2246, 2
        %v2474 = vsel %vm544, %v2472, %v2473
        %v2475 = vrot.slane %v2239, 2
        %v2476 = vrot.slane %v2247, 2
        %v2477 = vsel %vm544, %v2475, %v2476
        %v2478 = vrot.slane %v2240, 2
        %v2479 = vrot.slane %v2248, 2
        %v2480 = vsel %vm544, %v2478, %v2479
        %v2481 = vrot.slane %v2241, 2
        %v2482 = vrot.slane %v2249, 2
        %v2483 = vsel %vm544, %v2481, %v2482
        %v2484 = vrot.slane %v2242, 2
        %v2485 = vrot.slane %v2250, 2
        %v2486 = vsel %vm544, %v2484, %v2485
        %v2494 = vpack.c.bf16 %v2468, %v547
        %v2495 = vpack.c.bf16 %v2474, %v2471
        %v2496 = vpack.c.bf16 %v2480, %v2477
        %v2497 = vpack.c.bf16 %v2486, %v2483
        %s2498 = scalar_lea.vmem %s4, 8
        %v2499 = vld [vmem:[%s2498] sm:$0xf]
        %v2501 = vsel %vm2130, %v2494, 0
        %v2504 = vsel %vm2130, %v2495, 0
        %v2507 = vsel %vm2130, %v2496, 0
        %v2510 = vsel %vm2130, %v2497, 0
        %v2513 = vsel %vm2317, %v2499, 0
        %2515 = vmatprep.subr.bf16.mxu0 0
        %2516 = vmatpush1.bf16.msra.mxu0 %v2513
        %2517 = vmatprep.subr.bf16.mxu0 0
        %2518 = vmatpush1.bf16.msra.mxu0 0
        %2519 = vmatprep.subr.bf16.mxu0 0
        %2520 = vmatpush1.bf16.msra.mxu0 0
        %2521 = vmatprep.subr.bf16.mxu0 0
        %2522 = vmatpush1.bf16.msra.mxu0 0
        %2523 = vmatprep.subr.bf16.mxu0 0
        %2524 = vmatpush1.bf16.msra.mxu0 0
        %2525 = vmatprep.subr.bf16.mxu0 0
        %2526 = vmatpush1.bf16.msra.mxu0 0
        %2527 = vmatprep.subr.bf16.mxu0 0
        %2528 = vmatpush1.bf16.msra.mxu0 0
        %2529 = vmatprep.subr.bf16.mxu0 0
        %2530 = vmatpush1.bf16.msra.mxu0 0
        %2531 = vmatprep.subr.bf16.mxu0 0
        %2532 = vmatpush1.bf16.msra.mxu0 0
        %2533 = vmatprep.subr.bf16.mxu0 0
        %2534 = vmatpush1.bf16.msra.mxu0 0
        %2535 = vmatprep.subr.bf16.mxu0 0
        %2536 = vmatpush1.bf16.msra.mxu0 0
        %2537 = vmatprep.subr.bf16.mxu0 0
        %2538 = vmatpush1.bf16.msra.mxu0 0
        %2539 = vmatprep.subr.bf16.mxu0 0
        %2540 = vmatpush1.bf16.msra.mxu0 0
        %2541 = vmatprep.subr.bf16.mxu0 0
        %2542 = vmatpush1.bf16.msra.mxu0 0
        %2543 = vmatprep.subr.bf16.mxu0 0
        %2544 = vmatpush1.bf16.msra.mxu0 0
        %2545 = vmatprep.subr.bf16.mxu0 0
        %2546 = vmatpush1.bf16.msra.mxu0 0
        %2547 = vmatprep.mubr.bf16.mxu0 0
        %2548 = vmatmul.mubr.bf16.gmra.mrb[0].mxu0 %v2501
        %v2549 = vpop.f32.mrb[0].mxu0
        %v2550 = vadd.f32 0.0, %v2549
        %v2551 = vpop.f32.mrb[0].mxu0
        %v2552 = vpop.f32.mrb[0].mxu0
        %v2553 = vadd.f32 0.0, %v2552
        %v2554 = vpop.f32.mrb[0].mxu0
        %2555 = vmatprep.mubr.bf16.mxu0 0
        %2556 = vmatmul.mubr.bf16.gmra.mrb[0].mxu0 %v2504
        %v2557 = vpop.f32.mrb[0].mxu0
        %v2558 = vadd.f32 0.0, %v2557
        %v2559 = vpop.f32.mrb[0].mxu0
        %v2560 = vpop.f32.mrb[0].mxu0
        %v2561 = vadd.f32 0.0, %v2560
        %v2562 = vpop.f32.mrb[0].mxu0
        %2563 = vmatprep.mubr.bf16.mxu0 0
        %2564 = vmatmul.mubr.bf16.gmra.mrb[0].mxu0 %v2507
        %v2565 = vpop.f32.mrb[0].mxu0
        %v2566 = vadd.f32 0.0, %v2565
        %v2567 = vpop.f32.mrb[0].mxu0
        %v2568 = vpop.f32.mrb[0].mxu0
        %v2569 = vadd.f32 0.0, %v2568
        %v2570 = vpop.f32.mrb[0].mxu0
        %2571 = vmatprep.mubr.bf16.mxu0 0
        %2572 = vmatmul.mubr.bf16.gmra.mrb[0].mxu0 %v2510
        %v2573 = vpop.f32.mrb[0].mxu0
        %v2574 = vadd.f32 0.0, %v2573
        %v2575 = vpop.f32.mrb[0].mxu0
        %v2576 = vpop.f32.mrb[0].mxu0
        %v2577 = vadd.f32 0.0, %v2576
        %v2578 = vpop.f32.mrb[0].mxu0
        %2579 = vdwg.mxu0
        %v2580 = vadd.f32 %v2436, %v2550
        %v2581 = vadd.f32 %v2439, %v2553
        %v2582 = vadd.f32 %v2444, %v2558
        %v2583 = vadd.f32 %v2447, %v2561
        %v2584 = vadd.f32 %v2452, %v2566
        %v2585 = vadd.f32 %v2455, %v2569
        %v2586 = vadd.f32 %v2460, %v2574
        %v2587 = vadd.f32 %v2463, %v2577
        %v2588 = vpack.c.bf16 %v2237, %v2236
        %v2589 = vpack.c.bf16 %v2239, %v2238
        %v2590 = vpack.c.bf16 %v2241, %v2240
        %v2591 = vpack.c.bf16 %v2243, %v2242
        %s2592 = scalar_lea.vmem %s4, 12
        %v2593 = vld [vmem:[%s2592] sm:$0xf]
        %v2595 = vsel %vm2130, %v2588, 0
        %v2598 = vsel %vm2130, %v2589, 0
        %v2601 = vsel %vm2130, %v2590, 0
        %v2604 = vsel %vm2130, %v2591, 0
        %v2607 = vsel %vm2317, %v2593, 0
        %2609 = vmatprep.subr.bf16.mxu0 0
        %2610 = vmatpush1.bf16.msra.mxu0 %v2607
        %2611 = vmatprep.subr.bf16.mxu0 0
        %2612 = vmatpush1.bf16.msra.mxu0 0
        %2613 = vmatprep.subr.bf16.mxu0 0
        %2614 = vmatpush1.bf16.msra.mxu0 0
        %2615 = vmatprep.subr.bf16.mxu0 0
        %2616 = vmatpush1.bf16.msra.mxu0 0
        %2617 = vmatprep.subr.bf16.mxu0 0
        %2618 = vmatpush1.bf16.msra.mxu0 0
        %2619 = vmatprep.subr.bf16.mxu0 0
        %2620 = vmatpush1.bf16.msra.mxu0 0
        %2621 = vmatprep.subr.bf16.mxu0 0
        %2622 = vmatpush1.bf16.msra.mxu0 0
        %2623 = vmatprep.subr.bf16.mxu0 0
        %2624 = vmatpush1.bf16.msra.mxu0 0
        %2625 = vmatprep.subr.bf16.mxu0 0
        %2626 = vmatpush1.bf16.msra.mxu0 0
        %2627 = vmatprep.subr.bf16.mxu0 0
        %2628 = vmatpush1.bf16.msra.mxu0 0
        %2629 = vmatprep.subr.bf16.mxu0 0
        %2630 = vmatpush1.bf16.msra.mxu0 0
        %2631 = vmatprep.subr.bf16.mxu0 0
        %2632 = vmatpush1.bf16.msra.mxu0 0
        %2633 = vmatprep.subr.bf16.mxu0 0
        %2634 = vmatpush1.bf16.msra.mxu0 0
        %2635 = vmatprep.subr.bf16.mxu0 0
        %2636 = vmatpush1.bf16.msra.mxu0 0
        %2637 = vmatprep.subr.bf16.mxu0 0
        %2638 = vmatpush1.bf16.msra.mxu0 0
        %2639 = vmatprep.subr.bf16.mxu0 0
        %2640 = vmatpush1.bf16.msra.mxu0 0
        %2641 = vmatprep.mubr.bf16.mxu0 0
        %2642 = vmatmul.mubr.bf16.gmra.mrb[0].mxu0 %v2595
        %v2643 = vpop.f32.mrb[0].mxu0
        %v2644 = vadd.f32 0.0, %v2643
        %v2645 = vpop.f32.mrb[0].mxu0
        %v2646 = vpop.f32.mrb[0].mxu0
        %v2647 = vadd.f32 0.0, %v2646
        %v2648 = vpop.f32.mrb[0].mxu0
        %2649 = vmatprep.mubr.bf16.mxu0 0
        %2650 = vmatmul.mubr.bf16.gmra.mrb[0].mxu0 %v2598
        %v2651 = vpop.f32.mrb[0].mxu0
        %v2652 = vadd.f32 0.0, %v2651
        %v2653 = vpop.f32.mrb[0].mxu0
        %v2654 = vpop.f32.mrb[0].mxu0
        %v2655 = vadd.f32 0.0, %v2654
        %v2656 = vpop.f32.mrb[0].mxu0
        %2657 = vmatprep.mubr.bf16.mxu0 0
        %2658 = vmatmul.mubr.bf16.gmra.mrb[0].mxu0 %v2601
        %v2659 = vpop.f32.mrb[0].mxu0
        %v2660 = vadd.f32 0.0, %v2659
        %v2661 = vpop.f32.mrb[0].mxu0
        %v2662 = vpop.f32.mrb[0].mxu0
        %v2663 = vadd.f32 0.0, %v2662
        %v2664 = vpop.f32.mrb[0].mxu0
        %2665 = vmatprep.mubr.bf16.mxu0 0
        %2666 = vmatmul.mubr.bf16.gmra.mrb[0].mxu0 %v2604
        %v2667 = vpop.f32.mrb[0].mxu0
        %v2668 = vadd.f32 0.0, %v2667
        %v2669 = vpop.f32.mrb[0].mxu0
        %v2670 = vpop.f32.mrb[0].mxu0
        %v2671 = vadd.f32 0.0, %v2670
        %v2672 = vpop.f32.mrb[0].mxu0
        %2673 = vdwg.mxu0
        %v2674 = vadd.f32 %v2580, %v2644
        %v2675 = vadd.f32 %v2581, %v2647
        %v2676 = vadd.f32 %v2582, %v2652
        %v2677 = vadd.f32 %v2583, %v2655
        %v2678 = vadd.f32 %v2584, %v2660
        %v2679 = vadd.f32 %v2585, %v2663
        %v2680 = vadd.f32 %v2586, %v2668
        %v2681 = vadd.f32 %v2587, %v2671
        %v2684 = vrot.slane %v2243, 1
        %v2685 = vrot.slane %v2251, 1
        %v2686 = vsel %vm343, %v2684, %v2685
        %v2688 = vpack.c.bf16 %v2276, %v2273
        %v2689 = vpack.c.bf16 %v2282, %v2279
        %v2690 = vpack.c.bf16 %v2288, %v2285
        %v2691 = vpack.c.bf16 %v2686, %v2291
        %s2692 = scalar_lea.vmem %s4, 16
        %v2693 = vld [vmem:[%s2692] sm:$0xf]
        %v2695 = vsel %vm2130, %v2688, 0
        %v2698 = vsel %vm2130, %v2689, 0
        %v2701 = vsel %vm2130, %v2690, 0
        %v2704 = vsel %vm2130, %v2691, 0
        %v2707 = vsel %vm2317, %v2693, 0
        %2709 = vmatprep.subr.bf16.mxu0 0
        %2710 = vmatpush1.bf16.msra.mxu0 %v2707
        %2711 = vmatprep.subr.bf16.mxu0 0
        %2712 = vmatpush1.bf16.msra.mxu0 0
        %2713 = vmatprep.subr.bf16.mxu0 0
        %2714 = vmatpush1.bf16.msra.mxu0 0
        %2715 = vmatprep.subr.bf16.mxu0 0
        %2716 = vmatpush1.bf16.msra.mxu0 0
        %2717 = vmatprep.subr.bf16.mxu0 0
        %2718 = vmatpush1.bf16.msra.mxu0 0
        %2719 = vmatprep.subr.bf16.mxu0 0
        %2720 = vmatpush1.bf16.msra.mxu0 0
        %2721 = vmatprep.subr.bf16.mxu0 0
        %2722 = vmatpush1.bf16.msra.mxu0 0
        %2723 = vmatprep.subr.bf16.mxu0 0
        %2724 = vmatpush1.bf16.msra.mxu0 0
        %2725 = vmatprep.subr.bf16.mxu0 0
        %2726 = vmatpush1.bf16.msra.mxu0 0
        %2727 = vmatprep.subr.bf16.mxu0 0
        %2728 = vmatpush1.bf16.msra.mxu0 0
        %2729 = vmatprep.subr.bf16.mxu0 0
        %2730 = vmatpush1.bf16.msra.mxu0 0
        %2731 = vmatprep.subr.bf16.mxu0 0
        %2732 = vmatpush1.bf16.msra.mxu0 0
        %2733 = vmatprep.subr.bf16.mxu0 0
        %2734 = vmatpush1.bf16.msra.mxu0 0
        %2735 = vmatprep.subr.bf16.mxu0 0
        %2736 = vmatpush1.bf16.msra.mxu0 0
        %2737 = vmatprep.subr.bf16.mxu0 0
        %2738 = vmatpush1.bf16.msra.mxu0 0
        %2739 = vmatprep.subr.bf16.mxu0 0
        %2740 = vmatpush1.bf16.msra.mxu0 0
        %2741 = vmatprep.mubr.bf16.mxu0 0
        %2742 = vmatmul.mubr.bf16.gmra.mrb[0].mxu0 %v2695
        %v2743 = vpop.f32.mrb[0].mxu0
        %v2744 = vadd.f32 0.0, %v2743
        %v2745 = vpop.f32.mrb[0].mxu0
        %v2746 = vpop.f32.mrb[0].mxu0
        %v2747 = vadd.f32 0.0, %v2746
        %v2748 = vpop.f32.mrb[0].mxu0
        %2749 = vmatprep.mubr.bf16.mxu0 0
        %2750 = vmatmul.mubr.bf16.gmra.mrb[0].mxu0 %v2698
        %v2751 = vpop.f32.mrb[0].mxu0
        %v2752 = vadd.f32 0.0, %v2751
        %v2753 = vpop.f32.mrb[0].mxu0
        %v2754 = vpop.f32.mrb[0].mxu0
        %v2755 = vadd.f32 0.0, %v2754
        %v2756 = vpop.f32.mrb[0].mxu0
        %2757 = vmatprep.mubr.bf16.mxu0 0
        %2758 = vmatmul.mubr.bf16.gmra.mrb[0].mxu0 %v2701
        %v2759 = vpop.f32.mrb[0].mxu0
        %v2760 = vadd.f32 0.0, %v2759
        %v2761 = vpop.f32.mrb[0].mxu0
        %v2762 = vpop.f32.mrb[0].mxu0
        %v2763 = vadd.f32 0.0, %v2762
        %v2764 = vpop.f32.mrb[0].mxu0
        %2765 = vmatprep.mubr.bf16.mxu0 0
        %2766 = vmatmul.mubr.bf16.gmra.mrb[0].mxu0 %v2704
        %v2767 = vpop.f32.mrb[0].mxu0
        %v2768 = vadd.f32 0.0, %v2767
        %v2769 = vpop.f32.mrb[0].mxu0
        %v2770 = vpop.f32.mrb[0].mxu0
        %v2771 = vadd.f32 0.0, %v2770
        %v2772 = vpop.f32.mrb[0].mxu0
        %2773 = vdwg.mxu0
        %v2774 = vadd.f32 %v2674, %v2744
        %v2775 = vadd.f32 %v2675, %v2747
        %v2776 = vadd.f32 %v2676, %v2752
        %v2777 = vadd.f32 %v2677, %v2755
        %v2778 = vadd.f32 %v2678, %v2760
        %v2779 = vadd.f32 %v2679, %v2763
        %v2780 = vadd.f32 %v2680, %v2768
        %v2781 = vadd.f32 %v2681, %v2771
        %v2782 = vrot.slane %v2243, 2
        %v2783 = vrot.slane %v2251, 2
        %v2784 = vsel %vm544, %v2782, %v2783
        %v2786 = vpack.c.bf16 %v2471, %v2468
        %v2787 = vpack.c.bf16 %v2477, %v2474
        %v2788 = vpack.c.bf16 %v2483, %v2480
        %v2789 = vpack.c.bf16 %v2784, %v2486
        %s2790 = scalar_lea.vmem %s4, 20
        %v2791 = vld [vmem:[%s2790] sm:$0xf]
        %v2793 = vsel %vm2130, %v2786, 0
        %v2796 = vsel %vm2130, %v2787, 0
        %v2799 = vsel %vm2130, %v2788, 0
        %v2802 = vsel %vm2130, %v2789, 0
        %v2805 = vsel %vm2317, %v2791, 0
        %2807 = vmatprep.subr.bf16.mxu0 0
        %2808 = vmatpush1.bf16.msra.mxu0 %v2805
        %2809 = vmatprep.subr.bf16.mxu0 0
        %2810 = vmatpush1.bf16.msra.mxu0 0
        %2811 = vmatprep.subr.bf16.mxu0 0
        %2812 = vmatpush1.bf16.msra.mxu0 0
        %2813 = vmatprep.subr.bf16.mxu0 0
        %2814 = vmatpush1.bf16.msra.mxu0 0
        %2815 = vmatprep.subr.bf16.mxu0 0
        %2816 = vmatpush1.bf16.msra.mxu0 0
        %2817 = vmatprep.subr.bf16.mxu0 0
        %2818 = vmatpush1.bf16.msra.mxu0 0
        %2819 = vmatprep.subr.bf16.mxu0 0
        %2820 = vmatpush1.bf16.msra.mxu0 0
        %2821 = vmatprep.subr.bf16.mxu0 0
        %2822 = vmatpush1.bf16.msra.mxu0 0
        %2823 = vmatprep.subr.bf16.mxu0 0
        %2824 = vmatpush1.bf16.msra.mxu0 0
        %2825 = vmatprep.subr.bf16.mxu0 0
        %2826 = vmatpush1.bf16.msra.mxu0 0
        %2827 = vmatprep.subr.bf16.mxu0 0
        %2828 = vmatpush1.bf16.msra.mxu0 0
        %2829 = vmatprep.subr.bf16.mxu0 0
        %2830 = vmatpush1.bf16.msra.mxu0 0
        %2831 = vmatprep.subr.bf16.mxu0 0
        %2832 = vmatpush1.bf16.msra.mxu0 0
        %2833 = vmatprep.subr.bf16.mxu0 0
        %2834 = vmatpush1.bf16.msra.mxu0 0
        %2835 = vmatprep.subr.bf16.mxu0 0
        %2836 = vmatpush1.bf16.msra.mxu0 0
        %2837 = vmatprep.subr.bf16.mxu0 0
        %2838 = vmatpush1.bf16.msra.mxu0 0
        %2839 = vmatprep.mubr.bf16.mxu0 0
        %2840 = vmatmul.mubr.bf16.gmra.mrb[0].mxu0 %v2793
        %v2841 = vpop.f32.mrb[0].mxu0
        %v2842 = vadd.f32 0.0, %v2841
        %v2843 = vpop.f32.mrb[0].mxu0
        %v2844 = vpop.f32.mrb[0].mxu0
        %v2845 = vadd.f32 0.0, %v2844
        %v2846 = vpop.f32.mrb[0].mxu0
        %2847 = vmatprep.mubr.bf16.mxu0 0
        %2848 = vmatmul.mubr.bf16.gmra.mrb[0].mxu0 %v2796
        %v2849 = vpop.f32.mrb[0].mxu0
        %v2850 = vadd.f32 0.0, %v2849
        %v2851 = vpop.f32.mrb[0].mxu0
        %v2852 = vpop.f32.mrb[0].mxu0
        %v2853 = vadd.f32 0.0, %v2852
        %v2854 = vpop.f32.mrb[0].mxu0
        %2855 = vmatprep.mubr.bf16.mxu0 0
        %2856 = vmatmul.mubr.bf16.gmra.mrb[0].mxu0 %v2799
        %v2857 = vpop.f32.mrb[0].mxu0
        %v2858 = vadd.f32 0.0, %v2857
        %v2859 = vpop.f32.mrb[0].mxu0
        %v2860 = vpop.f32.mrb[0].mxu0
        %v2861 = vadd.f32 0.0, %v2860
        %v2862 = vpop.f32.mrb[0].mxu0
        %2863 = vmatprep.mubr.bf16.mxu0 0
        %2864 = vmatmul.mubr.bf16.gmra.mrb[0].mxu0 %v2802
        %v2865 = vpop.f32.mrb[0].mxu0
        %v2866 = vadd.f32 0.0, %v2865
        %v2867 = vpop.f32.mrb[0].mxu0
        %v2868 = vpop.f32.mrb[0].mxu0
        %v2869 = vadd.f32 0.0, %v2868
        %v2870 = vpop.f32.mrb[0].mxu0
        %2871 = vdwg.mxu0
        %v2872 = vadd.f32 %v2774, %v2842
        %v2873 = vadd.f32 %v2775, %v2845
        %v2874 = vadd.f32 %v2776, %v2850
        %v2875 = vadd.f32 %v2777, %v2853
        %v2876 = vadd.f32 %v2778, %v2858
        %v2877 = vadd.f32 %v2779, %v2861
        %v2878 = vadd.f32 %v2780, %v2866
        %v2879 = vadd.f32 %v2781, %v2869
        %v2880 = vpack.c.bf16 %v304, %v2243
        %s2881 = scalar_lea.vmem %s4, 24
        %v2882 = vld [vmem:[%s2881] sm:$0xf]
        %v2884 = vsel %vm2130, %v2880, 0
        %v2887 = vsel %vm2317, %v2882, 0
        %2889 = vmatprep.subr.bf16.mxu0 0
        %2890 = vmatpush1.bf16.msra.mxu0 %v2887
        %2891 = vmatprep.subr.bf16.mxu0 0
        %2892 = vmatpush1.bf16.msra.mxu0 0
        %2893 = vmatprep.subr.bf16.mxu0 0
        %2894 = vmatpush1.bf16.msra.mxu0 0
        %2895 = vmatprep.subr.bf16.mxu0 0
        %2896 = vmatpush1.bf16.msra.mxu0 0
        %2897 = vmatprep.subr.bf16.mxu0 0
        %2898 = vmatpush1.bf16.msra.mxu0 0
        %2899 = vmatprep.subr.bf16.mxu0 0
        %2900 = vmatpush1.bf16.msra.mxu0 0
        %2901 = vmatprep.subr.bf16.mxu0 0
        %2902 = vmatpush1.bf16.msra.mxu0 0
        %2903 = vmatprep.subr.bf16.mxu0 0
        %2904 = vmatpush1.bf16.msra.mxu0 0
        %2905 = vmatprep.subr.bf16.mxu0 0
        %2906 = vmatpush1.bf16.msra.mxu0 0
        %2907 = vmatprep.subr.bf16.mxu0 0
        %2908 = vmatpush1.bf16.msra.mxu0 0
        %2909 = vmatprep.subr.bf16.mxu0 0
        %2910 = vmatpush1.bf16.msra.mxu0 0
        %2911 = vmatprep.subr.bf16.mxu0 0
        %2912 = vmatpush1.bf16.msra.mxu0 0
        %2913 = vmatprep.subr.bf16.mxu0 0
        %2914 = vmatpush1.bf16.msra.mxu0 0
        %2915 = vmatprep.subr.bf16.mxu0 0
        %2916 = vmatpush1.bf16.msra.mxu0 0
        %2917 = vmatprep.subr.bf16.mxu0 0
        %2918 = vmatpush1.bf16.msra.mxu0 0
        %2919 = vmatprep.subr.bf16.mxu0 0
        %2920 = vmatpush1.bf16.msra.mxu0 0
        %2921 = vmatprep.mubr.bf16.mxu0 0
        %2922 = vmatmul.mubr.bf16.gmra.mrb[0].mxu0 %v2390
        %v2923 = vpop.f32.mrb[0].mxu0
        %v2924 = vadd.f32 0.0, %v2923
        %v2925 = vpop.f32.mrb[0].mxu0
        %v2926 = vpop.f32.mrb[0].mxu0
        %v2927 = vadd.f32 0.0, %v2926
        %v2928 = vpop.f32.mrb[0].mxu0
        %2929 = vmatprep.mubr.bf16.mxu0 0
        %2930 = vmatmul.mubr.bf16.gmra.mrb[0].mxu0 %v2393
        %v2931 = vpop.f32.mrb[0].mxu0
        %v2932 = vadd.f32 0.0, %v2931
        %v2933 = vpop.f32.mrb[0].mxu0
        %v2934 = vpop.f32.mrb[0].mxu0
        %v2935 = vadd.f32 0.0, %v2934
        %v2936 = vpop.f32.mrb[0].mxu0
        %2937 = vmatprep.mubr.bf16.mxu0 0
        %2938 = vmatmul.mubr.bf16.gmra.mrb[0].mxu0 %v2396
        %v2939 = vpop.f32.mrb[0].mxu0
        %v2940 = vadd.f32 0.0, %v2939
        %v2941 = vpop.f32.mrb[0].mxu0
        %v2942 = vpop.f32.mrb[0].mxu0
        %v2943 = vadd.f32 0.0, %v2942
        %v2944 = vpop.f32.mrb[0].mxu0
        %2945 = vmatprep.mubr.bf16.mxu0 0
        %2946 = vmatmul.mubr.bf16.gmra.mrb[0].mxu0 %v2884
        %v2947 = vpop.f32.mrb[0].mxu0
        %v2948 = vadd.f32 0.0, %v2947
        %v2949 = vpop.f32.mrb[0].mxu0
        %v2950 = vpop.f32.mrb[0].mxu0
        %v2951 = vadd.f32 0.0, %v2950
        %v2952 = vpop.f32.mrb[0].mxu0
        %2953 = vdwg.mxu0
        %v2954 = vadd.f32 %v2872, %v2924
        %v2955 = vadd.f32 %v2873, %v2927
        %v2956 = vadd.f32 %v2874, %v2932
        %v2957 = vadd.f32 %v2875, %v2935
        %v2958 = vadd.f32 %v2876, %v2940
        %v2959 = vadd.f32 %v2877, %v2943
        %v2960 = vadd.f32 %v2878, %v2948
        %v2961 = vadd.f32 %v2879, %v2951
        %v2962 = vpack.c.bf16 %v346, %v2686
        %s2963 = scalar_lea.vmem %s4, 28
        %v2964 = vld [vmem:[%s2963] sm:$0xf]
        %v2966 = vsel %vm2130, %v2962, 0
        %v2969 = vsel %vm2317, %v2964, 0
        %2971 = vmatprep.subr.bf16.mxu0 0
        %2972 = vmatpush1.bf16.msra.mxu0 %v2969
        %2973 = vmatprep.subr.bf16.mxu0 0
        %2974 = vmatpush1.bf16.msra.mxu0 0
        %2975 = vmatprep.subr.bf16.mxu0 0
        %2976 = vmatpush1.bf16.msra.mxu0 0
        %2977 = vmatprep.subr.bf16.mxu0 0
        %2978 = vmatpush1.bf16.msra.mxu0 0
        %2979 = vmatprep.subr.bf16.mxu0 0
        %2980 = vmatpush1.bf16.msra.mxu0 0
        %2981 = vmatprep.subr.bf16.mxu0 0
        %2982 = vmatpush1.bf16.msra.mxu0 0
        %2983 = vmatprep.subr.bf16.mxu0 0
        %2984 = vmatpush1.bf16.msra.mxu0 0
        %2985 = vmatprep.subr.bf16.mxu0 0
        %2986 = vmatpush1.bf16.msra.mxu0 0
        %2987 = vmatprep.subr.bf16.mxu0 0
        %2988 = vmatpush1.bf16.msra.mxu0 0
        %2989 = vmatprep.subr.bf16.mxu0 0
        %2990 = vmatpush1.bf16.msra.mxu0 0
        %2991 = vmatprep.subr.bf16.mxu0 0
        %2992 = vmatpush1.bf16.msra.mxu0 0
        %2993 = vmatprep.subr.bf16.mxu0 0
        %2994 = vmatpush1.bf16.msra.mxu0 0
        %2995 = vmatprep.subr.bf16.mxu0 0
        %2996 = vmatpush1.bf16.msra.mxu0 0
        %2997 = vmatprep.subr.bf16.mxu0 0
        %2998 = vmatpush1.bf16.msra.mxu0 0
        %2999 = vmatprep.subr.bf16.mxu0 0
        %3000 = vmatpush1.bf16.msra.mxu0 0
        %3001 = vmatprep.subr.bf16.mxu0 0
        %3002 = vmatpush1.bf16.msra.mxu0 0
        %3003 = vmatprep.mubr.bf16.mxu0 0
        %3004 = vmatmul.mubr.bf16.gmra.mrb[0].mxu0 %v2309
        %v3005 = vpop.f32.mrb[0].mxu0
        %v3006 = vadd.f32 0.0, %v3005
        %v3007 = vpop.f32.mrb[0].mxu0
        %v3008 = vpop.f32.mrb[0].mxu0
        %v3009 = vadd.f32 0.0, %v3008
        %v3010 = vpop.f32.mrb[0].mxu0
        %3011 = vmatprep.mubr.bf16.mxu0 0
        %3012 = vmatmul.mubr.bf16.gmra.mrb[0].mxu0 %v2312
        %v3013 = vpop.f32.mrb[0].mxu0
        %v3014 = vadd.f32 0.0, %v3013
        %v3015 = vpop.f32.mrb[0].mxu0
        %v3016 = vpop.f32.mrb[0].mxu0
        %v3017 = vadd.f32 0.0, %v3016
        %v3018 = vpop.f32.mrb[0].mxu0
        %3019 = vmatprep.mubr.bf16.mxu0 0
        %3020 = vmatmul.mubr.bf16.gmra.mrb[0].mxu0 %v2315
        %v3021 = vpop.f32.mrb[0].mxu0
        %v3022 = vadd.f32 0.0, %v3021
        %v3023 = vpop.f32.mrb[0].mxu0
        %v3024 = vpop.f32.mrb[0].mxu0
        %v3025 = vadd.f32 0.0, %v3024
        %v3026 = vpop.f32.mrb[0].mxu0
        %3027 = vmatprep.mubr.bf16.mxu0 0
        %3028 = vmatmul.mubr.bf16.gmra.mrb[0].mxu0 %v2966
        %v3029 = vpop.f32.mrb[0].mxu0
        %v3030 = vadd.f32 0.0, %v3029
        %v3031 = vpop.f32.mrb[0].mxu0
        %v3032 = vpop.f32.mrb[0].mxu0
        %v3033 = vadd.f32 0.0, %v3032
        %v3034 = vpop.f32.mrb[0].mxu0
        %3035 = vdwg.mxu0
        %v3036 = vadd.f32 %v2954, %v3006
        %v3037 = vadd.f32 %v2955, %v3009
        %v3038 = vadd.f32 %v2956, %v3014
        %v3039 = vadd.f32 %v2957, %v3017
        %v3040 = vadd.f32 %v2958, %v3022
        %v3041 = vadd.f32 %v2959, %v3025
        %v3042 = vadd.f32 %v2960, %v3030
        %v3043 = vadd.f32 %v2961, %v3033
        %v3044 = vpack.c.bf16 %v547, %v2784
        %s3045 = scalar_lea.vmem %s4, 32
        %v3046 = vld [vmem:[%s3045] sm:$0xf]
        %v3048 = vsel %vm2130, %v3044, 0
        %v3051 = vsel %vm2317, %v3046, 0
        %3053 = vmatprep.subr.bf16.mxu0 0
        %3054 = vmatpush1.bf16.msra.mxu0 %v3051
        %3055 = vmatprep.subr.bf16.mxu0 0
        %3056 = vmatpush1.bf16.msra.mxu0 0
        %3057 = vmatprep.subr.bf16.mxu0 0
        %3058 = vmatpush1.bf16.msra.mxu0 0
        %3059 = vmatprep.subr.bf16.mxu0 0
        %3060 = vmatpush1.bf16.msra.mxu0 0
        %3061 = vmatprep.subr.bf16.mxu0 0
        %3062 = vmatpush1.bf16.msra.mxu0 0
        %3063 = vmatprep.subr.bf16.mxu0 0
        %3064 = vmatpush1.bf16.msra.mxu0 0
        %3065 = vmatprep.subr.bf16.mxu0 0
        %3066 = vmatpush1.bf16.msra.mxu0 0
        %3067 = vmatprep.subr.bf16.mxu0 0
        %3068 = vmatpush1.bf16.msra.mxu0 0
        %3069 = vmatprep.subr.bf16.mxu0 0
        %3070 = vmatpush1.bf16.msra.mxu0 0
        %3071 = vmatprep.subr.bf16.mxu0 0
        %3072 = vmatpush1.bf16.msra.mxu0 0
        %3073 = vmatprep.subr.bf16.mxu0 0
        %3074 = vmatpush1.bf16.msra.mxu0 0
        %3075 = vmatprep.subr.bf16.mxu0 0
        %3076 = vmatpush1.bf16.msra.mxu0 0
        %3077 = vmatprep.subr.bf16.mxu0 0
        %3078 = vmatpush1.bf16.msra.mxu0 0
        %3079 = vmatprep.subr.bf16.mxu0 0
        %3080 = vmatpush1.bf16.msra.mxu0 0
        %3081 = vmatprep.subr.bf16.mxu0 0
        %3082 = vmatpush1.bf16.msra.mxu0 0
        %3083 = vmatprep.subr.bf16.mxu0 0
        %3084 = vmatpush1.bf16.msra.mxu0 0
        %3085 = vmatprep.mubr.bf16.mxu0 0
        %3086 = vmatmul.mubr.bf16.gmra.mrb[0].mxu0 %v2504
        %v3087 = vpop.f32.mrb[0].mxu0
        %v3088 = vadd.f32 0.0, %v3087
        %v3089 = vpop.f32.mrb[0].mxu0
        %v3090 = vpop.f32.mrb[0].mxu0
        %v3091 = vadd.f32 0.0, %v3090
        %v3092 = vpop.f32.mrb[0].mxu0
        %3093 = vmatprep.mubr.bf16.mxu0 0
        %3094 = vmatmul.mubr.bf16.gmra.mrb[0].mxu0 %v2507
        %v3095 = vpop.f32.mrb[0].mxu0
        %v3096 = vadd.f32 0.0, %v3095
        %v3097 = vpop.f32.mrb[0].mxu0
        %v3098 = vpop.f32.mrb[0].mxu0
        %v3099 = vadd.f32 0.0, %v3098
        %v3100 = vpop.f32.mrb[0].mxu0
        %3101 = vmatprep.mubr.bf16.mxu0 0
        %3102 = vmatmul.mubr.bf16.gmra.mrb[0].mxu0 %v2510
        %v3103 = vpop.f32.mrb[0].mxu0
        %v3104 = vadd.f32 0.0, %v3103
        %v3105 = vpop.f32.mrb[0].mxu0
        %v3106 = vpop.f32.mrb[0].mxu0
        %v3107 = vadd.f32 0.0, %v3106
        %v3108 = vpop.f32.mrb[0].mxu0
        %3109 = vmatprep.mubr.bf16.mxu0 0
        %3110 = vmatmul.mubr.bf16.gmra.mrb[0].mxu0 %v3048
        %v3111 = vpop.f32.mrb[0].mxu0
        %v3112 = vadd.f32 0.0, %v3111
        %v3113 = vpop.f32.mrb[0].mxu0
        %v3114 = vpop.f32.mrb[0].mxu0
        %v3115 = vadd.f32 0.0, %v3114
        %v3116 = vpop.f32.mrb[0].mxu0
        %3117 = vdwg.mxu0
        %v3118 = vadd.f32 %v3036, %v3088
        %v3119 = vadd.f32 %v3037, %v3091
        %v3120 = vadd.f32 %v3038, %v3096
        %v3121 = vadd.f32 %v3039, %v3099
        %v3122 = vadd.f32 %v3040, %v3104
        %v3123 = vadd.f32 %v3041, %v3107
        %v3124 = vadd.f32 %v3042, %v3112
        %v3125 = vadd.f32 %v3043, %v3115
        %v3126 = vsel %vm2130, %v3118, 0.0
        %v3127 = vsel %vm2130, %v3119, 0.0
        %v3128 = vadd.f32 %v3126, %v3127
        %v3129 = vsel %vm2130, %v3120, 0.0
        %v3130 = vadd.f32 %v3128, %v3129
        %v3131 = vsel %vm2130, %v3121, 0.0
        %v3132 = vadd.f32 %v3130, %v3131
        %v3133 = vsel %vm2130, %v3122, 0.0
        %v3134 = vadd.f32 %v3132, %v3133
        %v3135 = vsel %vm2130, %v3123, 0.0
        %v3136 = vadd.f32 %v3134, %v3135
        %v3137 = vsel %vm2130, %v3124, 0.0
        %v3138 = vadd.f32 %v3136, %v3137
        %v3139 = vsel %vm2130, %v3125, 0.0
        %v3140 = vadd.f32 %v3138, %v3139
        %v3141 = vrot.slane %v3140, 4
        %v3142 = vadd.f32 %v3140, %v3141
        %v3143 = vrot.slane %v3142, 2
        %v3144 = vadd.f32 %v3142, %v3143
        %v3145 = vrot.slane %v3144, 1
        %v3146 = vadd.f32 %v3144, %v3145
        %v3147 = vmul.f32 %v3146, 0.015625
        %v3148 = vmul.f32 %v3118, %v3118
        %v3149 = vmul.f32 %v3119, %v3119
        %v3150 = vmul.f32 %v3120, %v3120
        %v3151 = vmul.f32 %v3121, %v3121
        %v3152 = vmul.f32 %v3122, %v3122
        %v3153 = vmul.f32 %v3123, %v3123
        %v3154 = vmul.f32 %v3124, %v3124
        %v3155 = vmul.f32 %v3125, %v3125
        %v3156 = vsel %vm2130, %v3148, 0.0
        %v3157 = vsel %vm2130, %v3149, 0.0
        %v3158 = vadd.f32 %v3156, %v3157
        %v3159 = vsel %vm2130, %v3150, 0.0
        %v3160 = vadd.f32 %v3158, %v3159
        %v3161 = vsel %vm2130, %v3151, 0.0
        %v3162 = vadd.f32 %v3160, %v3161
        %v3163 = vsel %vm2130, %v3152, 0.0
        %v3164 = vadd.f32 %v3162, %v3163
        %v3165 = vsel %vm2130, %v3153, 0.0
        %v3166 = vadd.f32 %v3164, %v3165
        %v3167 = vsel %vm2130, %v3154, 0.0
        %v3168 = vadd.f32 %v3166, %v3167
        %v3169 = vsel %vm2130, %v3155, 0.0
        %v3170 = vadd.f32 %v3168, %v3169
        %v3171 = vrot.slane %v3170, 4
        %v3172 = vadd.f32 %v3170, %v3171
        %v3173 = vrot.slane %v3172, 2
        %v3174 = vadd.f32 %v3172, %v3173
        %v3175 = vrot.slane %v3174, 1
        %v3176 = vadd.f32 %v3174, %v3175
        %v3177 = vmul.f32 %v3176, 0.015625
        %v3178 = vmul.f32 %v3147, %v3147
        %v3179 = vsub.f32 %v3177, %v3178
        %v3180 = vmax.f32 %v3179, 0.0
        %v3181 = vsub.f32 %v3118, %v3147
        %v3182 = vsub.f32 %v3119, %v3147
        %v3183 = vsub.f32 %v3120, %v3147
        %v3184 = vsub.f32 %v3121, %v3147
        %v3185 = vsub.f32 %v3122, %v3147
        %v3186 = vsub.f32 %v3123, %v3147
        %v3187 = vsub.f32 %v3124, %v3147
        %v3188 = vsub.f32 %v3125, %v3147
        %v3189 = vadd.f32 %v3180, 1e-05
        %v3190 = vrsqrt.pop %v3189
        %v3191 = vmul.f32 %v3181, %v3190
        %v3192 = vmul.f32 %v3182, %v3190
        %v3193 = vmul.f32 %v3183, %v3190
        %v3194 = vmul.f32 %v3184, %v3190
        %v3195 = vmul.f32 %v3185, %v3190
        %v3196 = vmul.f32 %v3186, %v3190
        %v3197 = vmul.f32 %v3187, %v3190
        %v3198 = vmul.f32 %v3188, %v3190
        %v3199 = vmax.f32 %v3191, 0.0
        %v3200 = vmax.f32 %v3192, 0.0
        %v3201 = vmax.f32 %v3193, 0.0
        %v3202 = vmax.f32 %v3194, 0.0
        %v3203 = vmax.f32 %v3195, 0.0
        %v3204 = vmax.f32 %v3196, 0.0
        %v3205 = vmax.f32 %v3197, 0.0
        %v3206 = vmax.f32 %v3198, 0.0
        %3207 = vst.msk [vmem:[%s232] sm:$0xff] %vm2130, %v3199
        %3208 = vst.msk [vmem:[%s232 + $0x8] sm:$0xff] %vm2130, %v3200
        %3209 = vst.msk [vmem:[%s232 + $0x10] sm:$0xff] %vm2130, %v3201
        %3210 = vst.msk [vmem:[%s232 + $0x18] sm:$0xff] %vm2130, %v3202
        %3211 = vst.msk [vmem:[%s232 + $0x20] sm:$0xff] %vm2130, %v3203
        %3212 = vst.msk [vmem:[%s232 + $0x28] sm:$0xff] %vm2130, %v3204
        %3213 = vst.msk [vmem:[%s232 + $0x30] sm:$0xff] %vm2130, %v3205
        %3214 = vst.msk [vmem:[%s232 + $0x38] sm:$0xff] %vm2130, %v3206
        %s3215 = sand.u32 %s142, 1
        %s3216 = scalar_lea.sflag [#allocation3], %s3215
        %s3217 = sand.u32 %s142, 1
        %s3218 = smul.addr %s3217, 64
        %s3219 = scalar_lea.vmem [#allocation2], %s3218
        // Predicated region
        $region41: #{tpu_custom_call.1} parent=39 // pred_check
          %p3220 = pneg %p152
        $region42: #{tpu_custom_call.1} parent=39 // pred_check_branch
          %3222 = sbr.rel (%p3220) target = $region44
        $region43: #{tpu_custom_call.1} parent=39 // pred_region
          %s3224 = ssub.s32 1024, 1024
          %3225 = vsyncadd %s3216, %s3224
          %s3226 = smul.addr %s19, 8
          %s3227 = smul.addr %s3226, 128
          %s3228 = scalar_lea.hbm %s5, %s3227
          %s3229 = sshll.u32 %s3219, 4
          %s3230 = int_to_ptr.vmem [resolvable:$true] %s3229
          %3235 = dma.vmem_to_hbm [thread:$0]  %s3230, 1024, %s3228, %s3216, 128, 128, 8
        $region44: #{tpu_custom_call.1} parent=39 // pred_fallthru
          _
      $region40: #{tpu_custom_call.1} parent=5 // pred_fallthru
        _
      %p3236 = scmp.le.s32.totalorder 2, %s14
      // Predicated region
      $region45: #{tpu_custom_call.1} parent=5 // pred_check
        %p3237 = pneg %p3236
      $region46: #{tpu_custom_call.1} parent=5 // pred_check_branch
        %3239 = sbr.rel (%p3237) target = $region48
      $region47: #{tpu_custom_call.1} parent=5 // pred_region
        %s3240 = ssub.s32 %s14, 2
        // Predicated region
        $region49: #{tpu_custom_call.1} parent=47 // pred_check
          %p3241 = pneg %p158
        $region50: #{tpu_custom_call.1} parent=47 // pred_check_branch
          %3243 = sbr.rel (%p3241) target = $region52
        $region51: #{tpu_custom_call.1} parent=47 // pred_region
          %s3244 = sand.u32 %s143, 1
          %s3245 = scalar_lea.sflag [#allocation3], %s3244
          %s3246 = sand.u32 %s143, 1
          %s3247 = smul.addr %s3246, 64
          %s3248 = scalar_lea.vmem [#allocation2], %s3247
          %3249 = dma.done %s3245, 1024
        $region52: #{tpu_custom_call.1} parent=47 // pred_fallthru
          _
      $region48: #{tpu_custom_call.1} parent=5 // pred_fallthru
        _
    $region6: #{tpu_custom_call.1} parent=1 // loop_footer
      %s18 = sadd.s32 1, %s14
    $region7: #{tpu_custom_call.1} parent=1 // loop_footer_branch
      %13 = sbr.rel target = $region3
    $region8: #{tpu_custom_call.1} parent=1 // loop_exit
      _
    %3250 = vsyncpa [#allocation3], 1
    %s3251 = scalar_lea.sflag [#allocation3], 1
    %3252 = vsyncpa %s3251, 1

</llo_original>
